<compile_context>
chip_gen: v5e
topology: v5e:2x2
jax: 0.10.0
libtpu: 0.0.40
codegen_flags: <defaults>
</compile_context>

<pallas_src>
import functools
import math

import jax
import jax.numpy as jnp
from jax.experimental import pallas as pl
from jax.experimental.pallas import tpu as pltpu

# Layer sizes of NeuralNetwork2
DIMS = [28 * 28, 512, 512, 256, 512, 10]
K_PAD = 896      # 784 padded up to a multiple of 128 (zero padding, inert)
OUT_PAD = 128    # 10 padded up to a lane-dense 128-wide output block


def _round_up(x, m):
    return (x + m - 1) // m * m


def _device_kind():
    try:
        return jax.devices()[0].device_kind.lower()
    except Exception:
        return ""


_KIND = _device_kind()
_IS_V5 = "v5" in _KIND
# bf16 elementwise only where the VPU handles bf16 natively (v6e / v7x);
# conservative f32 path on v5e and on unknown device kinds.
_BF16_ELEMENTWISE = (not _IS_V5) and (("v6" in _KIND) or ("v7" in _KIND))
_TB_MAX = 256 if _IS_V5 else 512
# Import-time feature check (no runtime try/except around the kernel call).
_SUPPORTS_BUFFERED = hasattr(pl, "Buffered")


def _make_kernel(bf16_elementwise):
    """Fused 5-layer MLP kernel. MXU matmuls take bf16 operands, accumulate in
    f32; bias-add/ReLU run in bf16 (v6e/v7x) or f32 (v5e)."""
    ew = jnp.bfloat16 if bf16_elementwise else jnp.float32

    def kernel(x_ref,
               w1_ref, b1_ref,
               w2_ref, b2_ref,
               w3_ref, b3_ref,
               w4_ref, b4_ref,
               w5_ref, b5_ref,
               out_ref):
        def hidden(h, w_ref, b_ref):
            acc = jnp.dot(h, w_ref[...], preferred_element_type=jnp.float32)
            a = jnp.maximum(acc.astype(ew) + b_ref[...].astype(ew), 0.0)
            return a.astype(jnp.bfloat16)  # next MXU operand

        h = hidden(x_ref[...], w1_ref, b1_ref)
        h = hidden(h, w2_ref, b2_ref)
        h = hidden(h, w3_ref, b3_ref)
        h = hidden(h, w4_ref, b4_ref)
        logits = jnp.dot(h, w5_ref[...], preferred_element_type=jnp.float32)
        out_ref[...] = (logits + b5_ref[...]).astype(out_ref.dtype)

    return kernel


def prepare_params(params):
    """One-time preprocessing (hoisted out of the hot path): pad weights to
    (K_PAD, .) / (., OUT_PAD) where needed, cast to bf16; biases stay f32."""
    weights, biases = [], []
    n_layers = len(params)
    for li, (w, b) in enumerate(params):
        k_in, n_out = w.shape
        k_tgt = K_PAD if li == 0 else k_in
        n_tgt = OUT_PAD if li == n_layers - 1 else n_out
        wp = jnp.zeros((k_tgt, n_tgt), jnp.bfloat16)
        wp = wp.at[:k_in, :n_out].set(w.astype(jnp.bfloat16))
        bp = jnp.zeros((1, n_tgt), jnp.float32)
        bp = bp.at[0, :n_out].set(b.astype(jnp.float32))
        weights.append(wp)
        biases.append(bp)
    return tuple(weights), tuple(biases)


def _pick_tile(batch, tb_max=_TB_MAX):
    """Batch tile: big enough to amortize the ~0.35us per-grid-step overhead,
    small enough to keep padding waste under one tile; >=2 steps on v7x so the
    parallel axis shards across both TensorCores; multiple of 16 (bf16 sublane
    packing)."""
    n_tiles = max(1, math.ceil(batch / tb_max))
    if ("v7" in _KIND) and n_tiles < 2 and batch > 32:
        n_tiles = 2
    return _round_up(math.ceil(batch / n_tiles), 16)


@functools.partial(jax.jit, static_argnames=("tb", "bf16_elementwise"))
def _forward_impl(x, weights, biases, tb, bf16_elementwise):
    B = x.shape[0]
    x_flat = x.reshape(B, -1).astype(jnp.bfloat16)  # nn.Flatten(), row-major
    B_pad = _round_up(B, tb)

    # Pad batch and feature dims (zero rows in W1 make the K padding inert).
    x_pad = jnp.zeros((B_pad, K_PAD), jnp.bfloat16)
    x_pad = x_pad.at[:B, :x_flat.shape[1]].set(x_flat)

    grid = (B_pad // tb,)

    # Weights / biases have a constant index_map across the grid; single-buffer
    # them when the installed jax supports pipeline_mode.
    weight_kwargs = (
        dict(pipeline_mode=pl.Buffered(1)) if _SUPPORTS_BUFFERED else {}
    )

    in_specs = [pl.BlockSpec((tb, K_PAD), lambda i: (i, 0))]  # x tile
    args = [x_pad]
    for w, b in zip(weights, biases):
        args.append(w)
        args.append(b)
        in_specs.append(pl.BlockSpec(w.shape, lambda i: (0, 0), **weight_kwargs))
        in_specs.append(pl.BlockSpec(b.shape, lambda i: (0, 0), **weight_kwargs))

    flops = 2 * B_pad * (K_PAD * 512 + 512 * 512 + 512 * 256 + 256 * 512
                         + 512 * OUT_PAD)
    bytes_accessed = (x_pad.size * 2
                      + sum(w.size * 2 for w in weights)
                      + sum(b.size * 4 for b in biases)
                      + B_pad * OUT_PAD * 4)

    out = pl.pallas_call(
        _make_kernel(bf16_elementwise),
        out_shape=jax.ShapeDtypeStruct((B_pad, OUT_PAD), jnp.float32),
        grid=grid,
        in_specs=in_specs,
        out_specs=pl.BlockSpec((tb, OUT_PAD), lambda i: (i, 0)),
        compiler_params=pltpu.CompilerParams(
            dimension_semantics=("parallel",),
            vmem_limit_bytes=16 * 1024 * 1024,   # actual footprint ~8 MiB
        ),
        cost_estimate=pl.CostEstimate(
            flops=flops, transcendentals=0, bytes_accessed=bytes_accessed),
    )(*args)

    return out[:B, :DIMS[-1]]


def neural_network2_forward(x, prepared_params):
    """x: (B, 1, 28, 28) float32 (NCHW). prepared_params from prepare_params()."""
    weights, biases = prepared_params
    tb = _pick_tile(x.shape[0])
    return _forward_impl(x, weights, biases, tb, _BF16_ELEMENTWISE)


def init_params(key):
    """Mimics nn.Linear default init (U[-1/sqrt(fan_in), +1/sqrt(fan_in)]).

    Weights stored as (in_features, out_features), i.e. W^T of PyTorch's layout.
    """
    params = []
    for i in range(len(DIMS) - 1):
        fan_in, fan_out = DIMS[i], DIMS[i + 1]
        key, kw, kb = jax.random.split(key, 3)
        bound = 1.0 / jnp.sqrt(fan_in)
        w = jax.random.uniform(kw, (fan_in, fan_out), jnp.float32, -bound, bound)
        b = jax.random.uniform(kb, (fan_out,), jnp.float32, -bound, bound)
        params.append((w, b))
    return params


def _reference_forward_quantized(x, params, bf16_elementwise):
    """Plain-JAX reference matching the kernel's quantization recipe."""
    ew = jnp.bfloat16 if bf16_elementwise else jnp.float32
    h = x.reshape(x.shape[0], -1)
    n = len(params)
    for i, (w, b) in enumerate(params):
        acc = jnp.dot(h.astype(jnp.bfloat16), w.astype(jnp.bfloat16),
                      preferred_element_type=jnp.float32)
        if i < n - 1:
            h = jnp.maximum(acc.astype(ew) + b.astype(ew), 0.0)
        else:
            h = acc + b
    return h.astype(jnp.float32)


def _reference_forward_f32(x, params):
    """Full-precision reference of the PyTorch forward (semantic check)."""
    h = x.reshape(x.shape[0], -1)
    for i, (w, b) in enumerate(params):
        h = h @ w + b
        if i < len(params) - 1:
            h = jnp.maximum(h, 0.0)
    return h


if __name__ == "__main__":
    key = jax.random.PRNGKey(0)
    key, kx = jax.random.split(key)

    # Small MNIST-like batch: NCHW (B, 1, 28, 28)
    x = jax.random.normal(kx, (2, 1, 28, 28), jnp.float32)
    params = init_params(key)

    prepared = prepare_params(params)          # one-time weight padding/casting
    logits = neural_network2_forward(x, prepared)
    logits = jax.block_until_ready(logits)

    ref_q = _reference_forward_quantized(x, params, _BF16_ELEMENTWISE)
    ref_f32 = _reference_forward_f32(x, params)

    assert logits.shape == (2, 10), logits.shape
    # Tight check vs. an identically-quantized reference.
    assert jnp.allclose(logits, ref_q, atol=1e-2, rtol=1e-2), (
        float(jnp.max(jnp.abs(logits - ref_q))))
    # Loose check vs. the full-f32 PyTorch-equivalent forward.
    assert jnp.allclose(logits, ref_f32, atol=1.5e-1, rtol=1.5e-1), (
        float(jnp.max(jnp.abs(logits - ref_f32))))

    print("KERNEL_OK")
</pallas_src>

<mosaic_0001>
module attributes {stable_mosaic.version = 11 : i64} {
  func.func @kernel(%arg0: i32, %arg1: memref<16x896xbf16, #tpu.memory_space<vmem>>, %arg2: memref<896x512xbf16, #tpu.memory_space<vmem>>, %arg3: memref<1x512xf32, #tpu.memory_space<vmem>>, %arg4: memref<512x512xbf16, #tpu.memory_space<vmem>>, %arg5: memref<1x512xf32, #tpu.memory_space<vmem>>, %arg6: memref<512x256xbf16, #tpu.memory_space<vmem>>, %arg7: memref<1x256xf32, #tpu.memory_space<vmem>>, %arg8: memref<256x512xbf16, #tpu.memory_space<vmem>>, %arg9: memref<1x512xf32, #tpu.memory_space<vmem>>, %arg10: memref<512x128xbf16, #tpu.memory_space<vmem>>, %arg11: memref<1x128xf32, #tpu.memory_space<vmem>>, %arg12: memref<16x128xf32, #tpu.memory_space<vmem>>) attributes {dimension_semantics = [#tpu.dimension_semantics<parallel>], iteration_bounds = array<i64: 1>, scalar_prefetch = 0 : i64, scratch_operands = 0 : i64, tpu.core_type = #tpu.core_type<tc>, window_params = [{transform_indices = @transform_0, window_bounds = array<i64: 16, 896>}, {pipeline_mode = #tpu.pipeline_mode<synchronous>, transform_indices = @transform_1, window_bounds = array<i64: 896, 512>}, {pipeline_mode = #tpu.pipeline_mode<synchronous>, transform_indices = @transform_2, window_bounds = array<i64: 1, 512>}, {pipeline_mode = #tpu.pipeline_mode<synchronous>, transform_indices = @transform_3, window_bounds = array<i64: 512, 512>}, {pipeline_mode = #tpu.pipeline_mode<synchronous>, transform_indices = @transform_4, window_bounds = array<i64: 1, 512>}, {pipeline_mode = #tpu.pipeline_mode<synchronous>, transform_indices = @transform_5, window_bounds = array<i64: 512, 256>}, {pipeline_mode = #tpu.pipeline_mode<synchronous>, transform_indices = @transform_6, window_bounds = array<i64: 1, 256>}, {pipeline_mode = #tpu.pipeline_mode<synchronous>, transform_indices = @transform_7, window_bounds = array<i64: 256, 512>}, {pipeline_mode = #tpu.pipeline_mode<synchronous>, transform_indices = @transform_8, window_bounds = array<i64: 1, 512>}, {pipeline_mode = #tpu.pipeline_mode<synchronous>, transform_indices = @transform_9, window_bounds = array<i64: 512, 128>}, {pipeline_mode = #tpu.pipeline_mode<synchronous>, transform_indices = @transform_10, window_bounds = array<i64: 1, 128>}, {transform_indices = @transform_11, window_bounds = array<i64: 16, 128>}]} {
    %c0 = arith.constant 0 : index
    %c0_0 = arith.constant 0 : index
    %0 = vector.load %arg1[%c0, %c0_0] : memref<16x896xbf16, #tpu.memory_space<vmem>>, vector<16x896xbf16>
    %c0_1 = arith.constant 0 : index
    %c0_2 = arith.constant 0 : index
    %1 = vector.load %arg2[%c0_1, %c0_2] : memref<896x512xbf16, #tpu.memory_space<vmem>>, vector<896x512xbf16>
    %cst = arith.constant dense<0.000000e+00> : vector<16x512xf32>
    %2 = tpu.matmul %0, %1, %cst {dimension_numbers = #tpu.dot_dimension_numbers<[1], [0], [0], [1], [0, 0, 1, 1], [], []>} : vector<16x896xbf16>, vector<896x512xbf16>, vector<16x512xf32> -> vector<16x512xf32>
    %c0_3 = arith.constant 0 : index
    %c0_4 = arith.constant 0 : index
    %3 = vector.load %arg3[%c0_3, %c0_4] : memref<1x512xf32, #tpu.memory_space<vmem>>, vector<1x512xf32>
    %4 = vector.broadcast %3 : vector<1x512xf32> to vector<16x512xf32>
    %5 = arith.addf %2, %4 : vector<16x512xf32>
    %cst_5 = arith.constant 0.000000e+00 : f32
    %6 = vector.broadcast %cst_5 : f32 to vector<16x512xf32>
    %7 = arith.maximumf %5, %6 : vector<16x512xf32>
    %8 = arith.truncf %7 : vector<16x512xf32> to vector<16x512xbf16>
    %c0_6 = arith.constant 0 : index
    %c0_7 = arith.constant 0 : index
    %9 = vector.load %arg4[%c0_6, %c0_7] : memref<512x512xbf16, #tpu.memory_space<vmem>>, vector<512x512xbf16>
    %cst_8 = arith.constant dense<0.000000e+00> : vector<16x512xf32>
    %10 = tpu.matmul %8, %9, %cst_8 {dimension_numbers = #tpu.dot_dimension_numbers<[1], [0], [0], [1], [0, 0, 1, 1], [], []>} : vector<16x512xbf16>, vector<512x512xbf16>, vector<16x512xf32> -> vector<16x512xf32>
    %c0_9 = arith.constant 0 : index
    %c0_10 = arith.constant 0 : index
    %11 = vector.load %arg5[%c0_9, %c0_10] : memref<1x512xf32, #tpu.memory_space<vmem>>, vector<1x512xf32>
    %12 = vector.broadcast %11 : vector<1x512xf32> to vector<16x512xf32>
    %13 = arith.addf %10, %12 : vector<16x512xf32>
    %cst_11 = arith.constant 0.000000e+00 : f32
    %14 = vector.broadcast %cst_11 : f32 to vector<16x512xf32>
    %15 = arith.maximumf %13, %14 : vector<16x512xf32>
    %16 = arith.truncf %15 : vector<16x512xf32> to vector<16x512xbf16>
    %c0_12 = arith.constant 0 : index
    %c0_13 = arith.constant 0 : index
    %17 = vector.load %arg6[%c0_12, %c0_13] : memref<512x256xbf16, #tpu.memory_space<vmem>>, vector<512x256xbf16>
    %cst_14 = arith.constant dense<0.000000e+00> : vector<16x256xf32>
    %18 = tpu.matmul %16, %17, %cst_14 {dimension_numbers = #tpu.dot_dimension_numbers<[1], [0], [0], [1], [0, 0, 1, 1], [], []>} : vector<16x512xbf16>, vector<512x256xbf16>, vector<16x256xf32> -> vector<16x256xf32>
    %c0_15 = arith.constant 0 : index
    %c0_16 = arith.constant 0 : index
    %19 = vector.load %arg7[%c0_15, %c0_16] : memref<1x256xf32, #tpu.memory_space<vmem>>, vector<1x256xf32>
    %20 = vector.broadcast %19 : vector<1x256xf32> to vector<16x256xf32>
    %21 = arith.addf %18, %20 : vector<16x256xf32>
    %cst_17 = arith.constant 0.000000e+00 : f32
    %22 = vector.broadcast %cst_17 : f32 to vector<16x256xf32>
    %23 = arith.maximumf %21, %22 : vector<16x256xf32>
    %24 = arith.truncf %23 : vector<16x256xf32> to vector<16x256xbf16>
    %c0_18 = arith.constant 0 : index
    %c0_19 = arith.constant 0 : index
    %25 = vector.load %arg8[%c0_18, %c0_19] : memref<256x512xbf16, #tpu.memory_space<vmem>>, vector<256x512xbf16>
    %cst_20 = arith.constant dense<0.000000e+00> : vector<16x512xf32>
    %26 = tpu.matmul %24, %25, %cst_20 {dimension_numbers = #tpu.dot_dimension_numbers<[1], [0], [0], [1], [0, 0, 1, 1], [], []>} : vector<16x256xbf16>, vector<256x512xbf16>, vector<16x512xf32> -> vector<16x512xf32>
    %c0_21 = arith.constant 0 : index
    %c0_22 = arith.constant 0 : index
    %27 = vector.load %arg9[%c0_21, %c0_22] : memref<1x512xf32, #tpu.memory_space<vmem>>, vector<1x512xf32>
    %28 = vector.broadcast %27 : vector<1x512xf32> to vector<16x512xf32>
    %29 = arith.addf %26, %28 : vector<16x512xf32>
    %cst_23 = arith.constant 0.000000e+00 : f32
    %30 = vector.broadcast %cst_23 : f32 to vector<16x512xf32>
    %31 = arith.maximumf %29, %30 : vector<16x512xf32>
    %32 = arith.truncf %31 : vector<16x512xf32> to vector<16x512xbf16>
    %c0_24 = arith.constant 0 : index
    %c0_25 = arith.constant 0 : index
    %33 = vector.load %arg10[%c0_24, %c0_25] : memref<512x128xbf16, #tpu.memory_space<vmem>>, vector<512x128xbf16>
    %cst_26 = arith.constant dense<0.000000e+00> : vector<16x128xf32>
    %34 = tpu.matmul %32, %33, %cst_26 {dimension_numbers = #tpu.dot_dimension_numbers<[1], [0], [0], [1], [0, 0, 1, 1], [], []>} : vector<16x512xbf16>, vector<512x128xbf16>, vector<16x128xf32> -> vector<16x128xf32>
    %c0_27 = arith.constant 0 : index
    %c0_28 = arith.constant 0 : index
    %35 = vector.load %arg11[%c0_27, %c0_28] : memref<1x128xf32, #tpu.memory_space<vmem>>, vector<1x128xf32>
    %36 = vector.broadcast %35 : vector<1x128xf32> to vector<16x128xf32>
    %37 = arith.addf %34, %36 : vector<16x128xf32>
    %c0_29 = arith.constant 0 : index
    %c0_30 = arith.constant 0 : index
    %38 = vector.load %arg12[%c0_29, %c0_30] : memref<16x128xf32, #tpu.memory_space<vmem>>, vector<16x128xf32>
    tpu.vector_store %arg12[%c0_29, %c0_30], %37 {strides = array<i32>} : memref<16x128xf32, #tpu.memory_space<vmem>>, vector<16x128xf32>,
    return
  }
  func.func @transform_0(%arg0: i32) -> (i32, i32) {
    %c0_i32 = arith.constant 0 : i32
    %c0_i32_0 = arith.constant 0 : i32
    return %arg0, %c0_i32 : i32, i32
  }
  func.func @transform_1(%arg0: i32) -> (i32, i32) {
    %c0_i32 = arith.constant 0 : i32
    %c0_i32_0 = arith.constant 0 : i32
    %c0_i32_1 = arith.constant 0 : i32
    return %c0_i32, %c0_i32_0 : i32, i32
  }
  func.func @transform_2(%arg0: i32) -> (i32, i32) {
    %c0_i32 = arith.constant 0 : i32
    %c0_i32_0 = arith.constant 0 : i32
    %c0_i32_1 = arith.constant 0 : i32
    return %c0_i32, %c0_i32_0 : i32, i32
  }
  func.func @transform_3(%arg0: i32) -> (i32, i32) {
    %c0_i32 = arith.constant 0 : i32
    %c0_i32_0 = arith.constant 0 : i32
    %c0_i32_1 = arith.constant 0 : i32
    return %c0_i32, %c0_i32_0 : i32, i32
  }
  func.func @transform_4(%arg0: i32) -> (i32, i32) {
    %c0_i32 = arith.constant 0 : i32
    %c0_i32_0 = arith.constant 0 : i32
    %c0_i32_1 = arith.constant 0 : i32
    return %c0_i32, %c0_i32_0 : i32, i32
  }
  func.func @transform_5(%arg0: i32) -> (i32, i32) {
    %c0_i32 = arith.constant 0 : i32
    %c0_i32_0 = arith.constant 0 : i32
    %c0_i32_1 = arith.constant 0 : i32
    return %c0_i32, %c0_i32_0 : i32, i32
  }
  func.func @transform_6(%arg0: i32) -> (i32, i32) {
    %c0_i32 = arith.constant 0 : i32
    %c0_i32_0 = arith.constant 0 : i32
    %c0_i32_1 = arith.constant 0 : i32
    return %c0_i32, %c0_i32_0 : i32, i32
  }
  func.func @transform_7(%arg0: i32) -> (i32, i32) {
    %c0_i32 = arith.constant 0 : i32
    %c0_i32_0 = arith.constant 0 : i32
    %c0_i32_1 = arith.constant 0 : i32
    return %c0_i32, %c0_i32_0 : i32, i32
  }
  func.func @transform_8(%arg0: i32) -> (i32, i32) {
    %c0_i32 = arith.constant 0 : i32
    %c0_i32_0 = arith.constant 0 : i32
    %c0_i32_1 = arith.constant 0 : i32
    return %c0_i32, %c0_i32_0 : i32, i32
  }
  func.func @transform_9(%arg0: i32) -> (i32, i32) {
    %c0_i32 = arith.constant 0 : i32
    %c0_i32_0 = arith.constant 0 : i32
    %c0_i32_1 = arith.constant 0 : i32
    return %c0_i32, %c0_i32_0 : i32, i32
  }
  func.func @transform_10(%arg0: i32) -> (i32, i32) {
    %c0_i32 = arith.constant 0 : i32
    %c0_i32_0 = arith.constant 0 : i32
    %c0_i32_1 = arith.constant 0 : i32
    return %c0_i32, %c0_i32_0 : i32, i32
  }
  func.func @transform_11(%arg0: i32) -> (i32, i32) {
    %c0_i32 = arith.constant 0 : i32
    %c0_i32_0 = arith.constant 0 : i32
    return %arg0, %c0_i32 : i32, i32
  }
}

</mosaic_0001>

<llo_original>
// kernel: _forward_impl.1
$region0: #{_forward_impl.1}
  #allocation0 [shape = 'u32[]', space=smem, size = 0x4, offset = 0x4, fixed_abs, tag = 'smem constant byte address 0x4 - core index']
  #allocation1 [shape = 'u32[72,128]{1,0:T(1,128)}', space=vmem, size = 0x9000, scoped, tag = 'internal scratch']
  %s0 = inlined_call_operand.vmem [shape: bf16[16,896], index: 0, kind: input, shape index: {}]
  %s1 = inlined_call_operand.hbm [shape: bf16[896,512], index: 1, kind: input, shape index: {}]
  %s2 = inlined_call_operand.vmem [shape: f32[1,512], index: 2, kind: input, shape index: {}]
  %s3 = inlined_call_operand.hbm [shape: bf16[512,512], index: 3, kind: input, shape index: {}]
  %s4 = inlined_call_operand.vmem [shape: f32[1,512], index: 4, kind: input, shape index: {}]
  %s5 = inlined_call_operand.hbm [shape: bf16[512,256], index: 5, kind: input, shape index: {}]
  %s6 = inlined_call_operand.vmem [shape: f32[1,256], index: 6, kind: input, shape index: {}]
  %s7 = inlined_call_operand.hbm [shape: bf16[256,512], index: 7, kind: input, shape index: {}]
  %s8 = inlined_call_operand.vmem [shape: f32[1,512], index: 8, kind: input, shape index: {}]
  %s9 = inlined_call_operand.hbm [shape: bf16[512,128], index: 9, kind: input, shape index: {}]
  %s10 = inlined_call_operand.vmem [shape: f32[1,128], index: 10, kind: input, shape index: {}]
  %s11 = inlined_call_operand.vmem [shape: f32[16,128], index: 11, kind: output, shape index: {}]
  %s12 = sld [smem:[#allocation0]]
  $region74: #{_forward_impl.1} parent=0
    _
  %s14 = ssub.s32 1, %s12
  %s15 = scalar_select 0, %s14, %s12
  $region1: #{_forward_impl.1} parent=0
    #allocation2 [shape = 'u8[917504]{0}', space=vmem, size = 0xe0000, scoped, tag = 'input window, operand 1, single buffered']
    #allocation3 [shape = 's32[1]{0}', space=sflag, size = 0x4, scoped, tag = 'scoped memory for _forward_impl.1']
    #allocation4 [shape = 'u8[524288]{0}', space=vmem, size = 0x80000, scoped, tag = 'input window, operand 3, single buffered']
    #allocation5 [shape = 's32[1]{0}', space=sflag, size = 0x4, scoped, tag = 'scoped memory for _forward_impl.1']
    #allocation6 [shape = 'u8[262144]{0}', space=vmem, size = 0x40000, scoped, tag = 'input window, operand 5, single buffered']
    #allocation7 [shape = 'u8[262144]{0}', space=vmem, size = 0x40000, scoped, tag = 'input window, operand 7, single buffered']
    #allocation8 [shape = 's32[1]{0}', space=sflag, size = 0x4, scoped, tag = 'scoped memory for _forward_impl.1']
    #allocation9 [shape = 'u8[131072]{0}', space=vmem, size = 0x20000, scoped, tag = 'input window, operand 9, single buffered']
    %16 = vsyncpa [#allocation3], 0
    %17 = vsyncpa [#allocation5], 0
    %18 = vsyncpa [#allocation8], 0
    // Predicated region
    $region2: #{_forward_impl.1} parent=1 // pred_check
      _
    $region3: #{_forward_impl.1} parent=1 // pred_check_branch
      %20 = sbr.rel (0) target = $region5
    $region4: #{_forward_impl.1} parent=1 // pred_region
      _
    $region5: #{_forward_impl.1} parent=1 // pred_fallthru
      _
    // Predicated region
    $region6: #{_forward_impl.1} parent=1 // pred_check
      _
    $region7: #{_forward_impl.1} parent=1 // pred_check_branch
      %22 = sbr.rel (0) target = $region9
    $region8: #{_forward_impl.1} parent=1 // pred_region
      %24 = vsyncadd [#allocation3], 0
      %s25 = sshll.u32 %s1, 4
      %s26 = int_to_ptr.hbm [resolvable:$true] %s25
      %s27 = sshll.u32 [#allocation2], 4
      %s28 = int_to_ptr.vmem [resolvable:$true] %s27
      %33 = dma.hbm_to_vmem [thread:$0]  %s26, 28672, %s28, [#allocation3], 256, 256, 16
    $region9: #{_forward_impl.1} parent=1 // pred_fallthru
      _
    // Predicated region
    $region10: #{_forward_impl.1} parent=1 // pred_check
      _
    $region11: #{_forward_impl.1} parent=1 // pred_check_branch
      %35 = sbr.rel (0) target = $region13
    $region12: #{_forward_impl.1} parent=1 // pred_region
      _
    $region13: #{_forward_impl.1} parent=1 // pred_fallthru
      _
    // Predicated region
    $region14: #{_forward_impl.1} parent=1 // pred_check
      _
    $region15: #{_forward_impl.1} parent=1 // pred_check_branch
      %37 = sbr.rel (0) target = $region17
    $region16: #{_forward_impl.1} parent=1 // pred_region
      %39 = vsyncadd [#allocation5], 0
      %s40 = sshll.u32 %s3, 4
      %s41 = int_to_ptr.hbm [resolvable:$true] %s40
      %s42 = sshll.u32 [#allocation4], 4
      %s43 = int_to_ptr.vmem [resolvable:$true] %s42
      %48 = dma.hbm_to_vmem [thread:$0]  %s41, 16384, %s43, [#allocation5], 256, 256, 16
    $region17: #{_forward_impl.1} parent=1 // pred_fallthru
      _
    // Predicated region
    $region18: #{_forward_impl.1} parent=1 // pred_check
      _
    $region19: #{_forward_impl.1} parent=1 // pred_check_branch
      %50 = sbr.rel (0) target = $region21
    $region20: #{_forward_impl.1} parent=1 // pred_region
      _
    $region21: #{_forward_impl.1} parent=1 // pred_fallthru
      _
    // Predicated region
    $region22: #{_forward_impl.1} parent=1 // pred_check
      _
    $region23: #{_forward_impl.1} parent=1 // pred_check_branch
      %52 = sbr.rel (0) target = $region25
    $region24: #{_forward_impl.1} parent=1 // pred_region
      %54 = vsyncadd [#allocation5], 0
      %s55 = sshll.u32 %s5, 4
      %s56 = int_to_ptr.hbm [resolvable:$true] %s55
      %s57 = sshll.u32 [#allocation6], 4
      %s58 = int_to_ptr.vmem [resolvable:$true] %s57
      %63 = dma.hbm_to_vmem [thread:$0]  %s56, 8192, %s58, [#allocation5], 128, 128, 8
    $region25: #{_forward_impl.1} parent=1 // pred_fallthru
      _
    // Predicated region
    $region26: #{_forward_impl.1} parent=1 // pred_check
      _
    $region27: #{_forward_impl.1} parent=1 // pred_check_branch
      %65 = sbr.rel (0) target = $region29
    $region28: #{_forward_impl.1} parent=1 // pred_region
      _
    $region29: #{_forward_impl.1} parent=1 // pred_fallthru
      _
    // Predicated region
    $region30: #{_forward_impl.1} parent=1 // pred_check
      _
    $region31: #{_forward_impl.1} parent=1 // pred_check_branch
      %67 = sbr.rel (0) target = $region33
    $region32: #{_forward_impl.1} parent=1 // pred_region
      %69 = vsyncadd [#allocation8], 0
      %s70 = sshll.u32 %s7, 4
      %s71 = int_to_ptr.hbm [resolvable:$true] %s70
      %s72 = sshll.u32 [#allocation7], 4
      %s73 = int_to_ptr.vmem [resolvable:$true] %s72
      %78 = dma.hbm_to_vmem [thread:$0]  %s71, 8192, %s73, [#allocation8], 256, 256, 16
    $region33: #{_forward_impl.1} parent=1 // pred_fallthru
      _
    // Predicated region
    $region34: #{_forward_impl.1} parent=1 // pred_check
      _
    $region35: #{_forward_impl.1} parent=1 // pred_check_branch
      %80 = sbr.rel (0) target = $region37
    $region36: #{_forward_impl.1} parent=1 // pred_region
      _
    $region37: #{_forward_impl.1} parent=1 // pred_fallthru
      _
    // Predicated region
    $region38: #{_forward_impl.1} parent=1 // pred_check
      _
    $region39: #{_forward_impl.1} parent=1 // pred_check_branch
      %82 = sbr.rel (0) target = $region41
    $region40: #{_forward_impl.1} parent=1 // pred_region
      %84 = vsyncadd [#allocation8], 0
      %s85 = sshll.u32 %s9, 4
      %s86 = int_to_ptr.hbm [resolvable:$true] %s85
      %s87 = sshll.u32 [#allocation9], 4
      %s88 = int_to_ptr.vmem [resolvable:$true] %s87
      %93 = dma.hbm_to_vmem [thread:$0]  %s86, 4096, %s88, [#allocation8], 64, 64, 4
    $region41: #{_forward_impl.1} parent=1 // pred_fallthru
      _
    // Predicated region
    $region42: #{_forward_impl.1} parent=1 // pred_check
      _
    $region43: #{_forward_impl.1} parent=1 // pred_check_branch
      %95 = sbr.rel (0) target = $region45
    $region44: #{_forward_impl.1} parent=1 // pred_region
      _
    $region45: #{_forward_impl.1} parent=1 // pred_fallthru
      _
    // Predicated region
    $region46: #{_forward_impl.1} parent=1 // pred_check
      _
    $region47: #{_forward_impl.1} parent=1 // pred_check_branch
      %97 = sbr.rel (0) target = $region49
    $region48: #{_forward_impl.1} parent=1 // pred_region
      %99 = dma.done [#allocation3], 28672
    $region49: #{_forward_impl.1} parent=1 // pred_fallthru
      _
    // Predicated region
    $region50: #{_forward_impl.1} parent=1 // pred_check
      _
    $region51: #{_forward_impl.1} parent=1 // pred_check_branch
      %101 = sbr.rel (0) target = $region53
    $region52: #{_forward_impl.1} parent=1 // pred_region
      %103 = dma.done [#allocation5], 16384
    $region53: #{_forward_impl.1} parent=1 // pred_fallthru
      _
    // Predicated region
    $region54: #{_forward_impl.1} parent=1 // pred_check
      _
    $region55: #{_forward_impl.1} parent=1 // pred_check_branch
      %105 = sbr.rel (0) target = $region57
    $region56: #{_forward_impl.1} parent=1 // pred_region
      %107 = dma.done [#allocation5], 8192
    $region57: #{_forward_impl.1} parent=1 // pred_fallthru
      _
    // Predicated region
    $region58: #{_forward_impl.1} parent=1 // pred_check
      _
    $region59: #{_forward_impl.1} parent=1 // pred_check_branch
      %109 = sbr.rel (0) target = $region61
    $region60: #{_forward_impl.1} parent=1 // pred_region
      %111 = dma.done [#allocation8], 8192
    $region61: #{_forward_impl.1} parent=1 // pred_fallthru
      _
    // Predicated region
    $region62: #{_forward_impl.1} parent=1 // pred_check
      _
    $region63: #{_forward_impl.1} parent=1 // pred_check_branch
      %113 = sbr.rel (0) target = $region65
    $region64: #{_forward_impl.1} parent=1 // pred_region
      %115 = dma.done [#allocation8], 4096
    $region65: #{_forward_impl.1} parent=1 // pred_fallthru
      _
    %v116 = vld [vmem:[%s0] sm:$0xff]
    %v117 = vld [vmem:[%s0 + $0x8] sm:$0xff]
    %v118 = vld [vmem:[%s0 + $0x10] sm:$0xff]
    %v119 = vld [vmem:[%s0 + $0x18] sm:$0xf]
    %v120 = vld [vmem:[%s0 + $0x1c] sm:$0xff]
    %v121 = vld [vmem:[%s0 + $0x24] sm:$0xff]
    %v122 = vld [vmem:[%s0 + $0x2c] sm:$0xff]
    %v123 = vld [vmem:[%s0 + $0x34] sm:$0xf]
    %v124 = vld [vmem:[#allocation2] sm:$0xff]
    %v125 = vld [vmem:[#allocation2 + $0x8] sm:$0xff]
    %v126 = vld [vmem:[#allocation2 + $0x10] sm:$0xff]
    %v127 = vld [vmem:[#allocation2 + $0x18] sm:$0xff]
    %v128 = vld [vmem:[#allocation2 + $0x20] sm:$0xff]
    %v129 = vld [vmem:[#allocation2 + $0x28] sm:$0xff]
    %v130 = vld [vmem:[#allocation2 + $0x30] sm:$0xff]
    %v131 = vld [vmem:[#allocation2 + $0x38] sm:$0xff]
    %v132 = vld [vmem:[#allocation2 + $0x40] sm:$0xff]
    %v133 = vld [vmem:[#allocation2 + $0x48] sm:$0xff]
    %v134 = vld [vmem:[#allocation2 + $0x50] sm:$0xff]
    %v135 = vld [vmem:[#allocation2 + $0x58] sm:$0xff]
    %v136 = vld [vmem:[#allocation2 + $0x60] sm:$0xff]
    %v137 = vld [vmem:[#allocation2 + $0x68] sm:$0xff]
    %v138 = vld [vmem:[#allocation2 + $0x70] sm:$0xff]
    %v139 = vld [vmem:[#allocation2 + $0x78] sm:$0xff]
    %v140 = vld [vmem:[#allocation2 + $0x80] sm:$0xff]
    %v141 = vld [vmem:[#allocation2 + $0x88] sm:$0xff]
    %v142 = vld [vmem:[#allocation2 + $0x90] sm:$0xff]
    %v143 = vld [vmem:[#allocation2 + $0x98] sm:$0xff]
    %v144 = vld [vmem:[#allocation2 + $0xa0] sm:$0xff]
    %v145 = vld [vmem:[#allocation2 + $0xa8] sm:$0xff]
    %v146 = vld [vmem:[#allocation2 + $0xb0] sm:$0xff]
    %v147 = vld [vmem:[#allocation2 + $0xb8] sm:$0xff]
    %v148 = vld [vmem:[#allocation2 + $0xc0] sm:$0xff]
    %v149 = vld [vmem:[#allocation2 + $0xc8] sm:$0xff]
    %v150 = vld [vmem:[#allocation2 + $0xd0] sm:$0xff]
    %v151 = vld [vmem:[#allocation2 + $0xd8] sm:$0xff]
    %v152 = vld [vmem:[#allocation2 + $0xe0] sm:$0xff]
    %v153 = vld [vmem:[#allocation2 + $0xe8] sm:$0xff]
    %v154 = vld [vmem:[#allocation2 + $0xf0] sm:$0xff]
    %v155 = vld [vmem:[#allocation2 + $0xf8] sm:$0xff]
    %v156 = vld [vmem:[#allocation2 + $0x100] sm:$0xff]
    %v157 = vld [vmem:[#allocation2 + $0x108] sm:$0xff]
    %v158 = vld [vmem:[#allocation2 + $0x110] sm:$0xff]
    %v159 = vld [vmem:[#allocation2 + $0x118] sm:$0xff]
    %v160 = vld [vmem:[#allocation2 + $0x120] sm:$0xff]
    %v161 = vld [vmem:[#allocation2 + $0x128] sm:$0xff]
    %v162 = vld [vmem:[#allocation2 + $0x130] sm:$0xff]
    %v163 = vld [vmem:[#allocation2 + $0x138] sm:$0xff]
    %v164 = vld [vmem:[#allocation2 + $0x140] sm:$0xff]
    %v165 = vld [vmem:[#allocation2 + $0x148] sm:$0xff]
    %v166 = vld [vmem:[#allocation2 + $0x150] sm:$0xff]
    %v167 = vld [vmem:[#allocation2 + $0x158] sm:$0xff]
    %v168 = vld [vmem:[#allocation2 + $0x160] sm:$0xff]
    %v169 = vld [vmem:[#allocation2 + $0x168] sm:$0xff]
    %v170 = vld [vmem:[#allocation2 + $0x170] sm:$0xff]
    %v171 = vld [vmem:[#allocation2 + $0x178] sm:$0xff]
    %v172 = vld [vmem:[#allocation2 + $0x180] sm:$0xff]
    %v173 = vld [vmem:[#allocation2 + $0x188] sm:$0xff]
    %v174 = vld [vmem:[#allocation2 + $0x190] sm:$0xff]
    %v175 = vld [vmem:[#allocation2 + $0x198] sm:$0xff]
    %v176 = vld [vmem:[#allocation2 + $0x1a0] sm:$0xff]
    %v177 = vld [vmem:[#allocation2 + $0x1a8] sm:$0xff]
    %v178 = vld [vmem:[#allocation2 + $0x1b0] sm:$0xff]
    %v179 = vld [vmem:[#allocation2 + $0x1b8] sm:$0xff]
    %v180 = vld [vmem:[#allocation2 + $0x1c0] sm:$0xff]
    %v181 = vld [vmem:[#allocation2 + $0x1c8] sm:$0xff]
    %v182 = vld [vmem:[#allocation2 + $0x1d0] sm:$0xff]
    %v183 = vld [vmem:[#allocation2 + $0x1d8] sm:$0xff]
    %v184 = vld [vmem:[#allocation2 + $0x1e0] sm:$0xff]
    %v185 = vld [vmem:[#allocation2 + $0x1e8] sm:$0xff]
    %v186 = vld [vmem:[#allocation2 + $0x1f0] sm:$0xff]
    %v187 = vld [vmem:[#allocation2 + $0x1f8] sm:$0xff]
    %v188 = vld [vmem:[#allocation2 + $0x200] sm:$0xff]
    %v189 = vld [vmem:[#allocation2 + $0x208] sm:$0xff]
    %v190 = vld [vmem:[#allocation2 + $0x210] sm:$0xff]
    %v191 = vld [vmem:[#allocation2 + $0x218] sm:$0xff]
    %v192 = vld [vmem:[#allocation2 + $0x220] sm:$0xff]
    %v193 = vld [vmem:[#allocation2 + $0x228] sm:$0xff]
    %v194 = vld [vmem:[#allocation2 + $0x230] sm:$0xff]
    %v195 = vld [vmem:[#allocation2 + $0x238] sm:$0xff]
    %v196 = vld [vmem:[#allocation2 + $0x240] sm:$0xff]
    %v197 = vld [vmem:[#allocation2 + $0x248] sm:$0xff]
    %v198 = vld [vmem:[#allocation2 + $0x250] sm:$0xff]
    %v199 = vld [vmem:[#allocation2 + $0x258] sm:$0xff]
    %v200 = vld [vmem:[#allocation2 + $0x260] sm:$0xff]
    %v201 = vld [vmem:[#allocation2 + $0x268] sm:$0xff]
    %v202 = vld [vmem:[#allocation2 + $0x270] sm:$0xff]
    %v203 = vld [vmem:[#allocation2 + $0x278] sm:$0xff]
    %v204 = vld [vmem:[#allocation2 + $0x280] sm:$0xff]
    %v205 = vld [vmem:[#allocation2 + $0x288] sm:$0xff]
    %v206 = vld [vmem:[#allocation2 + $0x290] sm:$0xff]
    %v207 = vld [vmem:[#allocation2 + $0x298] sm:$0xff]
    %v208 = vld [vmem:[#allocation2 + $0x2a0] sm:$0xff]
    %v209 = vld [vmem:[#allocation2 + $0x2a8] sm:$0xff]
    %v210 = vld [vmem:[#allocation2 + $0x2b0] sm:$0xff]
    %v211 = vld [vmem:[#allocation2 + $0x2b8] sm:$0xff]
    %v212 = vld [vmem:[#allocation2 + $0x2c0] sm:$0xff]
    %v213 = vld [vmem:[#allocation2 + $0x2c8] sm:$0xff]
    %v214 = vld [vmem:[#allocation2 + $0x2d0] sm:$0xff]
    %v215 = vld [vmem:[#allocation2 + $0x2d8] sm:$0xff]
    %v216 = vld [vmem:[#allocation2 + $0x2e0] sm:$0xff]
    %v217 = vld [vmem:[#allocation2 + $0x2e8] sm:$0xff]
    %v218 = vld [vmem:[#allocation2 + $0x2f0] sm:$0xff]
    %v219 = vld [vmem:[#allocation2 + $0x2f8] sm:$0xff]
    %v220 = vld [vmem:[#allocation2 + $0x300] sm:$0xff]
    %v221 = vld [vmem:[#allocation2 + $0x308] sm:$0xff]
    %v222 = vld [vmem:[#allocation2 + $0x310] sm:$0xff]
    %v223 = vld [vmem:[#allocation2 + $0x318] sm:$0xff]
    %v224 = vld [vmem:[#allocation2 + $0x320] sm:$0xff]
    %v225 = vld [vmem:[#allocation2 + $0x328] sm:$0xff]
    %v226 = vld [vmem:[#allocation2 + $0x330] sm:$0xff]
    %v227 = vld [vmem:[#allocation2 + $0x338] sm:$0xff]
    %v228 = vld [vmem:[#allocation2 + $0x340] sm:$0xff]
    %v229 = vld [vmem:[#allocation2 + $0x348] sm:$0xff]
    %v230 = vld [vmem:[#allocation2 + $0x350] sm:$0xff]
    %v231 = vld [vmem:[#allocation2 + $0x358] sm:$0xff]
    %v232 = vld [vmem:[#allocation2 + $0x360] sm:$0xff]
    %v233 = vld [vmem:[#allocation2 + $0x368] sm:$0xff]
    %v234 = vld [vmem:[#allocation2 + $0x370] sm:$0xff]
    %v235 = vld [vmem:[#allocation2 + $0x378] sm:$0xff]
    %v236 = vld [vmem:[#allocation2 + $0x380] sm:$0xff]
    %v237 = vld [vmem:[#allocation2 + $0x388] sm:$0xff]
    %v238 = vld [vmem:[#allocation2 + $0x390] sm:$0xff]
    %v239 = vld [vmem:[#allocation2 + $0x398] sm:$0xff]
    %v240 = vld [vmem:[#allocation2 + $0x3a0] sm:$0xff]
    %v241 = vld [vmem:[#allocation2 + $0x3a8] sm:$0xff]
    %v242 = vld [vmem:[#allocation2 + $0x3b0] sm:$0xff]
    %v243 = vld [vmem:[#allocation2 + $0x3b8] sm:$0xff]
    %v244 = vld [vmem:[#allocation2 + $0x3c0] sm:$0xff]
    %v245 = vld [vmem:[#allocation2 + $0x3c8] sm:$0xff]
    %v246 = vld [vmem:[#allocation2 + $0x3d0] sm:$0xff]
    %v247 = vld [vmem:[#allocation2 + $0x3d8] sm:$0xff]
    %v248 = vld [vmem:[#allocation2 + $0x3e0] sm:$0xff]
    %v249 = vld [vmem:[#allocation2 + $0x3e8] sm:$0xff]
    %v250 = vld [vmem:[#allocation2 + $0x3f0] sm:$0xff]
    %v251 = vld [vmem:[#allocation2 + $0x3f8] sm:$0xff]
    %v252 = vld [vmem:[#allocation2 + $0x400] sm:$0xff]
    %v253 = vld [vmem:[#allocation2 + $0x408] sm:$0xff]
    %v254 = vld [vmem:[#allocation2 + $0x410] sm:$0xff]
    %v255 = vld [vmem:[#allocation2 + $0x418] sm:$0xff]
    %v256 = vld [vmem:[#allocation2 + $0x420] sm:$0xff]
    %v257 = vld [vmem:[#allocation2 + $0x428] sm:$0xff]
    %v258 = vld [vmem:[#allocation2 + $0x430] sm:$0xff]
    %v259 = vld [vmem:[#allocation2 + $0x438] sm:$0xff]
    %v260 = vld [vmem:[#allocation2 + $0x440] sm:$0xff]
    %v261 = vld [vmem:[#allocation2 + $0x448] sm:$0xff]
    %v262 = vld [vmem:[#allocation2 + $0x450] sm:$0xff]
    %v263 = vld [vmem:[#allocation2 + $0x458] sm:$0xff]
    %v264 = vld [vmem:[#allocation2 + $0x460] sm:$0xff]
    %v265 = vld [vmem:[#allocation2 + $0x468] sm:$0xff]
    %v266 = vld [vmem:[#allocation2 + $0x470] sm:$0xff]
    %v267 = vld [vmem:[#allocation2 + $0x478] sm:$0xff]
    %v268 = vld [vmem:[#allocation2 + $0x480] sm:$0xff]
    %v269 = vld [vmem:[#allocation2 + $0x488] sm:$0xff]
    %v270 = vld [vmem:[#allocation2 + $0x490] sm:$0xff]
    %v271 = vld [vmem:[#allocation2 + $0x498] sm:$0xff]
    %v272 = vld [vmem:[#allocation2 + $0x4a0] sm:$0xff]
    %v273 = vld [vmem:[#allocation2 + $0x4a8] sm:$0xff]
    %v274 = vld [vmem:[#allocation2 + $0x4b0] sm:$0xff]
    %v275 = vld [vmem:[#allocation2 + $0x4b8] sm:$0xff]
    %v276 = vld [vmem:[#allocation2 + $0x4c0] sm:$0xff]
    %v277 = vld [vmem:[#allocation2 + $0x4c8] sm:$0xff]
    %v278 = vld [vmem:[#allocation2 + $0x4d0] sm:$0xff]
    %v279 = vld [vmem:[#allocation2 + $0x4d8] sm:$0xff]
    %v280 = vld [vmem:[#allocation2 + $0x4e0] sm:$0xff]
    %v281 = vld [vmem:[#allocation2 + $0x4e8] sm:$0xff]
    %v282 = vld [vmem:[#allocation2 + $0x4f0] sm:$0xff]
    %v283 = vld [vmem:[#allocation2 + $0x4f8] sm:$0xff]
    %v284 = vld [vmem:[#allocation2 + $0x500] sm:$0xff]
    %v285 = vld [vmem:[#allocation2 + $0x508] sm:$0xff]
    %v286 = vld [vmem:[#allocation2 + $0x510] sm:$0xff]
    %v287 = vld [vmem:[#allocation2 + $0x518] sm:$0xff]
    %v288 = vld [vmem:[#allocation2 + $0x520] sm:$0xff]
    %v289 = vld [vmem:[#allocation2 + $0x528] sm:$0xff]
    %v290 = vld [vmem:[#allocation2 + $0x530] sm:$0xff]
    %v291 = vld [vmem:[#allocation2 + $0x538] sm:$0xff]
    %v292 = vld [vmem:[#allocation2 + $0x540] sm:$0xff]
    %v293 = vld [vmem:[#allocation2 + $0x548] sm:$0xff]
    %v294 = vld [vmem:[#allocation2 + $0x550] sm:$0xff]
    %v295 = vld [vmem:[#allocation2 + $0x558] sm:$0xff]
    %v296 = vld [vmem:[#allocation2 + $0x560] sm:$0xff]
    %v297 = vld [vmem:[#allocation2 + $0x568] sm:$0xff]
    %v298 = vld [vmem:[#allocation2 + $0x570] sm:$0xff]
    %v299 = vld [vmem:[#allocation2 + $0x578] sm:$0xff]
    %v300 = vld [vmem:[#allocation2 + $0x580] sm:$0xff]
    %v301 = vld [vmem:[#allocation2 + $0x588] sm:$0xff]
    %v302 = vld [vmem:[#allocation2 + $0x590] sm:$0xff]
    %v303 = vld [vmem:[#allocation2 + $0x598] sm:$0xff]
    %v304 = vld [vmem:[#allocation2 + $0x5a0] sm:$0xff]
    %v305 = vld [vmem:[#allocation2 + $0x5a8] sm:$0xff]
    %v306 = vld [vmem:[#allocation2 + $0x5b0] sm:$0xff]
    %v307 = vld [vmem:[#allocation2 + $0x5b8] sm:$0xff]
    %v308 = vld [vmem:[#allocation2 + $0x5c0] sm:$0xff]
    %v309 = vld [vmem:[#allocation2 + $0x5c8] sm:$0xff]
    %v310 = vld [vmem:[#allocation2 + $0x5d0] sm:$0xff]
    %v311 = vld [vmem:[#allocation2 + $0x5d8] sm:$0xff]
    %v312 = vld [vmem:[#allocation2 + $0x5e0] sm:$0xff]
    %v313 = vld [vmem:[#allocation2 + $0x5e8] sm:$0xff]
    %v314 = vld [vmem:[#allocation2 + $0x5f0] sm:$0xff]
    %v315 = vld [vmem:[#allocation2 + $0x5f8] sm:$0xff]
    %v316 = vld [vmem:[#allocation2 + $0x600] sm:$0xff]
    %v317 = vld [vmem:[#allocation2 + $0x608] sm:$0xff]
    %v318 = vld [vmem:[#allocation2 + $0x610] sm:$0xff]
    %v319 = vld [vmem:[#allocation2 + $0x618] sm:$0xff]
    %v320 = vld [vmem:[#allocation2 + $0x620] sm:$0xff]
    %v321 = vld [vmem:[#allocation2 + $0x628] sm:$0xff]
    %v322 = vld [vmem:[#allocation2 + $0x630] sm:$0xff]
    %v323 = vld [vmem:[#allocation2 + $0x638] sm:$0xff]
    %v324 = vld [vmem:[#allocation2 + $0x640] sm:$0xff]
    %v325 = vld [vmem:[#allocation2 + $0x648] sm:$0xff]
    %v326 = vld [vmem:[#allocation2 + $0x650] sm:$0xff]
    %v327 = vld [vmem:[#allocation2 + $0x658] sm:$0xff]
    %v328 = vld [vmem:[#allocation2 + $0x660] sm:$0xff]
    %v329 = vld [vmem:[#allocation2 + $0x668] sm:$0xff]
    %v330 = vld [vmem:[#allocation2 + $0x670] sm:$0xff]
    %v331 = vld [vmem:[#allocation2 + $0x678] sm:$0xff]
    %v332 = vld [vmem:[#allocation2 + $0x680] sm:$0xff]
    %v333 = vld [vmem:[#allocation2 + $0x688] sm:$0xff]
    %v334 = vld [vmem:[#allocation2 + $0x690] sm:$0xff]
    %v335 = vld [vmem:[#allocation2 + $0x698] sm:$0xff]
    %v336 = vld [vmem:[#allocation2 + $0x6a0] sm:$0xff]
    %v337 = vld [vmem:[#allocation2 + $0x6a8] sm:$0xff]
    %v338 = vld [vmem:[#allocation2 + $0x6b0] sm:$0xff]
    %v339 = vld [vmem:[#allocation2 + $0x6b8] sm:$0xff]
    %v340 = vld [vmem:[#allocation2 + $0x6c0] sm:$0xff]
    %v341 = vld [vmem:[#allocation2 + $0x6c8] sm:$0xff]
    %v342 = vld [vmem:[#allocation2 + $0x6d0] sm:$0xff]
    %v343 = vld [vmem:[#allocation2 + $0x6d8] sm:$0xff]
    %v344 = vld [vmem:[#allocation2 + $0x6e0] sm:$0xff]
    %v345 = vld [vmem:[#allocation2 + $0x6e8] sm:$0xff]
    %v346 = vld [vmem:[#allocation2 + $0x6f0] sm:$0xff]
    %v347 = vld [vmem:[#allocation2 + $0x6f8] sm:$0xff]
    %v348 = vld [vmem:[%s2] sm:$0xf]
    %v350 = vperm.slane %v348, 0
    %v351 = vperm.slane %v348, 1
    %v352 = vperm.slane %v348, 2
    %v353 = vperm.slane %v348, 3
    %v366 = vunpack.c.l.b16 %v116
    %v367 = vunpack.c.h.b16 %v116
    %v368 = vunpack.c.l.b16 %v117
    %v369 = vunpack.c.h.b16 %v117
    %v370 = vunpack.c.l.b16 %v118
    %v371 = vunpack.c.h.b16 %v118
    %v372 = vunpack.c.l.b16 %v119
    %v373 = vunpack.c.l.b16 %v120
    %v374 = vunpack.c.h.b16 %v120
    %v375 = vunpack.c.l.b16 %v121
    %v376 = vunpack.c.h.b16 %v121
    %v377 = vunpack.c.l.b16 %v122
    %v378 = vunpack.c.h.b16 %v122
    %v379 = vunpack.c.l.b16 %v123
    %v380 = vpack.c.b16 %v373, %v366
    %v381 = vpack.c.b16 %v374, %v367
    %v382 = vpack.c.b16 %v375, %v368
    %v383 = vpack.c.b16 %v376, %v369
    %v384 = vpack.c.b16 %v377, %v370
    %v385 = vpack.c.b16 %v378, %v371
    %v386 = vpack.c.b16 %v379, %v372
    %v618 = vunpack.c.l.b16 %v124
    %v619 = vunpack.c.h.b16 %v124
    %v620 = vunpack.c.l.b16 %v125
    %v621 = vunpack.c.h.b16 %v125
    %v622 = vunpack.c.l.b16 %v126
    %v623 = vunpack.c.h.b16 %v126
    %v624 = vunpack.c.l.b16 %v127
    %v625 = vunpack.c.h.b16 %v127
    %v626 = vunpack.c.l.b16 %v128
    %v627 = vunpack.c.h.b16 %v128
    %v628 = vunpack.c.l.b16 %v129
    %v629 = vunpack.c.h.b16 %v129
    %v630 = vunpack.c.l.b16 %v130
    %v631 = vunpack.c.h.b16 %v130
    %v632 = vunpack.c.l.b16 %v131
    %v633 = vunpack.c.h.b16 %v131
    %v634 = vunpack.c.l.b16 %v132
    %v635 = vunpack.c.h.b16 %v132
    %v636 = vunpack.c.l.b16 %v133
    %v637 = vunpack.c.h.b16 %v133
    %v638 = vunpack.c.l.b16 %v134
    %v639 = vunpack.c.h.b16 %v134
    %v640 = vunpack.c.l.b16 %v135
    %v641 = vunpack.c.h.b16 %v135
    %v642 = vunpack.c.l.b16 %v136
    %v643 = vunpack.c.h.b16 %v136
    %v644 = vunpack.c.l.b16 %v137
    %v645 = vunpack.c.h.b16 %v137
    %v646 = vunpack.c.l.b16 %v138
    %v647 = vunpack.c.h.b16 %v138
    %v648 = vunpack.c.l.b16 %v139
    %v649 = vunpack.c.h.b16 %v139
    %v650 = vunpack.c.l.b16 %v140
    %v651 = vunpack.c.h.b16 %v140
    %v652 = vunpack.c.l.b16 %v141
    %v653 = vunpack.c.h.b16 %v141
    %v654 = vunpack.c.l.b16 %v142
    %v655 = vunpack.c.h.b16 %v142
    %v656 = vunpack.c.l.b16 %v143
    %v657 = vunpack.c.h.b16 %v143
    %v658 = vunpack.c.l.b16 %v144
    %v659 = vunpack.c.h.b16 %v144
    %v660 = vunpack.c.l.b16 %v145
    %v661 = vunpack.c.h.b16 %v145
    %v662 = vunpack.c.l.b16 %v146
    %v663 = vunpack.c.h.b16 %v146
    %v664 = vunpack.c.l.b16 %v147
    %v665 = vunpack.c.h.b16 %v147
    %v666 = vunpack.c.l.b16 %v148
    %v667 = vunpack.c.h.b16 %v148
    %v668 = vunpack.c.l.b16 %v149
    %v669 = vunpack.c.h.b16 %v149
    %v670 = vunpack.c.l.b16 %v150
    %v671 = vunpack.c.h.b16 %v150
    %v672 = vunpack.c.l.b16 %v151
    %v673 = vunpack.c.h.b16 %v151
    %v674 = vunpack.c.l.b16 %v152
    %v675 = vunpack.c.h.b16 %v152
    %v676 = vunpack.c.l.b16 %v153
    %v677 = vunpack.c.h.b16 %v153
    %v678 = vunpack.c.l.b16 %v154
    %v679 = vunpack.c.h.b16 %v154
    %v680 = vunpack.c.l.b16 %v155
    %v681 = vunpack.c.h.b16 %v155
    %v682 = vunpack.c.l.b16 %v156
    %v683 = vunpack.c.h.b16 %v156
    %v684 = vunpack.c.l.b16 %v157
    %v685 = vunpack.c.h.b16 %v157
    %v686 = vunpack.c.l.b16 %v158
    %v687 = vunpack.c.h.b16 %v158
    %v688 = vunpack.c.l.b16 %v159
    %v689 = vunpack.c.h.b16 %v159
    %v690 = vunpack.c.l.b16 %v160
    %v691 = vunpack.c.h.b16 %v160
    %v692 = vunpack.c.l.b16 %v161
    %v693 = vunpack.c.h.b16 %v161
    %v694 = vunpack.c.l.b16 %v162
    %v695 = vunpack.c.h.b16 %v162
    %v696 = vunpack.c.l.b16 %v163
    %v697 = vunpack.c.h.b16 %v163
    %v698 = vunpack.c.l.b16 %v164
    %v699 = vunpack.c.h.b16 %v164
    %v700 = vunpack.c.l.b16 %v165
    %v701 = vunpack.c.h.b16 %v165
    %v702 = vunpack.c.l.b16 %v166
    %v703 = vunpack.c.h.b16 %v166
    %v704 = vunpack.c.l.b16 %v167
    %v705 = vunpack.c.h.b16 %v167
    %v706 = vunpack.c.l.b16 %v168
    %v707 = vunpack.c.h.b16 %v168
    %v708 = vunpack.c.l.b16 %v169
    %v709 = vunpack.c.h.b16 %v169
    %v710 = vunpack.c.l.b16 %v170
    %v711 = vunpack.c.h.b16 %v170
    %v712 = vunpack.c.l.b16 %v171
    %v713 = vunpack.c.h.b16 %v171
    %v714 = vunpack.c.l.b16 %v172
    %v715 = vunpack.c.h.b16 %v172
    %v716 = vunpack.c.l.b16 %v173
    %v717 = vunpack.c.h.b16 %v173
    %v718 = vunpack.c.l.b16 %v174
    %v719 = vunpack.c.h.b16 %v174
    %v720 = vunpack.c.l.b16 %v175
    %v721 = vunpack.c.h.b16 %v175
    %v722 = vunpack.c.l.b16 %v176
    %v723 = vunpack.c.h.b16 %v176
    %v724 = vunpack.c.l.b16 %v177
    %v725 = vunpack.c.h.b16 %v177
    %v726 = vunpack.c.l.b16 %v178
    %v727 = vunpack.c.h.b16 %v178
    %v728 = vunpack.c.l.b16 %v179
    %v729 = vunpack.c.h.b16 %v179
    %v730 = vunpack.c.l.b16 %v180
    %v731 = vunpack.c.h.b16 %v180
    %v732 = vunpack.c.l.b16 %v181
    %v733 = vunpack.c.h.b16 %v181
    %v734 = vunpack.c.l.b16 %v182
    %v735 = vunpack.c.h.b16 %v182
    %v736 = vunpack.c.l.b16 %v183
    %v737 = vunpack.c.h.b16 %v183
    %v738 = vunpack.c.l.b16 %v184
    %v739 = vunpack.c.h.b16 %v184
    %v740 = vunpack.c.l.b16 %v185
    %v741 = vunpack.c.h.b16 %v185
    %v742 = vunpack.c.l.b16 %v186
    %v743 = vunpack.c.h.b16 %v186
    %v744 = vunpack.c.l.b16 %v187
    %v745 = vunpack.c.h.b16 %v187
    %v746 = vunpack.c.l.b16 %v188
    %v747 = vunpack.c.h.b16 %v188
    %v748 = vunpack.c.l.b16 %v189
    %v749 = vunpack.c.h.b16 %v189
    %v750 = vunpack.c.l.b16 %v190
    %v751 = vunpack.c.h.b16 %v190
    %v752 = vunpack.c.l.b16 %v191
    %v753 = vunpack.c.h.b16 %v191
    %v754 = vunpack.c.l.b16 %v192
    %v755 = vunpack.c.h.b16 %v192
    %v756 = vunpack.c.l.b16 %v193
    %v757 = vunpack.c.h.b16 %v193
    %v758 = vunpack.c.l.b16 %v194
    %v759 = vunpack.c.h.b16 %v194
    %v760 = vunpack.c.l.b16 %v195
    %v761 = vunpack.c.h.b16 %v195
    %v762 = vunpack.c.l.b16 %v196
    %v763 = vunpack.c.h.b16 %v196
    %v764 = vunpack.c.l.b16 %v197
    %v765 = vunpack.c.h.b16 %v197
    %v766 = vunpack.c.l.b16 %v198
    %v767 = vunpack.c.h.b16 %v198
    %v768 = vunpack.c.l.b16 %v199
    %v769 = vunpack.c.h.b16 %v199
    %v770 = vunpack.c.l.b16 %v200
    %v771 = vunpack.c.h.b16 %v200
    %v772 = vunpack.c.l.b16 %v201
    %v773 = vunpack.c.h.b16 %v201
    %v774 = vunpack.c.l.b16 %v202
    %v775 = vunpack.c.h.b16 %v202
    %v776 = vunpack.c.l.b16 %v203
    %v777 = vunpack.c.h.b16 %v203
    %v778 = vunpack.c.l.b16 %v204
    %v779 = vunpack.c.h.b16 %v204
    %v780 = vunpack.c.l.b16 %v205
    %v781 = vunpack.c.h.b16 %v205
    %v782 = vunpack.c.l.b16 %v206
    %v783 = vunpack.c.h.b16 %v206
    %v784 = vunpack.c.l.b16 %v207
    %v785 = vunpack.c.h.b16 %v207
    %v786 = vunpack.c.l.b16 %v208
    %v787 = vunpack.c.h.b16 %v208
    %v788 = vunpack.c.l.b16 %v209
    %v789 = vunpack.c.h.b16 %v209
    %v790 = vunpack.c.l.b16 %v210
    %v791 = vunpack.c.h.b16 %v210
    %v792 = vunpack.c.l.b16 %v211
    %v793 = vunpack.c.h.b16 %v211
    %v794 = vunpack.c.l.b16 %v212
    %v795 = vunpack.c.h.b16 %v212
    %v796 = vunpack.c.l.b16 %v213
    %v797 = vunpack.c.h.b16 %v213
    %v798 = vunpack.c.l.b16 %v214
    %v799 = vunpack.c.h.b16 %v214
    %v800 = vunpack.c.l.b16 %v215
    %v801 = vunpack.c.h.b16 %v215
    %v802 = vunpack.c.l.b16 %v216
    %v803 = vunpack.c.h.b16 %v216
    %v804 = vunpack.c.l.b16 %v217
    %v805 = vunpack.c.h.b16 %v217
    %v806 = vunpack.c.l.b16 %v218
    %v807 = vunpack.c.h.b16 %v218
    %v808 = vunpack.c.l.b16 %v219
    %v809 = vunpack.c.h.b16 %v219
    %v810 = vunpack.c.l.b16 %v220
    %v811 = vunpack.c.h.b16 %v220
    %v812 = vunpack.c.l.b16 %v221
    %v813 = vunpack.c.h.b16 %v221
    %v814 = vunpack.c.l.b16 %v222
    %v815 = vunpack.c.h.b16 %v222
    %v816 = vunpack.c.l.b16 %v223
    %v817 = vunpack.c.h.b16 %v223
    %v818 = vunpack.c.l.b16 %v224
    %v819 = vunpack.c.h.b16 %v224
    %v820 = vunpack.c.l.b16 %v225
    %v821 = vunpack.c.h.b16 %v225
    %v822 = vunpack.c.l.b16 %v226
    %v823 = vunpack.c.h.b16 %v226
    %v824 = vunpack.c.l.b16 %v227
    %v825 = vunpack.c.h.b16 %v227
    %v826 = vunpack.c.l.b16 %v228
    %v827 = vunpack.c.h.b16 %v228
    %v828 = vunpack.c.l.b16 %v229
    %v829 = vunpack.c.h.b16 %v229
    %v830 = vunpack.c.l.b16 %v230
    %v831 = vunpack.c.h.b16 %v230
    %v832 = vunpack.c.l.b16 %v231
    %v833 = vunpack.c.h.b16 %v231
    %v834 = vunpack.c.l.b16 %v232
    %v835 = vunpack.c.h.b16 %v232
    %v836 = vunpack.c.l.b16 %v233
    %v837 = vunpack.c.h.b16 %v233
    %v838 = vunpack.c.l.b16 %v234
    %v839 = vunpack.c.h.b16 %v234
    %v840 = vunpack.c.l.b16 %v235
    %v841 = vunpack.c.h.b16 %v235
    %v842 = vunpack.c.l.b16 %v236
    %v843 = vunpack.c.h.b16 %v236
    %v844 = vunpack.c.l.b16 %v237
    %v845 = vunpack.c.h.b16 %v237
    %v846 = vunpack.c.l.b16 %v238
    %v847 = vunpack.c.h.b16 %v238
    %v848 = vunpack.c.l.b16 %v239
    %v849 = vunpack.c.h.b16 %v239
    %v850 = vunpack.c.l.b16 %v240
    %v851 = vunpack.c.h.b16 %v240
    %v852 = vunpack.c.l.b16 %v241
    %v853 = vunpack.c.h.b16 %v241
    %v854 = vunpack.c.l.b16 %v242
    %v855 = vunpack.c.h.b16 %v242
    %v856 = vunpack.c.l.b16 %v243
    %v857 = vunpack.c.h.b16 %v243
    %v858 = vunpack.c.l.b16 %v244
    %v859 = vunpack.c.h.b16 %v244
    %v860 = vunpack.c.l.b16 %v245
    %v861 = vunpack.c.h.b16 %v245
    %v862 = vunpack.c.l.b16 %v246
    %v863 = vunpack.c.h.b16 %v246
    %v864 = vunpack.c.l.b16 %v247
    %v865 = vunpack.c.h.b16 %v247
    %v866 = vunpack.c.l.b16 %v248
    %v867 = vunpack.c.h.b16 %v248
    %v868 = vunpack.c.l.b16 %v249
    %v869 = vunpack.c.h.b16 %v249
    %v870 = vunpack.c.l.b16 %v250
    %v871 = vunpack.c.h.b16 %v250
    %v872 = vunpack.c.l.b16 %v251
    %v873 = vunpack.c.h.b16 %v251
    %v874 = vunpack.c.l.b16 %v252
    %v875 = vunpack.c.h.b16 %v252
    %v876 = vunpack.c.l.b16 %v253
    %v877 = vunpack.c.h.b16 %v253
    %v878 = vunpack.c.l.b16 %v254
    %v879 = vunpack.c.h.b16 %v254
    %v880 = vunpack.c.l.b16 %v255
    %v881 = vunpack.c.h.b16 %v255
    %v882 = vunpack.c.l.b16 %v256
    %v883 = vunpack.c.h.b16 %v256
    %v884 = vunpack.c.l.b16 %v257
    %v885 = vunpack.c.h.b16 %v257
    %v886 = vunpack.c.l.b16 %v258
    %v887 = vunpack.c.h.b16 %v258
    %v888 = vunpack.c.l.b16 %v259
    %v889 = vunpack.c.h.b16 %v259
    %v890 = vunpack.c.l.b16 %v260
    %v891 = vunpack.c.h.b16 %v260
    %v892 = vunpack.c.l.b16 %v261
    %v893 = vunpack.c.h.b16 %v261
    %v894 = vunpack.c.l.b16 %v262
    %v895 = vunpack.c.h.b16 %v262
    %v896 = vunpack.c.l.b16 %v263
    %v897 = vunpack.c.h.b16 %v263
    %v898 = vunpack.c.l.b16 %v264
    %v899 = vunpack.c.h.b16 %v264
    %v900 = vunpack.c.l.b16 %v265
    %v901 = vunpack.c.h.b16 %v265
    %v902 = vunpack.c.l.b16 %v266
    %v903 = vunpack.c.h.b16 %v266
    %v904 = vunpack.c.l.b16 %v267
    %v905 = vunpack.c.h.b16 %v267
    %v906 = vunpack.c.l.b16 %v268
    %v907 = vunpack.c.h.b16 %v268
    %v908 = vunpack.c.l.b16 %v269
    %v909 = vunpack.c.h.b16 %v269
    %v910 = vunpack.c.l.b16 %v270
    %v911 = vunpack.c.h.b16 %v270
    %v912 = vunpack.c.l.b16 %v271
    %v913 = vunpack.c.h.b16 %v271
    %v914 = vunpack.c.l.b16 %v272
    %v915 = vunpack.c.h.b16 %v272
    %v916 = vunpack.c.l.b16 %v273
    %v917 = vunpack.c.h.b16 %v273
    %v918 = vunpack.c.l.b16 %v274
    %v919 = vunpack.c.h.b16 %v274
    %v920 = vunpack.c.l.b16 %v275
    %v921 = vunpack.c.h.b16 %v275
    %v922 = vunpack.c.l.b16 %v276
    %v923 = vunpack.c.h.b16 %v276
    %v924 = vunpack.c.l.b16 %v277
    %v925 = vunpack.c.h.b16 %v277
    %v926 = vunpack.c.l.b16 %v278
    %v927 = vunpack.c.h.b16 %v278
    %v928 = vunpack.c.l.b16 %v279
    %v929 = vunpack.c.h.b16 %v279
    %v930 = vunpack.c.l.b16 %v280
    %v931 = vunpack.c.h.b16 %v280
    %v932 = vunpack.c.l.b16 %v281
    %v933 = vunpack.c.h.b16 %v281
    %v934 = vunpack.c.l.b16 %v282
    %v935 = vunpack.c.h.b16 %v282
    %v936 = vunpack.c.l.b16 %v283
    %v937 = vunpack.c.h.b16 %v283
    %v938 = vunpack.c.l.b16 %v284
    %v939 = vunpack.c.h.b16 %v284
    %v940 = vunpack.c.l.b16 %v285
    %v941 = vunpack.c.h.b16 %v285
    %v942 = vunpack.c.l.b16 %v286
    %v943 = vunpack.c.h.b16 %v286
    %v944 = vunpack.c.l.b16 %v287
    %v945 = vunpack.c.h.b16 %v287
    %v946 = vunpack.c.l.b16 %v288
    %v947 = vunpack.c.h.b16 %v288
    %v948 = vunpack.c.l.b16 %v289
    %v949 = vunpack.c.h.b16 %v289
    %v950 = vunpack.c.l.b16 %v290
    %v951 = vunpack.c.h.b16 %v290
    %v952 = vunpack.c.l.b16 %v291
    %v953 = vunpack.c.h.b16 %v291
    %v954 = vunpack.c.l.b16 %v292
    %v955 = vunpack.c.h.b16 %v292
    %v956 = vunpack.c.l.b16 %v293
    %v957 = vunpack.c.h.b16 %v293
    %v958 = vunpack.c.l.b16 %v294
    %v959 = vunpack.c.h.b16 %v294
    %v960 = vunpack.c.l.b16 %v295
    %v961 = vunpack.c.h.b16 %v295
    %v962 = vunpack.c.l.b16 %v296
    %v963 = vunpack.c.h.b16 %v296
    %v964 = vunpack.c.l.b16 %v297
    %v965 = vunpack.c.h.b16 %v297
    %v966 = vunpack.c.l.b16 %v298
    %v967 = vunpack.c.h.b16 %v298
    %v968 = vunpack.c.l.b16 %v299
    %v969 = vunpack.c.h.b16 %v299
    %v970 = vunpack.c.l.b16 %v300
    %v971 = vunpack.c.h.b16 %v300
    %v972 = vunpack.c.l.b16 %v301
    %v973 = vunpack.c.h.b16 %v301
    %v974 = vunpack.c.l.b16 %v302
    %v975 = vunpack.c.h.b16 %v302
    %v976 = vunpack.c.l.b16 %v303
    %v977 = vunpack.c.h.b16 %v303
    %v978 = vunpack.c.l.b16 %v304
    %v979 = vunpack.c.h.b16 %v304
    %v980 = vunpack.c.l.b16 %v305
    %v981 = vunpack.c.h.b16 %v305
    %v982 = vunpack.c.l.b16 %v306
    %v983 = vunpack.c.h.b16 %v306
    %v984 = vunpack.c.l.b16 %v307
    %v985 = vunpack.c.h.b16 %v307
    %v986 = vunpack.c.l.b16 %v308
    %v987 = vunpack.c.h.b16 %v308
    %v988 = vunpack.c.l.b16 %v309
    %v989 = vunpack.c.h.b16 %v309
    %v990 = vunpack.c.l.b16 %v310
    %v991 = vunpack.c.h.b16 %v310
    %v992 = vunpack.c.l.b16 %v311
    %v993 = vunpack.c.h.b16 %v311
    %v994 = vunpack.c.l.b16 %v312
    %v995 = vunpack.c.h.b16 %v312
    %v996 = vunpack.c.l.b16 %v313
    %v997 = vunpack.c.h.b16 %v313
    %v998 = vunpack.c.l.b16 %v314
    %v999 = vunpack.c.h.b16 %v314
    %v1000 = vunpack.c.l.b16 %v315
    %v1001 = vunpack.c.h.b16 %v315
    %v1002 = vunpack.c.l.b16 %v316
    %v1003 = vunpack.c.h.b16 %v316
    %v1004 = vunpack.c.l.b16 %v317
    %v1005 = vunpack.c.h.b16 %v317
    %v1006 = vunpack.c.l.b16 %v318
    %v1007 = vunpack.c.h.b16 %v318
    %v1008 = vunpack.c.l.b16 %v319
    %v1009 = vunpack.c.h.b16 %v319
    %v1010 = vunpack.c.l.b16 %v320
    %v1011 = vunpack.c.h.b16 %v320
    %v1012 = vunpack.c.l.b16 %v321
    %v1013 = vunpack.c.h.b16 %v321
    %v1014 = vunpack.c.l.b16 %v322
    %v1015 = vunpack.c.h.b16 %v322
    %v1016 = vunpack.c.l.b16 %v323
    %v1017 = vunpack.c.h.b16 %v323
    %v1018 = vunpack.c.l.b16 %v324
    %v1019 = vunpack.c.h.b16 %v324
    %v1020 = vunpack.c.l.b16 %v325
    %v1021 = vunpack.c.h.b16 %v325
    %v1022 = vunpack.c.l.b16 %v326
    %v1023 = vunpack.c.h.b16 %v326
    %v1024 = vunpack.c.l.b16 %v327
    %v1025 = vunpack.c.h.b16 %v327
    %v1026 = vunpack.c.l.b16 %v328
    %v1027 = vunpack.c.h.b16 %v328
    %v1028 = vunpack.c.l.b16 %v329
    %v1029 = vunpack.c.h.b16 %v329
    %v1030 = vunpack.c.l.b16 %v330
    %v1031 = vunpack.c.h.b16 %v330
    %v1032 = vunpack.c.l.b16 %v331
    %v1033 = vunpack.c.h.b16 %v331
    %v1034 = vunpack.c.l.b16 %v332
    %v1035 = vunpack.c.h.b16 %v332
    %v1036 = vunpack.c.l.b16 %v333
    %v1037 = vunpack.c.h.b16 %v333
    %v1038 = vunpack.c.l.b16 %v334
    %v1039 = vunpack.c.h.b16 %v334
    %v1040 = vunpack.c.l.b16 %v335
    %v1041 = vunpack.c.h.b16 %v335
    %v1042 = vunpack.c.l.b16 %v336
    %v1043 = vunpack.c.h.b16 %v336
    %v1044 = vunpack.c.l.b16 %v337
    %v1045 = vunpack.c.h.b16 %v337
    %v1046 = vunpack.c.l.b16 %v338
    %v1047 = vunpack.c.h.b16 %v338
    %v1048 = vunpack.c.l.b16 %v339
    %v1049 = vunpack.c.h.b16 %v339
    %v1050 = vunpack.c.l.b16 %v340
    %v1051 = vunpack.c.h.b16 %v340
    %v1052 = vunpack.c.l.b16 %v341
    %v1053 = vunpack.c.h.b16 %v341
    %v1054 = vunpack.c.l.b16 %v342
    %v1055 = vunpack.c.h.b16 %v342
    %v1056 = vunpack.c.l.b16 %v343
    %v1057 = vunpack.c.h.b16 %v343
    %v1058 = vunpack.c.l.b16 %v344
    %v1059 = vunpack.c.h.b16 %v344
    %v1060 = vunpack.c.l.b16 %v345
    %v1061 = vunpack.c.h.b16 %v345
    %v1062 = vunpack.c.l.b16 %v346
    %v1063 = vunpack.c.h.b16 %v346
    %v1064 = vunpack.c.l.b16 %v347
    %v1065 = vunpack.c.h.b16 %v347
    %v1066 = vpack.c.b16 %v622, %v618
    %v1067 = vpack.c.b16 %v623, %v619
    %v1068 = vpack.c.b16 %v624, %v620
    %v1069 = vpack.c.b16 %v625, %v621
    %v1070 = vpack.c.b16 %v630, %v626
    %v1071 = vpack.c.b16 %v631, %v627
    %v1072 = vpack.c.b16 %v632, %v628
    %v1073 = vpack.c.b16 %v633, %v629
    %v1074 = vpack.c.b16 %v638, %v634
    %v1075 = vpack.c.b16 %v639, %v635
    %v1076 = vpack.c.b16 %v640, %v636
    %v1077 = vpack.c.b16 %v641, %v637
    %v1078 = vpack.c.b16 %v646, %v642
    %v1079 = vpack.c.b16 %v647, %v643
    %v1080 = vpack.c.b16 %v648, %v644
    %v1081 = vpack.c.b16 %v649, %v645
    %v1082 = vpack.c.b16 %v654, %v650
    %v1083 = vpack.c.b16 %v655, %v651
    %v1084 = vpack.c.b16 %v656, %v652
    %v1085 = vpack.c.b16 %v657, %v653
    %v1086 = vpack.c.b16 %v662, %v658
    %v1087 = vpack.c.b16 %v663, %v659
    %v1088 = vpack.c.b16 %v664, %v660
    %v1089 = vpack.c.b16 %v665, %v661
    %v1090 = vpack.c.b16 %v670, %v666
    %v1091 = vpack.c.b16 %v671, %v667
    %v1092 = vpack.c.b16 %v672, %v668
    %v1093 = vpack.c.b16 %v673, %v669
    %v1094 = vpack.c.b16 %v678, %v674
    %v1095 = vpack.c.b16 %v679, %v675
    %v1096 = vpack.c.b16 %v680, %v676
    %v1097 = vpack.c.b16 %v681, %v677
    %v1098 = vpack.c.b16 %v686, %v682
    %v1099 = vpack.c.b16 %v687, %v683
    %v1100 = vpack.c.b16 %v688, %v684
    %v1101 = vpack.c.b16 %v689, %v685
    %v1102 = vpack.c.b16 %v694, %v690
    %v1103 = vpack.c.b16 %v695, %v691
    %v1104 = vpack.c.b16 %v696, %v692
    %v1105 = vpack.c.b16 %v697, %v693
    %v1106 = vpack.c.b16 %v702, %v698
    %v1107 = vpack.c.b16 %v703, %v699
    %v1108 = vpack.c.b16 %v704, %v700
    %v1109 = vpack.c.b16 %v705, %v701
    %v1110 = vpack.c.b16 %v710, %v706
    %v1111 = vpack.c.b16 %v711, %v707
    %v1112 = vpack.c.b16 %v712, %v708
    %v1113 = vpack.c.b16 %v713, %v709
    %v1114 = vpack.c.b16 %v718, %v714
    %v1115 = vpack.c.b16 %v719, %v715
    %v1116 = vpack.c.b16 %v720, %v716
    %v1117 = vpack.c.b16 %v721, %v717
    %v1118 = vpack.c.b16 %v726, %v722
    %v1119 = vpack.c.b16 %v727, %v723
    %v1120 = vpack.c.b16 %v728, %v724
    %v1121 = vpack.c.b16 %v729, %v725
    %v1122 = vpack.c.b16 %v734, %v730
    %v1123 = vpack.c.b16 %v735, %v731
    %v1124 = vpack.c.b16 %v736, %v732
    %v1125 = vpack.c.b16 %v737, %v733
    %v1126 = vpack.c.b16 %v742, %v738
    %v1127 = vpack.c.b16 %v743, %v739
    %v1128 = vpack.c.b16 %v744, %v740
    %v1129 = vpack.c.b16 %v745, %v741
    %v1130 = vpack.c.b16 %v750, %v746
    %v1131 = vpack.c.b16 %v751, %v747
    %v1132 = vpack.c.b16 %v752, %v748
    %v1133 = vpack.c.b16 %v753, %v749
    %v1134 = vpack.c.b16 %v758, %v754
    %v1135 = vpack.c.b16 %v759, %v755
    %v1136 = vpack.c.b16 %v760, %v756
    %v1137 = vpack.c.b16 %v761, %v757
    %v1138 = vpack.c.b16 %v766, %v762
    %v1139 = vpack.c.b16 %v767, %v763
    %v1140 = vpack.c.b16 %v768, %v764
    %v1141 = vpack.c.b16 %v769, %v765
    %v1142 = vpack.c.b16 %v774, %v770
    %v1143 = vpack.c.b16 %v775, %v771
    %v1144 = vpack.c.b16 %v776, %v772
    %v1145 = vpack.c.b16 %v777, %v773
    %v1146 = vpack.c.b16 %v782, %v778
    %v1147 = vpack.c.b16 %v783, %v779
    %v1148 = vpack.c.b16 %v784, %v780
    %v1149 = vpack.c.b16 %v785, %v781
    %v1150 = vpack.c.b16 %v790, %v786
    %v1151 = vpack.c.b16 %v791, %v787
    %v1152 = vpack.c.b16 %v792, %v788
    %v1153 = vpack.c.b16 %v793, %v789
    %v1154 = vpack.c.b16 %v798, %v794
    %v1155 = vpack.c.b16 %v799, %v795
    %v1156 = vpack.c.b16 %v800, %v796
    %v1157 = vpack.c.b16 %v801, %v797
    %v1158 = vpack.c.b16 %v806, %v802
    %v1159 = vpack.c.b16 %v807, %v803
    %v1160 = vpack.c.b16 %v808, %v804
    %v1161 = vpack.c.b16 %v809, %v805
    %v1162 = vpack.c.b16 %v814, %v810
    %v1163 = vpack.c.b16 %v815, %v811
    %v1164 = vpack.c.b16 %v816, %v812
    %v1165 = vpack.c.b16 %v817, %v813
    %v1166 = vpack.c.b16 %v822, %v818
    %v1167 = vpack.c.b16 %v823, %v819
    %v1168 = vpack.c.b16 %v824, %v820
    %v1169 = vpack.c.b16 %v825, %v821
    %v1170 = vpack.c.b16 %v830, %v826
    %v1171 = vpack.c.b16 %v831, %v827
    %v1172 = vpack.c.b16 %v832, %v828
    %v1173 = vpack.c.b16 %v833, %v829
    %v1174 = vpack.c.b16 %v838, %v834
    %v1175 = vpack.c.b16 %v839, %v835
    %v1176 = vpack.c.b16 %v840, %v836
    %v1177 = vpack.c.b16 %v841, %v837
    %v1178 = vpack.c.b16 %v846, %v842
    %v1179 = vpack.c.b16 %v847, %v843
    %v1180 = vpack.c.b16 %v848, %v844
    %v1181 = vpack.c.b16 %v849, %v845
    %v1182 = vpack.c.b16 %v854, %v850
    %v1183 = vpack.c.b16 %v855, %v851
    %v1184 = vpack.c.b16 %v856, %v852
    %v1185 = vpack.c.b16 %v857, %v853
    %v1186 = vpack.c.b16 %v862, %v858
    %v1187 = vpack.c.b16 %v863, %v859
    %v1188 = vpack.c.b16 %v864, %v860
    %v1189 = vpack.c.b16 %v865, %v861
    %v1190 = vpack.c.b16 %v870, %v866
    %v1191 = vpack.c.b16 %v871, %v867
    %v1192 = vpack.c.b16 %v872, %v868
    %v1193 = vpack.c.b16 %v873, %v869
    %v1194 = vpack.c.b16 %v878, %v874
    %v1195 = vpack.c.b16 %v879, %v875
    %v1196 = vpack.c.b16 %v880, %v876
    %v1197 = vpack.c.b16 %v881, %v877
    %v1198 = vpack.c.b16 %v886, %v882
    %v1199 = vpack.c.b16 %v887, %v883
    %v1200 = vpack.c.b16 %v888, %v884
    %v1201 = vpack.c.b16 %v889, %v885
    %v1202 = vpack.c.b16 %v894, %v890
    %v1203 = vpack.c.b16 %v895, %v891
    %v1204 = vpack.c.b16 %v896, %v892
    %v1205 = vpack.c.b16 %v897, %v893
    %v1206 = vpack.c.b16 %v902, %v898
    %v1207 = vpack.c.b16 %v903, %v899
    %v1208 = vpack.c.b16 %v904, %v900
    %v1209 = vpack.c.b16 %v905, %v901
    %v1210 = vpack.c.b16 %v910, %v906
    %v1211 = vpack.c.b16 %v911, %v907
    %v1212 = vpack.c.b16 %v912, %v908
    %v1213 = vpack.c.b16 %v913, %v909
    %v1214 = vpack.c.b16 %v918, %v914
    %v1215 = vpack.c.b16 %v919, %v915
    %v1216 = vpack.c.b16 %v920, %v916
    %v1217 = vpack.c.b16 %v921, %v917
    %v1218 = vpack.c.b16 %v926, %v922
    %v1219 = vpack.c.b16 %v927, %v923
    %v1220 = vpack.c.b16 %v928, %v924
    %v1221 = vpack.c.b16 %v929, %v925
    %v1222 = vpack.c.b16 %v934, %v930
    %v1223 = vpack.c.b16 %v935, %v931
    %v1224 = vpack.c.b16 %v936, %v932
    %v1225 = vpack.c.b16 %v937, %v933
    %v1226 = vpack.c.b16 %v942, %v938
    %v1227 = vpack.c.b16 %v943, %v939
    %v1228 = vpack.c.b16 %v944, %v940
    %v1229 = vpack.c.b16 %v945, %v941
    %v1230 = vpack.c.b16 %v950, %v946
    %v1231 = vpack.c.b16 %v951, %v947
    %v1232 = vpack.c.b16 %v952, %v948
    %v1233 = vpack.c.b16 %v953, %v949
    %v1234 = vpack.c.b16 %v958, %v954
    %v1235 = vpack.c.b16 %v959, %v955
    %v1236 = vpack.c.b16 %v960, %v956
    %v1237 = vpack.c.b16 %v961, %v957
    %v1238 = vpack.c.b16 %v966, %v962
    %v1239 = vpack.c.b16 %v967, %v963
    %v1240 = vpack.c.b16 %v968, %v964
    %v1241 = vpack.c.b16 %v969, %v965
    %v1242 = vpack.c.b16 %v974, %v970
    %v1243 = vpack.c.b16 %v975, %v971
    %v1244 = vpack.c.b16 %v976, %v972
    %v1245 = vpack.c.b16 %v977, %v973
    %v1246 = vpack.c.b16 %v982, %v978
    %v1247 = vpack.c.b16 %v983, %v979
    %v1248 = vpack.c.b16 %v984, %v980
    %v1249 = vpack.c.b16 %v985, %v981
    %v1250 = vpack.c.b16 %v990, %v986
    %v1251 = vpack.c.b16 %v991, %v987
    %v1252 = vpack.c.b16 %v992, %v988
    %v1253 = vpack.c.b16 %v993, %v989
    %v1254 = vpack.c.b16 %v998, %v994
    %v1255 = vpack.c.b16 %v999, %v995
    %v1256 = vpack.c.b16 %v1000, %v996
    %v1257 = vpack.c.b16 %v1001, %v997
    %v1258 = vpack.c.b16 %v1006, %v1002
    %v1259 = vpack.c.b16 %v1007, %v1003
    %v1260 = vpack.c.b16 %v1008, %v1004
    %v1261 = vpack.c.b16 %v1009, %v1005
    %v1262 = vpack.c.b16 %v1014, %v1010
    %v1263 = vpack.c.b16 %v1015, %v1011
    %v1264 = vpack.c.b16 %v1016, %v1012
    %v1265 = vpack.c.b16 %v1017, %v1013
    %v1266 = vpack.c.b16 %v1022, %v1018
    %v1267 = vpack.c.b16 %v1023, %v1019
    %v1268 = vpack.c.b16 %v1024, %v1020
    %v1269 = vpack.c.b16 %v1025, %v1021
    %v1270 = vpack.c.b16 %v1030, %v1026
    %v1271 = vpack.c.b16 %v1031, %v1027
    %v1272 = vpack.c.b16 %v1032, %v1028
    %v1273 = vpack.c.b16 %v1033, %v1029
    %v1274 = vpack.c.b16 %v1038, %v1034
    %v1275 = vpack.c.b16 %v1039, %v1035
    %v1276 = vpack.c.b16 %v1040, %v1036
    %v1277 = vpack.c.b16 %v1041, %v1037
    %v1278 = vpack.c.b16 %v1046, %v1042
    %v1279 = vpack.c.b16 %v1047, %v1043
    %v1280 = vpack.c.b16 %v1048, %v1044
    %v1281 = vpack.c.b16 %v1049, %v1045
    %v1282 = vpack.c.b16 %v1054, %v1050
    %v1283 = vpack.c.b16 %v1055, %v1051
    %v1284 = vpack.c.b16 %v1056, %v1052
    %v1285 = vpack.c.b16 %v1057, %v1053
    %v1286 = vpack.c.b16 %v1062, %v1058
    %v1287 = vpack.c.b16 %v1063, %v1059
    %v1288 = vpack.c.b16 %v1064, %v1060
    %v1289 = vpack.c.b16 %v1065, %v1061
    %1514 = vmatpush.bf16.msra.mxu0 %v1094
    %1515 = vmatpush.bf16.msra.mxu0 %v1090
    %1516 = vmatpush.bf16.msra.mxu0 %v1086
    %1517 = vmatpush.bf16.msra.mxu0 %v1082
    %1518 = vmatpush.bf16.msra.mxu0 %v1078
    %1519 = vmatpush.bf16.msra.mxu0 %v1074
    %1520 = vmatpush.bf16.msra.mxu0 %v1070
    %1521 = vmatpush.bf16.msra.mxu0 %v1066
    %1522 = vmatmul.bf16.gmra.mxu0 %v380
    %v1523 = vpop.f32.mrf.mxu0
    %v1524 = vadd.f32 %v350, %v1523
    %v1525 = vpop.f32.mrf.mxu0
    %v1526 = vadd.f32 %v350, %v1525
    %1527 = vdwg.mxu0
    %1528 = vmatpush.bf16.msra.mxu0 %v1126
    %1529 = vmatpush.bf16.msra.mxu0 %v1122
    %1530 = vmatpush.bf16.msra.mxu0 %v1118
    %1531 = vmatpush.bf16.msra.mxu0 %v1114
    %1532 = vmatpush.bf16.msra.mxu0 %v1110
    %1533 = vmatpush.bf16.msra.mxu0 %v1106
    %1534 = vmatpush.bf16.msra.mxu0 %v1102
    %1535 = vmatpush.bf16.msra.mxu0 %v1098
    %1536 = vmatmul.bf16.gmra.mxu0 %v381
    %v1537 = vpop.f32.mrf.mxu0
    %v1538 = vadd.f32 %v1524, %v1537
    %v1539 = vpop.f32.mrf.mxu0
    %v1540 = vadd.f32 %v1526, %v1539
    %1541 = vdwg.mxu0
    %1542 = vmatpush.bf16.msra.mxu0 %v1158
    %1543 = vmatpush.bf16.msra.mxu0 %v1154
    %1544 = vmatpush.bf16.msra.mxu0 %v1150
    %1545 = vmatpush.bf16.msra.mxu0 %v1146
    %1546 = vmatpush.bf16.msra.mxu0 %v1142
    %1547 = vmatpush.bf16.msra.mxu0 %v1138
    %1548 = vmatpush.bf16.msra.mxu0 %v1134
    %1549 = vmatpush.bf16.msra.mxu0 %v1130
    %1550 = vmatmul.bf16.gmra.mxu0 %v382
    %v1551 = vpop.f32.mrf.mxu0
    %v1552 = vadd.f32 %v1538, %v1551
    %v1553 = vpop.f32.mrf.mxu0
    %v1554 = vadd.f32 %v1540, %v1553
    %1555 = vdwg.mxu0
    %1556 = vmatpush.bf16.msra.mxu0 %v1190
    %1557 = vmatpush.bf16.msra.mxu0 %v1186
    %1558 = vmatpush.bf16.msra.mxu0 %v1182
    %1559 = vmatpush.bf16.msra.mxu0 %v1178
    %1560 = vmatpush.bf16.msra.mxu0 %v1174
    %1561 = vmatpush.bf16.msra.mxu0 %v1170
    %1562 = vmatpush.bf16.msra.mxu0 %v1166
    %1563 = vmatpush.bf16.msra.mxu0 %v1162
    %1564 = vmatmul.bf16.gmra.mxu0 %v383
    %v1565 = vpop.f32.mrf.mxu0
    %v1566 = vadd.f32 %v1552, %v1565
    %v1567 = vpop.f32.mrf.mxu0
    %v1568 = vadd.f32 %v1554, %v1567
    %1569 = vdwg.mxu0
    %1570 = vmatpush.bf16.msra.mxu0 %v1222
    %1571 = vmatpush.bf16.msra.mxu0 %v1218
    %1572 = vmatpush.bf16.msra.mxu0 %v1214
    %1573 = vmatpush.bf16.msra.mxu0 %v1210
    %1574 = vmatpush.bf16.msra.mxu0 %v1206
    %1575 = vmatpush.bf16.msra.mxu0 %v1202
    %1576 = vmatpush.bf16.msra.mxu0 %v1198
    %1577 = vmatpush.bf16.msra.mxu0 %v1194
    %1578 = vmatmul.bf16.gmra.mxu0 %v384
    %v1579 = vpop.f32.mrf.mxu0
    %v1580 = vadd.f32 %v1566, %v1579
    %v1581 = vpop.f32.mrf.mxu0
    %v1582 = vadd.f32 %v1568, %v1581
    %1583 = vdwg.mxu0
    %1584 = vmatpush.bf16.msra.mxu0 %v1254
    %1585 = vmatpush.bf16.msra.mxu0 %v1250
    %1586 = vmatpush.bf16.msra.mxu0 %v1246
    %1587 = vmatpush.bf16.msra.mxu0 %v1242
    %1588 = vmatpush.bf16.msra.mxu0 %v1238
    %1589 = vmatpush.bf16.msra.mxu0 %v1234
    %1590 = vmatpush.bf16.msra.mxu0 %v1230
    %1591 = vmatpush.bf16.msra.mxu0 %v1226
    %1592 = vmatmul.bf16.gmra.mxu0 %v385
    %v1593 = vpop.f32.mrf.mxu0
    %v1594 = vadd.f32 %v1580, %v1593
    %v1595 = vpop.f32.mrf.mxu0
    %v1596 = vadd.f32 %v1582, %v1595
    %1597 = vdwg.mxu0
    %1598 = vmatpush.bf16.msra.mxu0 %v1286
    %1599 = vmatpush.bf16.msra.mxu0 %v1282
    %1600 = vmatpush.bf16.msra.mxu0 %v1278
    %1601 = vmatpush.bf16.msra.mxu0 %v1274
    %1602 = vmatpush.bf16.msra.mxu0 %v1270
    %1603 = vmatpush.bf16.msra.mxu0 %v1266
    %1604 = vmatpush.bf16.msra.mxu0 %v1262
    %1605 = vmatpush.bf16.msra.mxu0 %v1258
    %1606 = vmatmul.bf16.gmra.mxu0 %v386
    %v1607 = vpop.f32.mrf.mxu0
    %v1608 = vadd.f32 %v1594, %v1607
    %v1609 = vpop.f32.mrf.mxu0
    %v1610 = vadd.f32 %v1596, %v1609
    %1611 = vdwg.mxu0
    %1612 = vmatpush.bf16.msra.mxu0 %v1095
    %1613 = vmatpush.bf16.msra.mxu0 %v1091
    %1614 = vmatpush.bf16.msra.mxu0 %v1087
    %1615 = vmatpush.bf16.msra.mxu0 %v1083
    %1616 = vmatpush.bf16.msra.mxu0 %v1079
    %1617 = vmatpush.bf16.msra.mxu0 %v1075
    %1618 = vmatpush.bf16.msra.mxu0 %v1071
    %1619 = vmatpush.bf16.msra.mxu0 %v1067
    %1620 = vmatmul.bf16.gmra.mxu0 %v380
    %v1621 = vpop.f32.mrf.mxu0
    %v1622 = vadd.f32 %v351, %v1621
    %v1623 = vpop.f32.mrf.mxu0
    %v1624 = vadd.f32 %v351, %v1623
    %1625 = vdwg.mxu0
    %1626 = vmatpush.bf16.msra.mxu0 %v1127
    %1627 = vmatpush.bf16.msra.mxu0 %v1123
    %1628 = vmatpush.bf16.msra.mxu0 %v1119
    %1629 = vmatpush.bf16.msra.mxu0 %v1115
    %1630 = vmatpush.bf16.msra.mxu0 %v1111
    %1631 = vmatpush.bf16.msra.mxu0 %v1107
    %1632 = vmatpush.bf16.msra.mxu0 %v1103
    %1633 = vmatpush.bf16.msra.mxu0 %v1099
    %1634 = vmatmul.bf16.gmra.mxu0 %v381
    %v1635 = vpop.f32.mrf.mxu0
    %v1636 = vadd.f32 %v1622, %v1635
    %v1637 = vpop.f32.mrf.mxu0
    %v1638 = vadd.f32 %v1624, %v1637
    %1639 = vdwg.mxu0
    %1640 = vmatpush.bf16.msra.mxu0 %v1159
    %1641 = vmatpush.bf16.msra.mxu0 %v1155
    %1642 = vmatpush.bf16.msra.mxu0 %v1151
    %1643 = vmatpush.bf16.msra.mxu0 %v1147
    %1644 = vmatpush.bf16.msra.mxu0 %v1143
    %1645 = vmatpush.bf16.msra.mxu0 %v1139
    %1646 = vmatpush.bf16.msra.mxu0 %v1135
    %1647 = vmatpush.bf16.msra.mxu0 %v1131
    %1648 = vmatmul.bf16.gmra.mxu0 %v382
    %v1649 = vpop.f32.mrf.mxu0
    %v1650 = vadd.f32 %v1636, %v1649
    %v1651 = vpop.f32.mrf.mxu0
    %v1652 = vadd.f32 %v1638, %v1651
    %1653 = vdwg.mxu0
    %1654 = vmatpush.bf16.msra.mxu0 %v1191
    %1655 = vmatpush.bf16.msra.mxu0 %v1187
    %1656 = vmatpush.bf16.msra.mxu0 %v1183
    %1657 = vmatpush.bf16.msra.mxu0 %v1179
    %1658 = vmatpush.bf16.msra.mxu0 %v1175
    %1659 = vmatpush.bf16.msra.mxu0 %v1171
    %1660 = vmatpush.bf16.msra.mxu0 %v1167
    %1661 = vmatpush.bf16.msra.mxu0 %v1163
    %1662 = vmatmul.bf16.gmra.mxu0 %v383
    %v1663 = vpop.f32.mrf.mxu0
    %v1664 = vadd.f32 %v1650, %v1663
    %v1665 = vpop.f32.mrf.mxu0
    %v1666 = vadd.f32 %v1652, %v1665
    %1667 = vdwg.mxu0
    %1668 = vmatpush.bf16.msra.mxu0 %v1223
    %1669 = vmatpush.bf16.msra.mxu0 %v1219
    %1670 = vmatpush.bf16.msra.mxu0 %v1215
    %1671 = vmatpush.bf16.msra.mxu0 %v1211
    %1672 = vmatpush.bf16.msra.mxu0 %v1207
    %1673 = vmatpush.bf16.msra.mxu0 %v1203
    %1674 = vmatpush.bf16.msra.mxu0 %v1199
    %1675 = vmatpush.bf16.msra.mxu0 %v1195
    %1676 = vmatmul.bf16.gmra.mxu0 %v384
    %v1677 = vpop.f32.mrf.mxu0
    %v1678 = vadd.f32 %v1664, %v1677
    %v1679 = vpop.f32.mrf.mxu0
    %v1680 = vadd.f32 %v1666, %v1679
    %1681 = vdwg.mxu0
    %1682 = vmatpush.bf16.msra.mxu0 %v1255
    %1683 = vmatpush.bf16.msra.mxu0 %v1251
    %1684 = vmatpush.bf16.msra.mxu0 %v1247
    %1685 = vmatpush.bf16.msra.mxu0 %v1243
    %1686 = vmatpush.bf16.msra.mxu0 %v1239
    %1687 = vmatpush.bf16.msra.mxu0 %v1235
    %1688 = vmatpush.bf16.msra.mxu0 %v1231
    %1689 = vmatpush.bf16.msra.mxu0 %v1227
    %1690 = vmatmul.bf16.gmra.mxu0 %v385
    %v1691 = vpop.f32.mrf.mxu0
    %v1692 = vadd.f32 %v1678, %v1691
    %v1693 = vpop.f32.mrf.mxu0
    %v1694 = vadd.f32 %v1680, %v1693
    %1695 = vdwg.mxu0
    %1696 = vmatpush.bf16.msra.mxu0 %v1287
    %1697 = vmatpush.bf16.msra.mxu0 %v1283
    %1698 = vmatpush.bf16.msra.mxu0 %v1279
    %1699 = vmatpush.bf16.msra.mxu0 %v1275
    %1700 = vmatpush.bf16.msra.mxu0 %v1271
    %1701 = vmatpush.bf16.msra.mxu0 %v1267
    %1702 = vmatpush.bf16.msra.mxu0 %v1263
    %1703 = vmatpush.bf16.msra.mxu0 %v1259
    %1704 = vmatmul.bf16.gmra.mxu0 %v386
    %v1705 = vpop.f32.mrf.mxu0
    %v1706 = vadd.f32 %v1692, %v1705
    %v1707 = vpop.f32.mrf.mxu0
    %v1708 = vadd.f32 %v1694, %v1707
    %1709 = vdwg.mxu0
    %1710 = vmatpush.bf16.msra.mxu0 %v1096
    %1711 = vmatpush.bf16.msra.mxu0 %v1092
    %1712 = vmatpush.bf16.msra.mxu0 %v1088
    %1713 = vmatpush.bf16.msra.mxu0 %v1084
    %1714 = vmatpush.bf16.msra.mxu0 %v1080
    %1715 = vmatpush.bf16.msra.mxu0 %v1076
    %1716 = vmatpush.bf16.msra.mxu0 %v1072
    %1717 = vmatpush.bf16.msra.mxu0 %v1068
    %1718 = vmatmul.bf16.gmra.mxu0 %v380
    %v1719 = vpop.f32.mrf.mxu0
    %v1720 = vadd.f32 %v352, %v1719
    %v1721 = vpop.f32.mrf.mxu0
    %v1722 = vadd.f32 %v352, %v1721
    %1723 = vdwg.mxu0
    %1724 = vmatpush.bf16.msra.mxu0 %v1128
    %1725 = vmatpush.bf16.msra.mxu0 %v1124
    %1726 = vmatpush.bf16.msra.mxu0 %v1120
    %1727 = vmatpush.bf16.msra.mxu0 %v1116
    %1728 = vmatpush.bf16.msra.mxu0 %v1112
    %1729 = vmatpush.bf16.msra.mxu0 %v1108
    %1730 = vmatpush.bf16.msra.mxu0 %v1104
    %1731 = vmatpush.bf16.msra.mxu0 %v1100
    %1732 = vmatmul.bf16.gmra.mxu0 %v381
    %v1733 = vpop.f32.mrf.mxu0
    %v1734 = vadd.f32 %v1720, %v1733
    %v1735 = vpop.f32.mrf.mxu0
    %v1736 = vadd.f32 %v1722, %v1735
    %1737 = vdwg.mxu0
    %1738 = vmatpush.bf16.msra.mxu0 %v1160
    %1739 = vmatpush.bf16.msra.mxu0 %v1156
    %1740 = vmatpush.bf16.msra.mxu0 %v1152
    %1741 = vmatpush.bf16.msra.mxu0 %v1148
    %1742 = vmatpush.bf16.msra.mxu0 %v1144
    %1743 = vmatpush.bf16.msra.mxu0 %v1140
    %1744 = vmatpush.bf16.msra.mxu0 %v1136
    %1745 = vmatpush.bf16.msra.mxu0 %v1132
    %1746 = vmatmul.bf16.gmra.mxu0 %v382
    %v1747 = vpop.f32.mrf.mxu0
    %v1748 = vadd.f32 %v1734, %v1747
    %v1749 = vpop.f32.mrf.mxu0
    %v1750 = vadd.f32 %v1736, %v1749
    %1751 = vdwg.mxu0
    %1752 = vmatpush.bf16.msra.mxu0 %v1192
    %1753 = vmatpush.bf16.msra.mxu0 %v1188
    %1754 = vmatpush.bf16.msra.mxu0 %v1184
    %1755 = vmatpush.bf16.msra.mxu0 %v1180
    %1756 = vmatpush.bf16.msra.mxu0 %v1176
    %1757 = vmatpush.bf16.msra.mxu0 %v1172
    %1758 = vmatpush.bf16.msra.mxu0 %v1168
    %1759 = vmatpush.bf16.msra.mxu0 %v1164
    %1760 = vmatmul.bf16.gmra.mxu0 %v383
    %v1761 = vpop.f32.mrf.mxu0
    %v1762 = vadd.f32 %v1748, %v1761
    %v1763 = vpop.f32.mrf.mxu0
    %v1764 = vadd.f32 %v1750, %v1763
    %1765 = vdwg.mxu0
    %1766 = vmatpush.bf16.msra.mxu0 %v1224
    %1767 = vmatpush.bf16.msra.mxu0 %v1220
    %1768 = vmatpush.bf16.msra.mxu0 %v1216
    %1769 = vmatpush.bf16.msra.mxu0 %v1212
    %1770 = vmatpush.bf16.msra.mxu0 %v1208
    %1771 = vmatpush.bf16.msra.mxu0 %v1204
    %1772 = vmatpush.bf16.msra.mxu0 %v1200
    %1773 = vmatpush.bf16.msra.mxu0 %v1196
    %1774 = vmatmul.bf16.gmra.mxu0 %v384
    %v1775 = vpop.f32.mrf.mxu0
    %v1776 = vadd.f32 %v1762, %v1775
    %v1777 = vpop.f32.mrf.mxu0
    %v1778 = vadd.f32 %v1764, %v1777
    %1779 = vdwg.mxu0
    %1780 = vmatpush.bf16.msra.mxu0 %v1256
    %1781 = vmatpush.bf16.msra.mxu0 %v1252
    %1782 = vmatpush.bf16.msra.mxu0 %v1248
    %1783 = vmatpush.bf16.msra.mxu0 %v1244
    %1784 = vmatpush.bf16.msra.mxu0 %v1240
    %1785 = vmatpush.bf16.msra.mxu0 %v1236
    %1786 = vmatpush.bf16.msra.mxu0 %v1232
    %1787 = vmatpush.bf16.msra.mxu0 %v1228
    %1788 = vmatmul.bf16.gmra.mxu0 %v385
    %v1789 = vpop.f32.mrf.mxu0
    %v1790 = vadd.f32 %v1776, %v1789
    %v1791 = vpop.f32.mrf.mxu0
    %v1792 = vadd.f32 %v1778, %v1791
    %1793 = vdwg.mxu0
    %1794 = vmatpush.bf16.msra.mxu0 %v1288
    %1795 = vmatpush.bf16.msra.mxu0 %v1284
    %1796 = vmatpush.bf16.msra.mxu0 %v1280
    %1797 = vmatpush.bf16.msra.mxu0 %v1276
    %1798 = vmatpush.bf16.msra.mxu0 %v1272
    %1799 = vmatpush.bf16.msra.mxu0 %v1268
    %1800 = vmatpush.bf16.msra.mxu0 %v1264
    %1801 = vmatpush.bf16.msra.mxu0 %v1260
    %1802 = vmatmul.bf16.gmra.mxu0 %v386
    %v1803 = vpop.f32.mrf.mxu0
    %v1804 = vadd.f32 %v1790, %v1803
    %v1805 = vpop.f32.mrf.mxu0
    %v1806 = vadd.f32 %v1792, %v1805
    %1807 = vdwg.mxu0
    %1808 = vmatpush.bf16.msra.mxu0 %v1097
    %1809 = vmatpush.bf16.msra.mxu0 %v1093
    %1810 = vmatpush.bf16.msra.mxu0 %v1089
    %1811 = vmatpush.bf16.msra.mxu0 %v1085
    %1812 = vmatpush.bf16.msra.mxu0 %v1081
    %1813 = vmatpush.bf16.msra.mxu0 %v1077
    %1814 = vmatpush.bf16.msra.mxu0 %v1073
    %1815 = vmatpush.bf16.msra.mxu0 %v1069
    %1816 = vmatmul.bf16.gmra.mxu0 %v380
    %v1817 = vpop.f32.mrf.mxu0
    %v1818 = vadd.f32 %v353, %v1817
    %v1819 = vpop.f32.mrf.mxu0
    %v1820 = vadd.f32 %v353, %v1819
    %1821 = vdwg.mxu0
    %1822 = vmatpush.bf16.msra.mxu0 %v1129
    %1823 = vmatpush.bf16.msra.mxu0 %v1125
    %1824 = vmatpush.bf16.msra.mxu0 %v1121
    %1825 = vmatpush.bf16.msra.mxu0 %v1117
    %1826 = vmatpush.bf16.msra.mxu0 %v1113
    %1827 = vmatpush.bf16.msra.mxu0 %v1109
    %1828 = vmatpush.bf16.msra.mxu0 %v1105
    %1829 = vmatpush.bf16.msra.mxu0 %v1101
    %1830 = vmatmul.bf16.gmra.mxu0 %v381
    %v1831 = vpop.f32.mrf.mxu0
    %v1832 = vadd.f32 %v1818, %v1831
    %v1833 = vpop.f32.mrf.mxu0
    %v1834 = vadd.f32 %v1820, %v1833
    %1835 = vdwg.mxu0
    %1836 = vmatpush.bf16.msra.mxu0 %v1161
    %1837 = vmatpush.bf16.msra.mxu0 %v1157
    %1838 = vmatpush.bf16.msra.mxu0 %v1153
    %1839 = vmatpush.bf16.msra.mxu0 %v1149
    %1840 = vmatpush.bf16.msra.mxu0 %v1145
    %1841 = vmatpush.bf16.msra.mxu0 %v1141
    %1842 = vmatpush.bf16.msra.mxu0 %v1137
    %1843 = vmatpush.bf16.msra.mxu0 %v1133
    %1844 = vmatmul.bf16.gmra.mxu0 %v382
    %v1845 = vpop.f32.mrf.mxu0
    %v1846 = vadd.f32 %v1832, %v1845
    %v1847 = vpop.f32.mrf.mxu0
    %v1848 = vadd.f32 %v1834, %v1847
    %1849 = vdwg.mxu0
    %1850 = vmatpush.bf16.msra.mxu0 %v1193
    %1851 = vmatpush.bf16.msra.mxu0 %v1189
    %1852 = vmatpush.bf16.msra.mxu0 %v1185
    %1853 = vmatpush.bf16.msra.mxu0 %v1181
    %1854 = vmatpush.bf16.msra.mxu0 %v1177
    %1855 = vmatpush.bf16.msra.mxu0 %v1173
    %1856 = vmatpush.bf16.msra.mxu0 %v1169
    %1857 = vmatpush.bf16.msra.mxu0 %v1165
    %1858 = vmatmul.bf16.gmra.mxu0 %v383
    %v1859 = vpop.f32.mrf.mxu0
    %v1860 = vadd.f32 %v1846, %v1859
    %v1861 = vpop.f32.mrf.mxu0
    %v1862 = vadd.f32 %v1848, %v1861
    %1863 = vdwg.mxu0
    %1864 = vmatpush.bf16.msra.mxu0 %v1225
    %1865 = vmatpush.bf16.msra.mxu0 %v1221
    %1866 = vmatpush.bf16.msra.mxu0 %v1217
    %1867 = vmatpush.bf16.msra.mxu0 %v1213
    %1868 = vmatpush.bf16.msra.mxu0 %v1209
    %1869 = vmatpush.bf16.msra.mxu0 %v1205
    %1870 = vmatpush.bf16.msra.mxu0 %v1201
    %1871 = vmatpush.bf16.msra.mxu0 %v1197
    %1872 = vmatmul.bf16.gmra.mxu0 %v384
    %v1873 = vpop.f32.mrf.mxu0
    %v1874 = vadd.f32 %v1860, %v1873
    %v1875 = vpop.f32.mrf.mxu0
    %v1876 = vadd.f32 %v1862, %v1875
    %1877 = vdwg.mxu0
    %1878 = vmatpush.bf16.msra.mxu0 %v1257
    %1879 = vmatpush.bf16.msra.mxu0 %v1253
    %1880 = vmatpush.bf16.msra.mxu0 %v1249
    %1881 = vmatpush.bf16.msra.mxu0 %v1245
    %1882 = vmatpush.bf16.msra.mxu0 %v1241
    %1883 = vmatpush.bf16.msra.mxu0 %v1237
    %1884 = vmatpush.bf16.msra.mxu0 %v1233
    %1885 = vmatpush.bf16.msra.mxu0 %v1229
    %1886 = vmatmul.bf16.gmra.mxu0 %v385
    %v1887 = vpop.f32.mrf.mxu0
    %v1888 = vadd.f32 %v1874, %v1887
    %v1889 = vpop.f32.mrf.mxu0
    %v1890 = vadd.f32 %v1876, %v1889
    %1891 = vdwg.mxu0
    %1892 = vmatpush.bf16.msra.mxu0 %v1289
    %1893 = vmatpush.bf16.msra.mxu0 %v1285
    %1894 = vmatpush.bf16.msra.mxu0 %v1281
    %1895 = vmatpush.bf16.msra.mxu0 %v1277
    %1896 = vmatpush.bf16.msra.mxu0 %v1273
    %1897 = vmatpush.bf16.msra.mxu0 %v1269
    %1898 = vmatpush.bf16.msra.mxu0 %v1265
    %1899 = vmatpush.bf16.msra.mxu0 %v1261
    %1900 = vmatmul.bf16.gmra.mxu0 %v386
    %v1901 = vpop.f32.mrf.mxu0
    %v1902 = vadd.f32 %v1888, %v1901
    %v1903 = vpop.f32.mrf.mxu0
    %v1904 = vadd.f32 %v1890, %v1903
    %1905 = vdwg.mxu0
    %v1906 = vmax.f32 %v1608, 0.0
    %v1907 = vmax.f32 %v1706, 0.0
    %v1908 = vmax.f32 %v1804, 0.0
    %v1909 = vmax.f32 %v1902, 0.0
    %v1910 = vmax.f32 %v1610, 0.0
    %v1911 = vmax.f32 %v1708, 0.0
    %v1912 = vmax.f32 %v1806, 0.0
    %v1913 = vmax.f32 %v1904, 0.0
    %v1914 = vpack.c.bf16 %v1910, %v1906
    %v1915 = vpack.c.bf16 %v1911, %v1907
    %v1916 = vpack.c.bf16 %v1912, %v1908
    %v1917 = vpack.c.bf16 %v1913, %v1909
    %v1918 = vld [vmem:[#allocation4] sm:$0xff]
    %v1919 = vld [vmem:[#allocation4 + $0x8] sm:$0xff]
    %v1920 = vld [vmem:[#allocation4 + $0x10] sm:$0xff]
    %v1921 = vld [vmem:[#allocation4 + $0x18] sm:$0xff]
    %v1922 = vld [vmem:[#allocation4 + $0x20] sm:$0xff]
    %v1923 = vld [vmem:[#allocation4 + $0x28] sm:$0xff]
    %v1924 = vld [vmem:[#allocation4 + $0x30] sm:$0xff]
    %v1925 = vld [vmem:[#allocation4 + $0x38] sm:$0xff]
    %v1926 = vld [vmem:[#allocation4 + $0x40] sm:$0xff]
    %v1927 = vld [vmem:[#allocation4 + $0x48] sm:$0xff]
    %v1928 = vld [vmem:[#allocation4 + $0x50] sm:$0xff]
    %v1929 = vld [vmem:[#allocation4 + $0x58] sm:$0xff]
    %v1930 = vld [vmem:[#allocation4 + $0x60] sm:$0xff]
    %v1931 = vld [vmem:[#allocation4 + $0x68] sm:$0xff]
    %v1932 = vld [vmem:[#allocation4 + $0x70] sm:$0xff]
    %v1933 = vld [vmem:[#allocation4 + $0x78] sm:$0xff]
    %v1934 = vld [vmem:[#allocation4 + $0x80] sm:$0xff]
    %v1935 = vld [vmem:[#allocation4 + $0x88] sm:$0xff]
    %v1936 = vld [vmem:[#allocation4 + $0x90] sm:$0xff]
    %v1937 = vld [vmem:[#allocation4 + $0x98] sm:$0xff]
    %v1938 = vld [vmem:[#allocation4 + $0xa0] sm:$0xff]
    %v1939 = vld [vmem:[#allocation4 + $0xa8] sm:$0xff]
    %v1940 = vld [vmem:[#allocation4 + $0xb0] sm:$0xff]
    %v1941 = vld [vmem:[#allocation4 + $0xb8] sm:$0xff]
    %v1942 = vld [vmem:[#allocation4 + $0xc0] sm:$0xff]
    %v1943 = vld [vmem:[#allocation4 + $0xc8] sm:$0xff]
    %v1944 = vld [vmem:[#allocation4 + $0xd0] sm:$0xff]
    %v1945 = vld [vmem:[#allocation4 + $0xd8] sm:$0xff]
    %v1946 = vld [vmem:[#allocation4 + $0xe0] sm:$0xff]
    %v1947 = vld [vmem:[#allocation4 + $0xe8] sm:$0xff]
    %v1948 = vld [vmem:[#allocation4 + $0xf0] sm:$0xff]
    %v1949 = vld [vmem:[#allocation4 + $0xf8] sm:$0xff]
    %v1950 = vld [vmem:[#allocation4 + $0x100] sm:$0xff]
    %v1951 = vld [vmem:[#allocation4 + $0x108] sm:$0xff]
    %v1952 = vld [vmem:[#allocation4 + $0x110] sm:$0xff]
    %v1953 = vld [vmem:[#allocation4 + $0x118] sm:$0xff]
    %v1954 = vld [vmem:[#allocation4 + $0x120] sm:$0xff]
    %v1955 = vld [vmem:[#allocation4 + $0x128] sm:$0xff]
    %v1956 = vld [vmem:[#allocation4 + $0x130] sm:$0xff]
    %v1957 = vld [vmem:[#allocation4 + $0x138] sm:$0xff]
    %v1958 = vld [vmem:[#allocation4 + $0x140] sm:$0xff]
    %v1959 = vld [vmem:[#allocation4 + $0x148] sm:$0xff]
    %v1960 = vld [vmem:[#allocation4 + $0x150] sm:$0xff]
    %v1961 = vld [vmem:[#allocation4 + $0x158] sm:$0xff]
    %v1962 = vld [vmem:[#allocation4 + $0x160] sm:$0xff]
    %v1963 = vld [vmem:[#allocation4 + $0x168] sm:$0xff]
    %v1964 = vld [vmem:[#allocation4 + $0x170] sm:$0xff]
    %v1965 = vld [vmem:[#allocation4 + $0x178] sm:$0xff]
    %v1966 = vld [vmem:[#allocation4 + $0x180] sm:$0xff]
    %v1967 = vld [vmem:[#allocation4 + $0x188] sm:$0xff]
    %v1968 = vld [vmem:[#allocation4 + $0x190] sm:$0xff]
    %v1969 = vld [vmem:[#allocation4 + $0x198] sm:$0xff]
    %v1970 = vld [vmem:[#allocation4 + $0x1a0] sm:$0xff]
    %v1971 = vld [vmem:[#allocation4 + $0x1a8] sm:$0xff]
    %v1972 = vld [vmem:[#allocation4 + $0x1b0] sm:$0xff]
    %v1973 = vld [vmem:[#allocation4 + $0x1b8] sm:$0xff]
    %v1974 = vld [vmem:[#allocation4 + $0x1c0] sm:$0xff]
    %v1975 = vld [vmem:[#allocation4 + $0x1c8] sm:$0xff]
    %v1976 = vld [vmem:[#allocation4 + $0x1d0] sm:$0xff]
    %v1977 = vld [vmem:[#allocation4 + $0x1d8] sm:$0xff]
    %v1978 = vld [vmem:[#allocation4 + $0x1e0] sm:$0xff]
    %v1979 = vld [vmem:[#allocation4 + $0x1e8] sm:$0xff]
    %v1980 = vld [vmem:[#allocation4 + $0x1f0] sm:$0xff]
    %v1981 = vld [vmem:[#allocation4 + $0x1f8] sm:$0xff]
    %v1982 = vld [vmem:[#allocation4 + $0x200] sm:$0xff]
    %v1983 = vld [vmem:[#allocation4 + $0x208] sm:$0xff]
    %v1984 = vld [vmem:[#allocation4 + $0x210] sm:$0xff]
    %v1985 = vld [vmem:[#allocation4 + $0x218] sm:$0xff]
    %v1986 = vld [vmem:[#allocation4 + $0x220] sm:$0xff]
    %v1987 = vld [vmem:[#allocation4 + $0x228] sm:$0xff]
    %v1988 = vld [vmem:[#allocation4 + $0x230] sm:$0xff]
    %v1989 = vld [vmem:[#allocation4 + $0x238] sm:$0xff]
    %v1990 = vld [vmem:[#allocation4 + $0x240] sm:$0xff]
    %v1991 = vld [vmem:[#allocation4 + $0x248] sm:$0xff]
    %v1992 = vld [vmem:[#allocation4 + $0x250] sm:$0xff]
    %v1993 = vld [vmem:[#allocation4 + $0x258] sm:$0xff]
    %v1994 = vld [vmem:[#allocation4 + $0x260] sm:$0xff]
    %v1995 = vld [vmem:[#allocation4 + $0x268] sm:$0xff]
    %v1996 = vld [vmem:[#allocation4 + $0x270] sm:$0xff]
    %v1997 = vld [vmem:[#allocation4 + $0x278] sm:$0xff]
    %v1998 = vld [vmem:[#allocation4 + $0x280] sm:$0xff]
    %v1999 = vld [vmem:[#allocation4 + $0x288] sm:$0xff]
    %v2000 = vld [vmem:[#allocation4 + $0x290] sm:$0xff]
    %v2001 = vld [vmem:[#allocation4 + $0x298] sm:$0xff]
    %v2002 = vld [vmem:[#allocation4 + $0x2a0] sm:$0xff]
    %v2003 = vld [vmem:[#allocation4 + $0x2a8] sm:$0xff]
    %v2004 = vld [vmem:[#allocation4 + $0x2b0] sm:$0xff]
    %v2005 = vld [vmem:[#allocation4 + $0x2b8] sm:$0xff]
    %v2006 = vld [vmem:[#allocation4 + $0x2c0] sm:$0xff]
    %v2007 = vld [vmem:[#allocation4 + $0x2c8] sm:$0xff]
    %v2008 = vld [vmem:[#allocation4 + $0x2d0] sm:$0xff]
    %v2009 = vld [vmem:[#allocation4 + $0x2d8] sm:$0xff]
    %v2010 = vld [vmem:[#allocation4 + $0x2e0] sm:$0xff]
    %v2011 = vld [vmem:[#allocation4 + $0x2e8] sm:$0xff]
    %v2012 = vld [vmem:[#allocation4 + $0x2f0] sm:$0xff]
    %v2013 = vld [vmem:[#allocation4 + $0x2f8] sm:$0xff]
    %v2014 = vld [vmem:[#allocation4 + $0x300] sm:$0xff]
    %v2015 = vld [vmem:[#allocation4 + $0x308] sm:$0xff]
    %v2016 = vld [vmem:[#allocation4 + $0x310] sm:$0xff]
    %v2017 = vld [vmem:[#allocation4 + $0x318] sm:$0xff]
    %v2018 = vld [vmem:[#allocation4 + $0x320] sm:$0xff]
    %v2019 = vld [vmem:[#allocation4 + $0x328] sm:$0xff]
    %v2020 = vld [vmem:[#allocation4 + $0x330] sm:$0xff]
    %v2021 = vld [vmem:[#allocation4 + $0x338] sm:$0xff]
    %v2022 = vld [vmem:[#allocation4 + $0x340] sm:$0xff]
    %v2023 = vld [vmem:[#allocation4 + $0x348] sm:$0xff]
    %v2024 = vld [vmem:[#allocation4 + $0x350] sm:$0xff]
    %v2025 = vld [vmem:[#allocation4 + $0x358] sm:$0xff]
    %v2026 = vld [vmem:[#allocation4 + $0x360] sm:$0xff]
    %v2027 = vld [vmem:[#allocation4 + $0x368] sm:$0xff]
    %v2028 = vld [vmem:[#allocation4 + $0x370] sm:$0xff]
    %v2029 = vld [vmem:[#allocation4 + $0x378] sm:$0xff]
    %v2030 = vld [vmem:[#allocation4 + $0x380] sm:$0xff]
    %v2031 = vld [vmem:[#allocation4 + $0x388] sm:$0xff]
    %v2032 = vld [vmem:[#allocation4 + $0x390] sm:$0xff]
    %v2033 = vld [vmem:[#allocation4 + $0x398] sm:$0xff]
    %v2034 = vld [vmem:[#allocation4 + $0x3a0] sm:$0xff]
    %v2035 = vld [vmem:[#allocation4 + $0x3a8] sm:$0xff]
    %v2036 = vld [vmem:[#allocation4 + $0x3b0] sm:$0xff]
    %v2037 = vld [vmem:[#allocation4 + $0x3b8] sm:$0xff]
    %v2038 = vld [vmem:[#allocation4 + $0x3c0] sm:$0xff]
    %v2039 = vld [vmem:[#allocation4 + $0x3c8] sm:$0xff]
    %v2040 = vld [vmem:[#allocation4 + $0x3d0] sm:$0xff]
    %v2041 = vld [vmem:[#allocation4 + $0x3d8] sm:$0xff]
    %v2042 = vld [vmem:[#allocation4 + $0x3e0] sm:$0xff]
    %v2043 = vld [vmem:[#allocation4 + $0x3e8] sm:$0xff]
    %v2044 = vld [vmem:[#allocation4 + $0x3f0] sm:$0xff]
    %v2045 = vld [vmem:[#allocation4 + $0x3f8] sm:$0xff]
    %v2046 = vld [vmem:[%s4] sm:$0xf]
    %v2048 = vperm.slane %v2046, 0
    %v2049 = vperm.slane %v2046, 1
    %v2050 = vperm.slane %v2046, 2
    %v2051 = vperm.slane %v2046, 3
    %v2184 = vunpack.c.l.b16 %v1918
    %v2185 = vunpack.c.h.b16 %v1918
    %v2186 = vunpack.c.l.b16 %v1919
    %v2187 = vunpack.c.h.b16 %v1919
    %v2188 = vunpack.c.l.b16 %v1920
    %v2189 = vunpack.c.h.b16 %v1920
    %v2190 = vunpack.c.l.b16 %v1921
    %v2191 = vunpack.c.h.b16 %v1921
    %v2192 = vunpack.c.l.b16 %v1922
    %v2193 = vunpack.c.h.b16 %v1922
    %v2194 = vunpack.c.l.b16 %v1923
    %v2195 = vunpack.c.h.b16 %v1923
    %v2196 = vunpack.c.l.b16 %v1924
    %v2197 = vunpack.c.h.b16 %v1924
    %v2198 = vunpack.c.l.b16 %v1925
    %v2199 = vunpack.c.h.b16 %v1925
    %v2200 = vunpack.c.l.b16 %v1926
    %v2201 = vunpack.c.h.b16 %v1926
    %v2202 = vunpack.c.l.b16 %v1927
    %v2203 = vunpack.c.h.b16 %v1927
    %v2204 = vunpack.c.l.b16 %v1928
    %v2205 = vunpack.c.h.b16 %v1928
    %v2206 = vunpack.c.l.b16 %v1929
    %v2207 = vunpack.c.h.b16 %v1929
    %v2208 = vunpack.c.l.b16 %v1930
    %v2209 = vunpack.c.h.b16 %v1930
    %v2210 = vunpack.c.l.b16 %v1931
    %v2211 = vunpack.c.h.b16 %v1931
    %v2212 = vunpack.c.l.b16 %v1932
    %v2213 = vunpack.c.h.b16 %v1932
    %v2214 = vunpack.c.l.b16 %v1933
    %v2215 = vunpack.c.h.b16 %v1933
    %v2216 = vunpack.c.l.b16 %v1934
    %v2217 = vunpack.c.h.b16 %v1934
    %v2218 = vunpack.c.l.b16 %v1935
    %v2219 = vunpack.c.h.b16 %v1935
    %v2220 = vunpack.c.l.b16 %v1936
    %v2221 = vunpack.c.h.b16 %v1936
    %v2222 = vunpack.c.l.b16 %v1937
    %v2223 = vunpack.c.h.b16 %v1937
    %v2224 = vunpack.c.l.b16 %v1938
    %v2225 = vunpack.c.h.b16 %v1938
    %v2226 = vunpack.c.l.b16 %v1939
    %v2227 = vunpack.c.h.b16 %v1939
    %v2228 = vunpack.c.l.b16 %v1940
    %v2229 = vunpack.c.h.b16 %v1940
    %v2230 = vunpack.c.l.b16 %v1941
    %v2231 = vunpack.c.h.b16 %v1941
    %v2232 = vunpack.c.l.b16 %v1942
    %v2233 = vunpack.c.h.b16 %v1942
    %v2234 = vunpack.c.l.b16 %v1943
    %v2235 = vunpack.c.h.b16 %v1943
    %v2236 = vunpack.c.l.b16 %v1944
    %v2237 = vunpack.c.h.b16 %v1944
    %v2238 = vunpack.c.l.b16 %v1945
    %v2239 = vunpack.c.h.b16 %v1945
    %v2240 = vunpack.c.l.b16 %v1946
    %v2241 = vunpack.c.h.b16 %v1946
    %v2242 = vunpack.c.l.b16 %v1947
    %v2243 = vunpack.c.h.b16 %v1947
    %v2244 = vunpack.c.l.b16 %v1948
    %v2245 = vunpack.c.h.b16 %v1948
    %v2246 = vunpack.c.l.b16 %v1949
    %v2247 = vunpack.c.h.b16 %v1949
    %v2248 = vunpack.c.l.b16 %v1950
    %v2249 = vunpack.c.h.b16 %v1950
    %v2250 = vunpack.c.l.b16 %v1951
    %v2251 = vunpack.c.h.b16 %v1951
    %v2252 = vunpack.c.l.b16 %v1952
    %v2253 = vunpack.c.h.b16 %v1952
    %v2254 = vunpack.c.l.b16 %v1953
    %v2255 = vunpack.c.h.b16 %v1953
    %v2256 = vunpack.c.l.b16 %v1954
    %v2257 = vunpack.c.h.b16 %v1954
    %v2258 = vunpack.c.l.b16 %v1955
    %v2259 = vunpack.c.h.b16 %v1955
    %v2260 = vunpack.c.l.b16 %v1956
    %v2261 = vunpack.c.h.b16 %v1956
    %v2262 = vunpack.c.l.b16 %v1957
    %v2263 = vunpack.c.h.b16 %v1957
    %v2264 = vunpack.c.l.b16 %v1958
    %v2265 = vunpack.c.h.b16 %v1958
    %v2266 = vunpack.c.l.b16 %v1959
    %v2267 = vunpack.c.h.b16 %v1959
    %v2268 = vunpack.c.l.b16 %v1960
    %v2269 = vunpack.c.h.b16 %v1960
    %v2270 = vunpack.c.l.b16 %v1961
    %v2271 = vunpack.c.h.b16 %v1961
    %v2272 = vunpack.c.l.b16 %v1962
    %v2273 = vunpack.c.h.b16 %v1962
    %v2274 = vunpack.c.l.b16 %v1963
    %v2275 = vunpack.c.h.b16 %v1963
    %v2276 = vunpack.c.l.b16 %v1964
    %v2277 = vunpack.c.h.b16 %v1964
    %v2278 = vunpack.c.l.b16 %v1965
    %v2279 = vunpack.c.h.b16 %v1965
    %v2280 = vunpack.c.l.b16 %v1966
    %v2281 = vunpack.c.h.b16 %v1966
    %v2282 = vunpack.c.l.b16 %v1967
    %v2283 = vunpack.c.h.b16 %v1967
    %v2284 = vunpack.c.l.b16 %v1968
    %v2285 = vunpack.c.h.b16 %v1968
    %v2286 = vunpack.c.l.b16 %v1969
    %v2287 = vunpack.c.h.b16 %v1969
    %v2288 = vunpack.c.l.b16 %v1970
    %v2289 = vunpack.c.h.b16 %v1970
    %v2290 = vunpack.c.l.b16 %v1971
    %v2291 = vunpack.c.h.b16 %v1971
    %v2292 = vunpack.c.l.b16 %v1972
    %v2293 = vunpack.c.h.b16 %v1972
    %v2294 = vunpack.c.l.b16 %v1973
    %v2295 = vunpack.c.h.b16 %v1973
    %v2296 = vunpack.c.l.b16 %v1974
    %v2297 = vunpack.c.h.b16 %v1974
    %v2298 = vunpack.c.l.b16 %v1975
    %v2299 = vunpack.c.h.b16 %v1975
    %v2300 = vunpack.c.l.b16 %v1976
    %v2301 = vunpack.c.h.b16 %v1976
    %v2302 = vunpack.c.l.b16 %v1977
    %v2303 = vunpack.c.h.b16 %v1977
    %v2304 = vunpack.c.l.b16 %v1978
    %v2305 = vunpack.c.h.b16 %v1978
    %v2306 = vunpack.c.l.b16 %v1979
    %v2307 = vunpack.c.h.b16 %v1979
    %v2308 = vunpack.c.l.b16 %v1980
    %v2309 = vunpack.c.h.b16 %v1980
    %v2310 = vunpack.c.l.b16 %v1981
    %v2311 = vunpack.c.h.b16 %v1981
    %v2312 = vunpack.c.l.b16 %v1982
    %v2313 = vunpack.c.h.b16 %v1982
    %v2314 = vunpack.c.l.b16 %v1983
    %v2315 = vunpack.c.h.b16 %v1983
    %v2316 = vunpack.c.l.b16 %v1984
    %v2317 = vunpack.c.h.b16 %v1984
    %v2318 = vunpack.c.l.b16 %v1985
    %v2319 = vunpack.c.h.b16 %v1985
    %v2320 = vunpack.c.l.b16 %v1986
    %v2321 = vunpack.c.h.b16 %v1986
    %v2322 = vunpack.c.l.b16 %v1987
    %v2323 = vunpack.c.h.b16 %v1987
    %v2324 = vunpack.c.l.b16 %v1988
    %v2325 = vunpack.c.h.b16 %v1988
    %v2326 = vunpack.c.l.b16 %v1989
    %v2327 = vunpack.c.h.b16 %v1989
    %v2328 = vunpack.c.l.b16 %v1990
    %v2329 = vunpack.c.h.b16 %v1990
    %v2330 = vunpack.c.l.b16 %v1991
    %v2331 = vunpack.c.h.b16 %v1991
    %v2332 = vunpack.c.l.b16 %v1992
    %v2333 = vunpack.c.h.b16 %v1992
    %v2334 = vunpack.c.l.b16 %v1993
    %v2335 = vunpack.c.h.b16 %v1993
    %v2336 = vunpack.c.l.b16 %v1994
    %v2337 = vunpack.c.h.b16 %v1994
    %v2338 = vunpack.c.l.b16 %v1995
    %v2339 = vunpack.c.h.b16 %v1995
    %v2340 = vunpack.c.l.b16 %v1996
    %v2341 = vunpack.c.h.b16 %v1996
    %v2342 = vunpack.c.l.b16 %v1997
    %v2343 = vunpack.c.h.b16 %v1997
    %v2344 = vunpack.c.l.b16 %v1998
    %v2345 = vunpack.c.h.b16 %v1998
    %v2346 = vunpack.c.l.b16 %v1999
    %v2347 = vunpack.c.h.b16 %v1999
    %v2348 = vunpack.c.l.b16 %v2000
    %v2349 = vunpack.c.h.b16 %v2000
    %v2350 = vunpack.c.l.b16 %v2001
    %v2351 = vunpack.c.h.b16 %v2001
    %v2352 = vunpack.c.l.b16 %v2002
    %v2353 = vunpack.c.h.b16 %v2002
    %v2354 = vunpack.c.l.b16 %v2003
    %v2355 = vunpack.c.h.b16 %v2003
    %v2356 = vunpack.c.l.b16 %v2004
    %v2357 = vunpack.c.h.b16 %v2004
    %v2358 = vunpack.c.l.b16 %v2005
    %v2359 = vunpack.c.h.b16 %v2005
    %v2360 = vunpack.c.l.b16 %v2006
    %v2361 = vunpack.c.h.b16 %v2006
    %v2362 = vunpack.c.l.b16 %v2007
    %v2363 = vunpack.c.h.b16 %v2007
    %v2364 = vunpack.c.l.b16 %v2008
    %v2365 = vunpack.c.h.b16 %v2008
    %v2366 = vunpack.c.l.b16 %v2009
    %v2367 = vunpack.c.h.b16 %v2009
    %v2368 = vunpack.c.l.b16 %v2010
    %v2369 = vunpack.c.h.b16 %v2010
    %v2370 = vunpack.c.l.b16 %v2011
    %v2371 = vunpack.c.h.b16 %v2011
    %v2372 = vunpack.c.l.b16 %v2012
    %v2373 = vunpack.c.h.b16 %v2012
    %v2374 = vunpack.c.l.b16 %v2013
    %v2375 = vunpack.c.h.b16 %v2013
    %v2376 = vunpack.c.l.b16 %v2014
    %v2377 = vunpack.c.h.b16 %v2014
    %v2378 = vunpack.c.l.b16 %v2015
    %v2379 = vunpack.c.h.b16 %v2015
    %v2380 = vunpack.c.l.b16 %v2016
    %v2381 = vunpack.c.h.b16 %v2016
    %v2382 = vunpack.c.l.b16 %v2017
    %v2383 = vunpack.c.h.b16 %v2017
    %v2384 = vunpack.c.l.b16 %v2018
    %v2385 = vunpack.c.h.b16 %v2018
    %v2386 = vunpack.c.l.b16 %v2019
    %v2387 = vunpack.c.h.b16 %v2019
    %v2388 = vunpack.c.l.b16 %v2020
    %v2389 = vunpack.c.h.b16 %v2020
    %v2390 = vunpack.c.l.b16 %v2021
    %v2391 = vunpack.c.h.b16 %v2021
    %v2392 = vunpack.c.l.b16 %v2022
    %v2393 = vunpack.c.h.b16 %v2022
    %v2394 = vunpack.c.l.b16 %v2023
    %v2395 = vunpack.c.h.b16 %v2023
    %v2396 = vunpack.c.l.b16 %v2024
    %v2397 = vunpack.c.h.b16 %v2024
    %v2398 = vunpack.c.l.b16 %v2025
    %v2399 = vunpack.c.h.b16 %v2025
    %v2400 = vunpack.c.l.b16 %v2026
    %v2401 = vunpack.c.h.b16 %v2026
    %v2402 = vunpack.c.l.b16 %v2027
    %v2403 = vunpack.c.h.b16 %v2027
    %v2404 = vunpack.c.l.b16 %v2028
    %v2405 = vunpack.c.h.b16 %v2028
    %v2406 = vunpack.c.l.b16 %v2029
    %v2407 = vunpack.c.h.b16 %v2029
    %v2408 = vunpack.c.l.b16 %v2030
    %v2409 = vunpack.c.h.b16 %v2030
    %v2410 = vunpack.c.l.b16 %v2031
    %v2411 = vunpack.c.h.b16 %v2031
    %v2412 = vunpack.c.l.b16 %v2032
    %v2413 = vunpack.c.h.b16 %v2032
    %v2414 = vunpack.c.l.b16 %v2033
    %v2415 = vunpack.c.h.b16 %v2033
    %v2416 = vunpack.c.l.b16 %v2034
    %v2417 = vunpack.c.h.b16 %v2034
    %v2418 = vunpack.c.l.b16 %v2035
    %v2419 = vunpack.c.h.b16 %v2035
    %v2420 = vunpack.c.l.b16 %v2036
    %v2421 = vunpack.c.h.b16 %v2036
    %v2422 = vunpack.c.l.b16 %v2037
    %v2423 = vunpack.c.h.b16 %v2037
    %v2424 = vunpack.c.l.b16 %v2038
    %v2425 = vunpack.c.h.b16 %v2038
    %v2426 = vunpack.c.l.b16 %v2039
    %v2427 = vunpack.c.h.b16 %v2039
    %v2428 = vunpack.c.l.b16 %v2040
    %v2429 = vunpack.c.h.b16 %v2040
    %v2430 = vunpack.c.l.b16 %v2041
    %v2431 = vunpack.c.h.b16 %v2041
    %v2432 = vunpack.c.l.b16 %v2042
    %v2433 = vunpack.c.h.b16 %v2042
    %v2434 = vunpack.c.l.b16 %v2043
    %v2435 = vunpack.c.h.b16 %v2043
    %v2436 = vunpack.c.l.b16 %v2044
    %v2437 = vunpack.c.h.b16 %v2044
    %v2438 = vunpack.c.l.b16 %v2045
    %v2439 = vunpack.c.h.b16 %v2045
    %v2440 = vpack.c.b16 %v2188, %v2184
    %v2441 = vpack.c.b16 %v2189, %v2185
    %v2442 = vpack.c.b16 %v2190, %v2186
    %v2443 = vpack.c.b16 %v2191, %v2187
    %v2444 = vpack.c.b16 %v2196, %v2192
    %v2445 = vpack.c.b16 %v2197, %v2193
    %v2446 = vpack.c.b16 %v2198, %v2194
    %v2447 = vpack.c.b16 %v2199, %v2195
    %v2448 = vpack.c.b16 %v2204, %v2200
    %v2449 = vpack.c.b16 %v2205, %v2201
    %v2450 = vpack.c.b16 %v2206, %v2202
    %v2451 = vpack.c.b16 %v2207, %v2203
    %v2452 = vpack.c.b16 %v2212, %v2208
    %v2453 = vpack.c.b16 %v2213, %v2209
    %v2454 = vpack.c.b16 %v2214, %v2210
    %v2455 = vpack.c.b16 %v2215, %v2211
    %v2456 = vpack.c.b16 %v2220, %v2216
    %v2457 = vpack.c.b16 %v2221, %v2217
    %v2458 = vpack.c.b16 %v2222, %v2218
    %v2459 = vpack.c.b16 %v2223, %v2219
    %v2460 = vpack.c.b16 %v2228, %v2224
    %v2461 = vpack.c.b16 %v2229, %v2225
    %v2462 = vpack.c.b16 %v2230, %v2226
    %v2463 = vpack.c.b16 %v2231, %v2227
    %v2464 = vpack.c.b16 %v2236, %v2232
    %v2465 = vpack.c.b16 %v2237, %v2233
    %v2466 = vpack.c.b16 %v2238, %v2234
    %v2467 = vpack.c.b16 %v2239, %v2235
    %v2468 = vpack.c.b16 %v2244, %v2240
    %v2469 = vpack.c.b16 %v2245, %v2241
    %v2470 = vpack.c.b16 %v2246, %v2242
    %v2471 = vpack.c.b16 %v2247, %v2243
    %v2472 = vpack.c.b16 %v2252, %v2248
    %v2473 = vpack.c.b16 %v2253, %v2249
    %v2474 = vpack.c.b16 %v2254, %v2250
    %v2475 = vpack.c.b16 %v2255, %v2251
    %v2476 = vpack.c.b16 %v2260, %v2256
    %v2477 = vpack.c.b16 %v2261, %v2257
    %v2478 = vpack.c.b16 %v2262, %v2258
    %v2479 = vpack.c.b16 %v2263, %v2259
    %v2480 = vpack.c.b16 %v2268, %v2264
    %v2481 = vpack.c.b16 %v2269, %v2265
    %v2482 = vpack.c.b16 %v2270, %v2266
    %v2483 = vpack.c.b16 %v2271, %v2267
    %v2484 = vpack.c.b16 %v2276, %v2272
    %v2485 = vpack.c.b16 %v2277, %v2273
    %v2486 = vpack.c.b16 %v2278, %v2274
    %v2487 = vpack.c.b16 %v2279, %v2275
    %v2488 = vpack.c.b16 %v2284, %v2280
    %v2489 = vpack.c.b16 %v2285, %v2281
    %v2490 = vpack.c.b16 %v2286, %v2282
    %v2491 = vpack.c.b16 %v2287, %v2283
    %v2492 = vpack.c.b16 %v2292, %v2288
    %v2493 = vpack.c.b16 %v2293, %v2289
    %v2494 = vpack.c.b16 %v2294, %v2290
    %v2495 = vpack.c.b16 %v2295, %v2291
    %v2496 = vpack.c.b16 %v2300, %v2296
    %v2497 = vpack.c.b16 %v2301, %v2297
    %v2498 = vpack.c.b16 %v2302, %v2298
    %v2499 = vpack.c.b16 %v2303, %v2299
    %v2500 = vpack.c.b16 %v2308, %v2304
    %v2501 = vpack.c.b16 %v2309, %v2305
    %v2502 = vpack.c.b16 %v2310, %v2306
    %v2503 = vpack.c.b16 %v2311, %v2307
    %v2504 = vpack.c.b16 %v2316, %v2312
    %v2505 = vpack.c.b16 %v2317, %v2313
    %v2506 = vpack.c.b16 %v2318, %v2314
    %v2507 = vpack.c.b16 %v2319, %v2315
    %v2508 = vpack.c.b16 %v2324, %v2320
    %v2509 = vpack.c.b16 %v2325, %v2321
    %v2510 = vpack.c.b16 %v2326, %v2322
    %v2511 = vpack.c.b16 %v2327, %v2323
    %v2512 = vpack.c.b16 %v2332, %v2328
    %v2513 = vpack.c.b16 %v2333, %v2329
    %v2514 = vpack.c.b16 %v2334, %v2330
    %v2515 = vpack.c.b16 %v2335, %v2331
    %v2516 = vpack.c.b16 %v2340, %v2336
    %v2517 = vpack.c.b16 %v2341, %v2337
    %v2518 = vpack.c.b16 %v2342, %v2338
    %v2519 = vpack.c.b16 %v2343, %v2339
    %v2520 = vpack.c.b16 %v2348, %v2344
    %v2521 = vpack.c.b16 %v2349, %v2345
    %v2522 = vpack.c.b16 %v2350, %v2346
    %v2523 = vpack.c.b16 %v2351, %v2347
    %v2524 = vpack.c.b16 %v2356, %v2352
    %v2525 = vpack.c.b16 %v2357, %v2353
    %v2526 = vpack.c.b16 %v2358, %v2354
    %v2527 = vpack.c.b16 %v2359, %v2355
    %v2528 = vpack.c.b16 %v2364, %v2360
    %v2529 = vpack.c.b16 %v2365, %v2361
    %v2530 = vpack.c.b16 %v2366, %v2362
    %v2531 = vpack.c.b16 %v2367, %v2363
    %v2532 = vpack.c.b16 %v2372, %v2368
    %v2533 = vpack.c.b16 %v2373, %v2369
    %v2534 = vpack.c.b16 %v2374, %v2370
    %v2535 = vpack.c.b16 %v2375, %v2371
    %v2536 = vpack.c.b16 %v2380, %v2376
    %v2537 = vpack.c.b16 %v2381, %v2377
    %v2538 = vpack.c.b16 %v2382, %v2378
    %v2539 = vpack.c.b16 %v2383, %v2379
    %v2540 = vpack.c.b16 %v2388, %v2384
    %v2541 = vpack.c.b16 %v2389, %v2385
    %v2542 = vpack.c.b16 %v2390, %v2386
    %v2543 = vpack.c.b16 %v2391, %v2387
    %v2544 = vpack.c.b16 %v2396, %v2392
    %v2545 = vpack.c.b16 %v2397, %v2393
    %v2546 = vpack.c.b16 %v2398, %v2394
    %v2547 = vpack.c.b16 %v2399, %v2395
    %v2548 = vpack.c.b16 %v2404, %v2400
    %v2549 = vpack.c.b16 %v2405, %v2401
    %v2550 = vpack.c.b16 %v2406, %v2402
    %v2551 = vpack.c.b16 %v2407, %v2403
    %v2552 = vpack.c.b16 %v2412, %v2408
    %v2553 = vpack.c.b16 %v2413, %v2409
    %v2554 = vpack.c.b16 %v2414, %v2410
    %v2555 = vpack.c.b16 %v2415, %v2411
    %v2556 = vpack.c.b16 %v2420, %v2416
    %v2557 = vpack.c.b16 %v2421, %v2417
    %v2558 = vpack.c.b16 %v2422, %v2418
    %v2559 = vpack.c.b16 %v2423, %v2419
    %v2560 = vpack.c.b16 %v2428, %v2424
    %v2561 = vpack.c.b16 %v2429, %v2425
    %v2562 = vpack.c.b16 %v2430, %v2426
    %v2563 = vpack.c.b16 %v2431, %v2427
    %v2564 = vpack.c.b16 %v2436, %v2432
    %v2565 = vpack.c.b16 %v2437, %v2433
    %v2566 = vpack.c.b16 %v2438, %v2434
    %v2567 = vpack.c.b16 %v2439, %v2435
    %2696 = vmatpush.bf16.msra.mxu0 %v2468
    %2697 = vmatpush.bf16.msra.mxu0 %v2464
    %2698 = vmatpush.bf16.msra.mxu0 %v2460
    %2699 = vmatpush.bf16.msra.mxu0 %v2456
    %2700 = vmatpush.bf16.msra.mxu0 %v2452
    %2701 = vmatpush.bf16.msra.mxu0 %v2448
    %2702 = vmatpush.bf16.msra.mxu0 %v2444
    %2703 = vmatpush.bf16.msra.mxu0 %v2440
    %2704 = vmatmul.bf16.gmra.mxu0 %v1914
    %v2705 = vpop.f32.mrf.mxu0
    %v2706 = vadd.f32 %v2048, %v2705
    %v2707 = vpop.f32.mrf.mxu0
    %v2708 = vadd.f32 %v2048, %v2707
    %2709 = vdwg.mxu0
    %2710 = vmatpush.bf16.msra.mxu0 %v2500
    %2711 = vmatpush.bf16.msra.mxu0 %v2496
    %2712 = vmatpush.bf16.msra.mxu0 %v2492
    %2713 = vmatpush.bf16.msra.mxu0 %v2488
    %2714 = vmatpush.bf16.msra.mxu0 %v2484
    %2715 = vmatpush.bf16.msra.mxu0 %v2480
    %2716 = vmatpush.bf16.msra.mxu0 %v2476
    %2717 = vmatpush.bf16.msra.mxu0 %v2472
    %2718 = vmatmul.bf16.gmra.mxu0 %v1915
    %v2719 = vpop.f32.mrf.mxu0
    %v2720 = vadd.f32 %v2706, %v2719
    %v2721 = vpop.f32.mrf.mxu0
    %v2722 = vadd.f32 %v2708, %v2721
    %2723 = vdwg.mxu0
    %2724 = vmatpush.bf16.msra.mxu0 %v2532
    %2725 = vmatpush.bf16.msra.mxu0 %v2528
    %2726 = vmatpush.bf16.msra.mxu0 %v2524
    %2727 = vmatpush.bf16.msra.mxu0 %v2520
    %2728 = vmatpush.bf16.msra.mxu0 %v2516
    %2729 = vmatpush.bf16.msra.mxu0 %v2512
    %2730 = vmatpush.bf16.msra.mxu0 %v2508
    %2731 = vmatpush.bf16.msra.mxu0 %v2504
    %2732 = vmatmul.bf16.gmra.mxu0 %v1916
    %v2733 = vpop.f32.mrf.mxu0
    %v2734 = vadd.f32 %v2720, %v2733
    %v2735 = vpop.f32.mrf.mxu0
    %v2736 = vadd.f32 %v2722, %v2735
    %2737 = vdwg.mxu0
    %2738 = vmatpush.bf16.msra.mxu0 %v2564
    %2739 = vmatpush.bf16.msra.mxu0 %v2560
    %2740 = vmatpush.bf16.msra.mxu0 %v2556
    %2741 = vmatpush.bf16.msra.mxu0 %v2552
    %2742 = vmatpush.bf16.msra.mxu0 %v2548
    %2743 = vmatpush.bf16.msra.mxu0 %v2544
    %2744 = vmatpush.bf16.msra.mxu0 %v2540
    %2745 = vmatpush.bf16.msra.mxu0 %v2536
    %2746 = vmatmul.bf16.gmra.mxu0 %v1917
    %v2747 = vpop.f32.mrf.mxu0
    %v2748 = vadd.f32 %v2734, %v2747
    %v2749 = vpop.f32.mrf.mxu0
    %v2750 = vadd.f32 %v2736, %v2749
    %2751 = vdwg.mxu0
    %2752 = vmatpush.bf16.msra.mxu0 %v2469
    %2753 = vmatpush.bf16.msra.mxu0 %v2465
    %2754 = vmatpush.bf16.msra.mxu0 %v2461
    %2755 = vmatpush.bf16.msra.mxu0 %v2457
    %2756 = vmatpush.bf16.msra.mxu0 %v2453
    %2757 = vmatpush.bf16.msra.mxu0 %v2449
    %2758 = vmatpush.bf16.msra.mxu0 %v2445
    %2759 = vmatpush.bf16.msra.mxu0 %v2441
    %2760 = vmatmul.bf16.gmra.mxu0 %v1914
    %v2761 = vpop.f32.mrf.mxu0
    %v2762 = vadd.f32 %v2049, %v2761
    %v2763 = vpop.f32.mrf.mxu0
    %v2764 = vadd.f32 %v2049, %v2763
    %2765 = vdwg.mxu0
    %2766 = vmatpush.bf16.msra.mxu0 %v2501
    %2767 = vmatpush.bf16.msra.mxu0 %v2497
    %2768 = vmatpush.bf16.msra.mxu0 %v2493
    %2769 = vmatpush.bf16.msra.mxu0 %v2489
    %2770 = vmatpush.bf16.msra.mxu0 %v2485
    %2771 = vmatpush.bf16.msra.mxu0 %v2481
    %2772 = vmatpush.bf16.msra.mxu0 %v2477
    %2773 = vmatpush.bf16.msra.mxu0 %v2473
    %2774 = vmatmul.bf16.gmra.mxu0 %v1915
    %v2775 = vpop.f32.mrf.mxu0
    %v2776 = vadd.f32 %v2762, %v2775
    %v2777 = vpop.f32.mrf.mxu0
    %v2778 = vadd.f32 %v2764, %v2777
    %2779 = vdwg.mxu0
    %2780 = vmatpush.bf16.msra.mxu0 %v2533
    %2781 = vmatpush.bf16.msra.mxu0 %v2529
    %2782 = vmatpush.bf16.msra.mxu0 %v2525
    %2783 = vmatpush.bf16.msra.mxu0 %v2521
    %2784 = vmatpush.bf16.msra.mxu0 %v2517
    %2785 = vmatpush.bf16.msra.mxu0 %v2513
    %2786 = vmatpush.bf16.msra.mxu0 %v2509
    %2787 = vmatpush.bf16.msra.mxu0 %v2505
    %2788 = vmatmul.bf16.gmra.mxu0 %v1916
    %v2789 = vpop.f32.mrf.mxu0
    %v2790 = vadd.f32 %v2776, %v2789
    %v2791 = vpop.f32.mrf.mxu0
    %v2792 = vadd.f32 %v2778, %v2791
    %2793 = vdwg.mxu0
    %2794 = vmatpush.bf16.msra.mxu0 %v2565
    %2795 = vmatpush.bf16.msra.mxu0 %v2561
    %2796 = vmatpush.bf16.msra.mxu0 %v2557
    %2797 = vmatpush.bf16.msra.mxu0 %v2553
    %2798 = vmatpush.bf16.msra.mxu0 %v2549
    %2799 = vmatpush.bf16.msra.mxu0 %v2545
    %2800 = vmatpush.bf16.msra.mxu0 %v2541
    %2801 = vmatpush.bf16.msra.mxu0 %v2537
    %2802 = vmatmul.bf16.gmra.mxu0 %v1917
    %v2803 = vpop.f32.mrf.mxu0
    %v2804 = vadd.f32 %v2790, %v2803
    %v2805 = vpop.f32.mrf.mxu0
    %v2806 = vadd.f32 %v2792, %v2805
    %2807 = vdwg.mxu0
    %2808 = vmatpush.bf16.msra.mxu0 %v2470
    %2809 = vmatpush.bf16.msra.mxu0 %v2466
    %2810 = vmatpush.bf16.msra.mxu0 %v2462
    %2811 = vmatpush.bf16.msra.mxu0 %v2458
    %2812 = vmatpush.bf16.msra.mxu0 %v2454
    %2813 = vmatpush.bf16.msra.mxu0 %v2450
    %2814 = vmatpush.bf16.msra.mxu0 %v2446
    %2815 = vmatpush.bf16.msra.mxu0 %v2442
    %2816 = vmatmul.bf16.gmra.mxu0 %v1914
    %v2817 = vpop.f32.mrf.mxu0
    %v2818 = vadd.f32 %v2050, %v2817
    %v2819 = vpop.f32.mrf.mxu0
    %v2820 = vadd.f32 %v2050, %v2819
    %2821 = vdwg.mxu0
    %2822 = vmatpush.bf16.msra.mxu0 %v2502
    %2823 = vmatpush.bf16.msra.mxu0 %v2498
    %2824 = vmatpush.bf16.msra.mxu0 %v2494
    %2825 = vmatpush.bf16.msra.mxu0 %v2490
    %2826 = vmatpush.bf16.msra.mxu0 %v2486
    %2827 = vmatpush.bf16.msra.mxu0 %v2482
    %2828 = vmatpush.bf16.msra.mxu0 %v2478
    %2829 = vmatpush.bf16.msra.mxu0 %v2474
    %2830 = vmatmul.bf16.gmra.mxu0 %v1915
    %v2831 = vpop.f32.mrf.mxu0
    %v2832 = vadd.f32 %v2818, %v2831
    %v2833 = vpop.f32.mrf.mxu0
    %v2834 = vadd.f32 %v2820, %v2833
    %2835 = vdwg.mxu0
    %2836 = vmatpush.bf16.msra.mxu0 %v2534
    %2837 = vmatpush.bf16.msra.mxu0 %v2530
    %2838 = vmatpush.bf16.msra.mxu0 %v2526
    %2839 = vmatpush.bf16.msra.mxu0 %v2522
    %2840 = vmatpush.bf16.msra.mxu0 %v2518
    %2841 = vmatpush.bf16.msra.mxu0 %v2514
    %2842 = vmatpush.bf16.msra.mxu0 %v2510
    %2843 = vmatpush.bf16.msra.mxu0 %v2506
    %2844 = vmatmul.bf16.gmra.mxu0 %v1916
    %v2845 = vpop.f32.mrf.mxu0
    %v2846 = vadd.f32 %v2832, %v2845
    %v2847 = vpop.f32.mrf.mxu0
    %v2848 = vadd.f32 %v2834, %v2847
    %2849 = vdwg.mxu0
    %2850 = vmatpush.bf16.msra.mxu0 %v2566
    %2851 = vmatpush.bf16.msra.mxu0 %v2562
    %2852 = vmatpush.bf16.msra.mxu0 %v2558
    %2853 = vmatpush.bf16.msra.mxu0 %v2554
    %2854 = vmatpush.bf16.msra.mxu0 %v2550
    %2855 = vmatpush.bf16.msra.mxu0 %v2546
    %2856 = vmatpush.bf16.msra.mxu0 %v2542
    %2857 = vmatpush.bf16.msra.mxu0 %v2538
    %2858 = vmatmul.bf16.gmra.mxu0 %v1917
    %v2859 = vpop.f32.mrf.mxu0
    %v2860 = vadd.f32 %v2846, %v2859
    %v2861 = vpop.f32.mrf.mxu0
    %v2862 = vadd.f32 %v2848, %v2861
    %2863 = vdwg.mxu0
    %2864 = vmatpush.bf16.msra.mxu0 %v2471
    %2865 = vmatpush.bf16.msra.mxu0 %v2467
    %2866 = vmatpush.bf16.msra.mxu0 %v2463
    %2867 = vmatpush.bf16.msra.mxu0 %v2459
    %2868 = vmatpush.bf16.msra.mxu0 %v2455
    %2869 = vmatpush.bf16.msra.mxu0 %v2451
    %2870 = vmatpush.bf16.msra.mxu0 %v2447
    %2871 = vmatpush.bf16.msra.mxu0 %v2443
    %2872 = vmatmul.bf16.gmra.mxu0 %v1914
    %v2873 = vpop.f32.mrf.mxu0
    %v2874 = vadd.f32 %v2051, %v2873
    %v2875 = vpop.f32.mrf.mxu0
    %v2876 = vadd.f32 %v2051, %v2875
    %2877 = vdwg.mxu0
    %2878 = vmatpush.bf16.msra.mxu0 %v2503
    %2879 = vmatpush.bf16.msra.mxu0 %v2499
    %2880 = vmatpush.bf16.msra.mxu0 %v2495
    %2881 = vmatpush.bf16.msra.mxu0 %v2491
    %2882 = vmatpush.bf16.msra.mxu0 %v2487
    %2883 = vmatpush.bf16.msra.mxu0 %v2483
    %2884 = vmatpush.bf16.msra.mxu0 %v2479
    %2885 = vmatpush.bf16.msra.mxu0 %v2475
    %2886 = vmatmul.bf16.gmra.mxu0 %v1915
    %v2887 = vpop.f32.mrf.mxu0
    %v2888 = vadd.f32 %v2874, %v2887
    %v2889 = vpop.f32.mrf.mxu0
    %v2890 = vadd.f32 %v2876, %v2889
    %2891 = vdwg.mxu0
    %2892 = vmatpush.bf16.msra.mxu0 %v2535
    %2893 = vmatpush.bf16.msra.mxu0 %v2531
    %2894 = vmatpush.bf16.msra.mxu0 %v2527
    %2895 = vmatpush.bf16.msra.mxu0 %v2523
    %2896 = vmatpush.bf16.msra.mxu0 %v2519
    %2897 = vmatpush.bf16.msra.mxu0 %v2515
    %2898 = vmatpush.bf16.msra.mxu0 %v2511
    %2899 = vmatpush.bf16.msra.mxu0 %v2507
    %2900 = vmatmul.bf16.gmra.mxu0 %v1916
    %v2901 = vpop.f32.mrf.mxu0
    %v2902 = vadd.f32 %v2888, %v2901
    %v2903 = vpop.f32.mrf.mxu0
    %v2904 = vadd.f32 %v2890, %v2903
    %2905 = vdwg.mxu0
    %2906 = vmatpush.bf16.msra.mxu0 %v2567
    %2907 = vmatpush.bf16.msra.mxu0 %v2563
    %2908 = vmatpush.bf16.msra.mxu0 %v2559
    %2909 = vmatpush.bf16.msra.mxu0 %v2555
    %2910 = vmatpush.bf16.msra.mxu0 %v2551
    %2911 = vmatpush.bf16.msra.mxu0 %v2547
    %2912 = vmatpush.bf16.msra.mxu0 %v2543
    %2913 = vmatpush.bf16.msra.mxu0 %v2539
    %2914 = vmatmul.bf16.gmra.mxu0 %v1917
    %v2915 = vpop.f32.mrf.mxu0
    %v2916 = vadd.f32 %v2902, %v2915
    %v2917 = vpop.f32.mrf.mxu0
    %v2918 = vadd.f32 %v2904, %v2917
    %2919 = vdwg.mxu0
    %v2920 = vmax.f32 %v2748, 0.0
    %v2921 = vmax.f32 %v2804, 0.0
    %v2922 = vmax.f32 %v2860, 0.0
    %v2923 = vmax.f32 %v2916, 0.0
    %v2924 = vmax.f32 %v2750, 0.0
    %v2925 = vmax.f32 %v2806, 0.0
    %v2926 = vmax.f32 %v2862, 0.0
    %v2927 = vmax.f32 %v2918, 0.0
    %v2928 = vpack.c.bf16 %v2924, %v2920
    %v2929 = vpack.c.bf16 %v2925, %v2921
    %v2930 = vpack.c.bf16 %v2926, %v2922
    %v2931 = vpack.c.bf16 %v2927, %v2923
    %v2932 = vld [vmem:[#allocation6] sm:$0xff]
    %v2933 = vld [vmem:[#allocation6 + $0x8] sm:$0xff]
    %v2934 = vld [vmem:[#allocation6 + $0x10] sm:$0xff]
    %v2935 = vld [vmem:[#allocation6 + $0x18] sm:$0xff]
    %v2936 = vld [vmem:[#allocation6 + $0x20] sm:$0xff]
    %v2937 = vld [vmem:[#allocation6 + $0x28] sm:$0xff]
    %v2938 = vld [vmem:[#allocation6 + $0x30] sm:$0xff]
    %v2939 = vld [vmem:[#allocation6 + $0x38] sm:$0xff]
    %v2940 = vld [vmem:[#allocation6 + $0x40] sm:$0xff]
    %v2941 = vld [vmem:[#allocation6 + $0x48] sm:$0xff]
    %v2942 = vld [vmem:[#allocation6 + $0x50] sm:$0xff]
    %v2943 = vld [vmem:[#allocation6 + $0x58] sm:$0xff]
    %v2944 = vld [vmem:[#allocation6 + $0x60] sm:$0xff]
    %v2945 = vld [vmem:[#allocation6 + $0x68] sm:$0xff]
    %v2946 = vld [vmem:[#allocation6 + $0x70] sm:$0xff]
    %v2947 = vld [vmem:[#allocation6 + $0x78] sm:$0xff]
    %v2948 = vld [vmem:[#allocation6 + $0x80] sm:$0xff]
    %v2949 = vld [vmem:[#allocation6 + $0x88] sm:$0xff]
    %v2950 = vld [vmem:[#allocation6 + $0x90] sm:$0xff]
    %v2951 = vld [vmem:[#allocation6 + $0x98] sm:$0xff]
    %v2952 = vld [vmem:[#allocation6 + $0xa0] sm:$0xff]
    %v2953 = vld [vmem:[#allocation6 + $0xa8] sm:$0xff]
    %v2954 = vld [vmem:[#allocation6 + $0xb0] sm:$0xff]
    %v2955 = vld [vmem:[#allocation6 + $0xb8] sm:$0xff]
    %v2956 = vld [vmem:[#allocation6 + $0xc0] sm:$0xff]
    %v2957 = vld [vmem:[#allocation6 + $0xc8] sm:$0xff]
    %v2958 = vld [vmem:[#allocation6 + $0xd0] sm:$0xff]
    %v2959 = vld [vmem:[#allocation6 + $0xd8] sm:$0xff]
    %v2960 = vld [vmem:[#allocation6 + $0xe0] sm:$0xff]
    %v2961 = vld [vmem:[#allocation6 + $0xe8] sm:$0xff]
    %v2962 = vld [vmem:[#allocation6 + $0xf0] sm:$0xff]
    %v2963 = vld [vmem:[#allocation6 + $0xf8] sm:$0xff]
    %v2964 = vld [vmem:[#allocation6 + $0x100] sm:$0xff]
    %v2965 = vld [vmem:[#allocation6 + $0x108] sm:$0xff]
    %v2966 = vld [vmem:[#allocation6 + $0x110] sm:$0xff]
    %v2967 = vld [vmem:[#allocation6 + $0x118] sm:$0xff]
    %v2968 = vld [vmem:[#allocation6 + $0x120] sm:$0xff]
    %v2969 = vld [vmem:[#allocation6 + $0x128] sm:$0xff]
    %v2970 = vld [vmem:[#allocation6 + $0x130] sm:$0xff]
    %v2971 = vld [vmem:[#allocation6 + $0x138] sm:$0xff]
    %v2972 = vld [vmem:[#allocation6 + $0x140] sm:$0xff]
    %v2973 = vld [vmem:[#allocation6 + $0x148] sm:$0xff]
    %v2974 = vld [vmem:[#allocation6 + $0x150] sm:$0xff]
    %v2975 = vld [vmem:[#allocation6 + $0x158] sm:$0xff]
    %v2976 = vld [vmem:[#allocation6 + $0x160] sm:$0xff]
    %v2977 = vld [vmem:[#allocation6 + $0x168] sm:$0xff]
    %v2978 = vld [vmem:[#allocation6 + $0x170] sm:$0xff]
    %v2979 = vld [vmem:[#allocation6 + $0x178] sm:$0xff]
    %v2980 = vld [vmem:[#allocation6 + $0x180] sm:$0xff]
    %v2981 = vld [vmem:[#allocation6 + $0x188] sm:$0xff]
    %v2982 = vld [vmem:[#allocation6 + $0x190] sm:$0xff]
    %v2983 = vld [vmem:[#allocation6 + $0x198] sm:$0xff]
    %v2984 = vld [vmem:[#allocation6 + $0x1a0] sm:$0xff]
    %v2985 = vld [vmem:[#allocation6 + $0x1a8] sm:$0xff]
    %v2986 = vld [vmem:[#allocation6 + $0x1b0] sm:$0xff]
    %v2987 = vld [vmem:[#allocation6 + $0x1b8] sm:$0xff]
    %v2988 = vld [vmem:[#allocation6 + $0x1c0] sm:$0xff]
    %v2989 = vld [vmem:[#allocation6 + $0x1c8] sm:$0xff]
    %v2990 = vld [vmem:[#allocation6 + $0x1d0] sm:$0xff]
    %v2991 = vld [vmem:[#allocation6 + $0x1d8] sm:$0xff]
    %v2992 = vld [vmem:[#allocation6 + $0x1e0] sm:$0xff]
    %v2993 = vld [vmem:[#allocation6 + $0x1e8] sm:$0xff]
    %v2994 = vld [vmem:[#allocation6 + $0x1f0] sm:$0xff]
    %v2995 = vld [vmem:[#allocation6 + $0x1f8] sm:$0xff]
    %v2996 = vld [vmem:[%s6] sm:$0x3]
    %v2998 = vperm.slane %v2996, 0
    %v2999 = vperm.slane %v2996, 1
    %v3066 = vunpack.c.l.b16 %v2932
    %v3067 = vunpack.c.h.b16 %v2932
    %v3068 = vunpack.c.l.b16 %v2933
    %v3069 = vunpack.c.h.b16 %v2933
    %v3070 = vunpack.c.l.b16 %v2934
    %v3071 = vunpack.c.h.b16 %v2934
    %v3072 = vunpack.c.l.b16 %v2935
    %v3073 = vunpack.c.h.b16 %v2935
    %v3074 = vunpack.c.l.b16 %v2936
    %v3075 = vunpack.c.h.b16 %v2936
    %v3076 = vunpack.c.l.b16 %v2937
    %v3077 = vunpack.c.h.b16 %v2937
    %v3078 = vunpack.c.l.b16 %v2938
    %v3079 = vunpack.c.h.b16 %v2938
    %v3080 = vunpack.c.l.b16 %v2939
    %v3081 = vunpack.c.h.b16 %v2939
    %v3082 = vunpack.c.l.b16 %v2940
    %v3083 = vunpack.c.h.b16 %v2940
    %v3084 = vunpack.c.l.b16 %v2941
    %v3085 = vunpack.c.h.b16 %v2941
    %v3086 = vunpack.c.l.b16 %v2942
    %v3087 = vunpack.c.h.b16 %v2942
    %v3088 = vunpack.c.l.b16 %v2943
    %v3089 = vunpack.c.h.b16 %v2943
    %v3090 = vunpack.c.l.b16 %v2944
    %v3091 = vunpack.c.h.b16 %v2944
    %v3092 = vunpack.c.l.b16 %v2945
    %v3093 = vunpack.c.h.b16 %v2945
    %v3094 = vunpack.c.l.b16 %v2946
    %v3095 = vunpack.c.h.b16 %v2946
    %v3096 = vunpack.c.l.b16 %v2947
    %v3097 = vunpack.c.h.b16 %v2947
    %v3098 = vunpack.c.l.b16 %v2948
    %v3099 = vunpack.c.h.b16 %v2948
    %v3100 = vunpack.c.l.b16 %v2949
    %v3101 = vunpack.c.h.b16 %v2949
    %v3102 = vunpack.c.l.b16 %v2950
    %v3103 = vunpack.c.h.b16 %v2950
    %v3104 = vunpack.c.l.b16 %v2951
    %v3105 = vunpack.c.h.b16 %v2951
    %v3106 = vunpack.c.l.b16 %v2952
    %v3107 = vunpack.c.h.b16 %v2952
    %v3108 = vunpack.c.l.b16 %v2953
    %v3109 = vunpack.c.h.b16 %v2953
    %v3110 = vunpack.c.l.b16 %v2954
    %v3111 = vunpack.c.h.b16 %v2954
    %v3112 = vunpack.c.l.b16 %v2955
    %v3113 = vunpack.c.h.b16 %v2955
    %v3114 = vunpack.c.l.b16 %v2956
    %v3115 = vunpack.c.h.b16 %v2956
    %v3116 = vunpack.c.l.b16 %v2957
    %v3117 = vunpack.c.h.b16 %v2957
    %v3118 = vunpack.c.l.b16 %v2958
    %v3119 = vunpack.c.h.b16 %v2958
    %v3120 = vunpack.c.l.b16 %v2959
    %v3121 = vunpack.c.h.b16 %v2959
    %v3122 = vunpack.c.l.b16 %v2960
    %v3123 = vunpack.c.h.b16 %v2960
    %v3124 = vunpack.c.l.b16 %v2961
    %v3125 = vunpack.c.h.b16 %v2961
    %v3126 = vunpack.c.l.b16 %v2962
    %v3127 = vunpack.c.h.b16 %v2962
    %v3128 = vunpack.c.l.b16 %v2963
    %v3129 = vunpack.c.h.b16 %v2963
    %v3130 = vunpack.c.l.b16 %v2964
    %v3131 = vunpack.c.h.b16 %v2964
    %v3132 = vunpack.c.l.b16 %v2965
    %v3133 = vunpack.c.h.b16 %v2965
    %v3134 = vunpack.c.l.b16 %v2966
    %v3135 = vunpack.c.h.b16 %v2966
    %v3136 = vunpack.c.l.b16 %v2967
    %v3137 = vunpack.c.h.b16 %v2967
    %v3138 = vunpack.c.l.b16 %v2968
    %v3139 = vunpack.c.h.b16 %v2968
    %v3140 = vunpack.c.l.b16 %v2969
    %v3141 = vunpack.c.h.b16 %v2969
    %v3142 = vunpack.c.l.b16 %v2970
    %v3143 = vunpack.c.h.b16 %v2970
    %v3144 = vunpack.c.l.b16 %v2971
    %v3145 = vunpack.c.h.b16 %v2971
    %v3146 = vunpack.c.l.b16 %v2972
    %v3147 = vunpack.c.h.b16 %v2972
    %v3148 = vunpack.c.l.b16 %v2973
    %v3149 = vunpack.c.h.b16 %v2973
    %v3150 = vunpack.c.l.b16 %v2974
    %v3151 = vunpack.c.h.b16 %v2974
    %v3152 = vunpack.c.l.b16 %v2975
    %v3153 = vunpack.c.h.b16 %v2975
    %v3154 = vunpack.c.l.b16 %v2976
    %v3155 = vunpack.c.h.b16 %v2976
    %v3156 = vunpack.c.l.b16 %v2977
    %v3157 = vunpack.c.h.b16 %v2977
    %v3158 = vunpack.c.l.b16 %v2978
    %v3159 = vunpack.c.h.b16 %v2978
    %v3160 = vunpack.c.l.b16 %v2979
    %v3161 = vunpack.c.h.b16 %v2979
    %v3162 = vunpack.c.l.b16 %v2980
    %v3163 = vunpack.c.h.b16 %v2980
    %v3164 = vunpack.c.l.b16 %v2981
    %v3165 = vunpack.c.h.b16 %v2981
    %v3166 = vunpack.c.l.b16 %v2982
    %v3167 = vunpack.c.h.b16 %v2982
    %v3168 = vunpack.c.l.b16 %v2983
    %v3169 = vunpack.c.h.b16 %v2983
    %v3170 = vunpack.c.l.b16 %v2984
    %v3171 = vunpack.c.h.b16 %v2984
    %v3172 = vunpack.c.l.b16 %v2985
    %v3173 = vunpack.c.h.b16 %v2985
    %v3174 = vunpack.c.l.b16 %v2986
    %v3175 = vunpack.c.h.b16 %v2986
    %v3176 = vunpack.c.l.b16 %v2987
    %v3177 = vunpack.c.h.b16 %v2987
    %v3178 = vunpack.c.l.b16 %v2988
    %v3179 = vunpack.c.h.b16 %v2988
    %v3180 = vunpack.c.l.b16 %v2989
    %v3181 = vunpack.c.h.b16 %v2989
    %v3182 = vunpack.c.l.b16 %v2990
    %v3183 = vunpack.c.h.b16 %v2990
    %v3184 = vunpack.c.l.b16 %v2991
    %v3185 = vunpack.c.h.b16 %v2991
    %v3186 = vunpack.c.l.b16 %v2992
    %v3187 = vunpack.c.h.b16 %v2992
    %v3188 = vunpack.c.l.b16 %v2993
    %v3189 = vunpack.c.h.b16 %v2993
    %v3190 = vunpack.c.l.b16 %v2994
    %v3191 = vunpack.c.h.b16 %v2994
    %v3192 = vunpack.c.l.b16 %v2995
    %v3193 = vunpack.c.h.b16 %v2995
    %v3194 = vpack.c.b16 %v3068, %v3066
    %v3195 = vpack.c.b16 %v3069, %v3067
    %v3196 = vpack.c.b16 %v3072, %v3070
    %v3197 = vpack.c.b16 %v3073, %v3071
    %v3198 = vpack.c.b16 %v3076, %v3074
    %v3199 = vpack.c.b16 %v3077, %v3075
    %v3200 = vpack.c.b16 %v3080, %v3078
    %v3201 = vpack.c.b16 %v3081, %v3079
    %v3202 = vpack.c.b16 %v3084, %v3082
    %v3203 = vpack.c.b16 %v3085, %v3083
    %v3204 = vpack.c.b16 %v3088, %v3086
    %v3205 = vpack.c.b16 %v3089, %v3087
    %v3206 = vpack.c.b16 %v3092, %v3090
    %v3207 = vpack.c.b16 %v3093, %v3091
    %v3208 = vpack.c.b16 %v3096, %v3094
    %v3209 = vpack.c.b16 %v3097, %v3095
    %v3210 = vpack.c.b16 %v3100, %v3098
    %v3211 = vpack.c.b16 %v3101, %v3099
    %v3212 = vpack.c.b16 %v3104, %v3102
    %v3213 = vpack.c.b16 %v3105, %v3103
    %v3214 = vpack.c.b16 %v3108, %v3106
    %v3215 = vpack.c.b16 %v3109, %v3107
    %v3216 = vpack.c.b16 %v3112, %v3110
    %v3217 = vpack.c.b16 %v3113, %v3111
    %v3218 = vpack.c.b16 %v3116, %v3114
    %v3219 = vpack.c.b16 %v3117, %v3115
    %v3220 = vpack.c.b16 %v3120, %v3118
    %v3221 = vpack.c.b16 %v3121, %v3119
    %v3222 = vpack.c.b16 %v3124, %v3122
    %v3223 = vpack.c.b16 %v3125, %v3123
    %v3224 = vpack.c.b16 %v3128, %v3126
    %v3225 = vpack.c.b16 %v3129, %v3127
    %v3226 = vpack.c.b16 %v3132, %v3130
    %v3227 = vpack.c.b16 %v3133, %v3131
    %v3228 = vpack.c.b16 %v3136, %v3134
    %v3229 = vpack.c.b16 %v3137, %v3135
    %v3230 = vpack.c.b16 %v3140, %v3138
    %v3231 = vpack.c.b16 %v3141, %v3139
    %v3232 = vpack.c.b16 %v3144, %v3142
    %v3233 = vpack.c.b16 %v3145, %v3143
    %v3234 = vpack.c.b16 %v3148, %v3146
    %v3235 = vpack.c.b16 %v3149, %v3147
    %v3236 = vpack.c.b16 %v3152, %v3150
    %v3237 = vpack.c.b16 %v3153, %v3151
    %v3238 = vpack.c.b16 %v3156, %v3154
    %v3239 = vpack.c.b16 %v3157, %v3155
    %v3240 = vpack.c.b16 %v3160, %v3158
    %v3241 = vpack.c.b16 %v3161, %v3159
    %v3242 = vpack.c.b16 %v3164, %v3162
    %v3243 = vpack.c.b16 %v3165, %v3163
    %v3244 = vpack.c.b16 %v3168, %v3166
    %v3245 = vpack.c.b16 %v3169, %v3167
    %v3246 = vpack.c.b16 %v3172, %v3170
    %v3247 = vpack.c.b16 %v3173, %v3171
    %v3248 = vpack.c.b16 %v3176, %v3174
    %v3249 = vpack.c.b16 %v3177, %v3175
    %v3250 = vpack.c.b16 %v3180, %v3178
    %v3251 = vpack.c.b16 %v3181, %v3179
    %v3252 = vpack.c.b16 %v3184, %v3182
    %v3253 = vpack.c.b16 %v3185, %v3183
    %v3254 = vpack.c.b16 %v3188, %v3186
    %v3255 = vpack.c.b16 %v3189, %v3187
    %v3256 = vpack.c.b16 %v3192, %v3190
    %v3257 = vpack.c.b16 %v3193, %v3191
    %3322 = vmatpush.bf16.msra.mxu0 %v3208
    %3323 = vmatpush.bf16.msra.mxu0 %v3206
    %3324 = vmatpush.bf16.msra.mxu0 %v3204
    %3325 = vmatpush.bf16.msra.mxu0 %v3202
    %3326 = vmatpush.bf16.msra.mxu0 %v3200
    %3327 = vmatpush.bf16.msra.mxu0 %v3198
    %3328 = vmatpush.bf16.msra.mxu0 %v3196
    %3329 = vmatpush.bf16.msra.mxu0 %v3194
    %3330 = vmatmul.bf16.gmra.mxu0 %v2928
    %v3331 = vpop.f32.mrf.mxu0
    %v3332 = vadd.f32 %v2998, %v3331
    %v3333 = vpop.f32.mrf.mxu0
    %v3334 = vadd.f32 %v2998, %v3333
    %3335 = vdwg.mxu0
    %3336 = vmatpush.bf16.msra.mxu0 %v3224
    %3337 = vmatpush.bf16.msra.mxu0 %v3222
    %3338 = vmatpush.bf16.msra.mxu0 %v3220
    %3339 = vmatpush.bf16.msra.mxu0 %v3218
    %3340 = vmatpush.bf16.msra.mxu0 %v3216
    %3341 = vmatpush.bf16.msra.mxu0 %v3214
    %3342 = vmatpush.bf16.msra.mxu0 %v3212
    %3343 = vmatpush.bf16.msra.mxu0 %v3210
    %3344 = vmatmul.bf16.gmra.mxu0 %v2929
    %v3345 = vpop.f32.mrf.mxu0
    %v3346 = vadd.f32 %v3332, %v3345
    %v3347 = vpop.f32.mrf.mxu0
    %v3348 = vadd.f32 %v3334, %v3347
    %3349 = vdwg.mxu0
    %3350 = vmatpush.bf16.msra.mxu0 %v3240
    %3351 = vmatpush.bf16.msra.mxu0 %v3238
    %3352 = vmatpush.bf16.msra.mxu0 %v3236
    %3353 = vmatpush.bf16.msra.mxu0 %v3234
    %3354 = vmatpush.bf16.msra.mxu0 %v3232
    %3355 = vmatpush.bf16.msra.mxu0 %v3230
    %3356 = vmatpush.bf16.msra.mxu0 %v3228
    %3357 = vmatpush.bf16.msra.mxu0 %v3226
    %3358 = vmatmul.bf16.gmra.mxu0 %v2930
    %v3359 = vpop.f32.mrf.mxu0
    %v3360 = vadd.f32 %v3346, %v3359
    %v3361 = vpop.f32.mrf.mxu0
    %v3362 = vadd.f32 %v3348, %v3361
    %3363 = vdwg.mxu0
    %3364 = vmatpush.bf16.msra.mxu0 %v3256
    %3365 = vmatpush.bf16.msra.mxu0 %v3254
    %3366 = vmatpush.bf16.msra.mxu0 %v3252
    %3367 = vmatpush.bf16.msra.mxu0 %v3250
    %3368 = vmatpush.bf16.msra.mxu0 %v3248
    %3369 = vmatpush.bf16.msra.mxu0 %v3246
    %3370 = vmatpush.bf16.msra.mxu0 %v3244
    %3371 = vmatpush.bf16.msra.mxu0 %v3242
    %3372 = vmatmul.bf16.gmra.mxu0 %v2931
    %v3373 = vpop.f32.mrf.mxu0
    %v3374 = vadd.f32 %v3360, %v3373
    %v3375 = vpop.f32.mrf.mxu0
    %v3376 = vadd.f32 %v3362, %v3375
    %3377 = vdwg.mxu0
    %3378 = vmatpush.bf16.msra.mxu0 %v3209
    %3379 = vmatpush.bf16.msra.mxu0 %v3207
    %3380 = vmatpush.bf16.msra.mxu0 %v3205
    %3381 = vmatpush.bf16.msra.mxu0 %v3203
    %3382 = vmatpush.bf16.msra.mxu0 %v3201
    %3383 = vmatpush.bf16.msra.mxu0 %v3199
    %3384 = vmatpush.bf16.msra.mxu0 %v3197
    %3385 = vmatpush.bf16.msra.mxu0 %v3195
    %3386 = vmatmul.bf16.gmra.mxu0 %v2928
    %v3387 = vpop.f32.mrf.mxu0
    %v3388 = vadd.f32 %v2999, %v3387
    %v3389 = vpop.f32.mrf.mxu0
    %v3390 = vadd.f32 %v2999, %v3389
    %3391 = vdwg.mxu0
    %3392 = vmatpush.bf16.msra.mxu0 %v3225
    %3393 = vmatpush.bf16.msra.mxu0 %v3223
    %3394 = vmatpush.bf16.msra.mxu0 %v3221
    %3395 = vmatpush.bf16.msra.mxu0 %v3219
    %3396 = vmatpush.bf16.msra.mxu0 %v3217
    %3397 = vmatpush.bf16.msra.mxu0 %v3215
    %3398 = vmatpush.bf16.msra.mxu0 %v3213
    %3399 = vmatpush.bf16.msra.mxu0 %v3211
    %3400 = vmatmul.bf16.gmra.mxu0 %v2929
    %v3401 = vpop.f32.mrf.mxu0
    %v3402 = vadd.f32 %v3388, %v3401
    %v3403 = vpop.f32.mrf.mxu0
    %v3404 = vadd.f32 %v3390, %v3403
    %3405 = vdwg.mxu0
    %3406 = vmatpush.bf16.msra.mxu0 %v3241
    %3407 = vmatpush.bf16.msra.mxu0 %v3239
    %3408 = vmatpush.bf16.msra.mxu0 %v3237
    %3409 = vmatpush.bf16.msra.mxu0 %v3235
    %3410 = vmatpush.bf16.msra.mxu0 %v3233
    %3411 = vmatpush.bf16.msra.mxu0 %v3231
    %3412 = vmatpush.bf16.msra.mxu0 %v3229
    %3413 = vmatpush.bf16.msra.mxu0 %v3227
    %3414 = vmatmul.bf16.gmra.mxu0 %v2930
    %v3415 = vpop.f32.mrf.mxu0
    %v3416 = vadd.f32 %v3402, %v3415
    %v3417 = vpop.f32.mrf.mxu0
    %v3418 = vadd.f32 %v3404, %v3417
    %3419 = vdwg.mxu0
    %3420 = vmatpush.bf16.msra.mxu0 %v3257
    %3421 = vmatpush.bf16.msra.mxu0 %v3255
    %3422 = vmatpush.bf16.msra.mxu0 %v3253
    %3423 = vmatpush.bf16.msra.mxu0 %v3251
    %3424 = vmatpush.bf16.msra.mxu0 %v3249
    %3425 = vmatpush.bf16.msra.mxu0 %v3247
    %3426 = vmatpush.bf16.msra.mxu0 %v3245
    %3427 = vmatpush.bf16.msra.mxu0 %v3243
    %3428 = vmatmul.bf16.gmra.mxu0 %v2931
    %v3429 = vpop.f32.mrf.mxu0
    %v3430 = vadd.f32 %v3416, %v3429
    %v3431 = vpop.f32.mrf.mxu0
    %v3432 = vadd.f32 %v3418, %v3431
    %3433 = vdwg.mxu0
    %v3434 = vmax.f32 %v3374, 0.0
    %v3435 = vmax.f32 %v3430, 0.0
    %v3436 = vmax.f32 %v3376, 0.0
    %v3437 = vmax.f32 %v3432, 0.0
    %v3438 = vpack.c.bf16 %v3436, %v3434
    %v3439 = vpack.c.bf16 %v3437, %v3435
    %v3440 = vld [vmem:[#allocation7] sm:$0xff]
    %v3441 = vld [vmem:[#allocation7 + $0x8] sm:$0xff]
    %v3442 = vld [vmem:[#allocation7 + $0x10] sm:$0xff]
    %v3443 = vld [vmem:[#allocation7 + $0x18] sm:$0xff]
    %v3444 = vld [vmem:[#allocation7 + $0x20] sm:$0xff]
    %v3445 = vld [vmem:[#allocation7 + $0x28] sm:$0xff]
    %v3446 = vld [vmem:[#allocation7 + $0x30] sm:$0xff]
    %v3447 = vld [vmem:[#allocation7 + $0x38] sm:$0xff]
    %v3448 = vld [vmem:[#allocation7 + $0x40] sm:$0xff]
    %v3449 = vld [vmem:[#allocation7 + $0x48] sm:$0xff]
    %v3450 = vld [vmem:[#allocation7 + $0x50] sm:$0xff]
    %v3451 = vld [vmem:[#allocation7 + $0x58] sm:$0xff]
    %v3452 = vld [vmem:[#allocation7 + $0x60] sm:$0xff]
    %v3453 = vld [vmem:[#allocation7 + $0x68] sm:$0xff]
    %v3454 = vld [vmem:[#allocation7 + $0x70] sm:$0xff]
    %v3455 = vld [vmem:[#allocation7 + $0x78] sm:$0xff]
    %v3456 = vld [vmem:[#allocation7 + $0x80] sm:$0xff]
    %v3457 = vld [vmem:[#allocation7 + $0x88] sm:$0xff]
    %v3458 = vld [vmem:[#allocation7 + $0x90] sm:$0xff]
    %v3459 = vld [vmem:[#allocation7 + $0x98] sm:$0xff]
    %v3460 = vld [vmem:[#allocation7 + $0xa0] sm:$0xff]
    %v3461 = vld [vmem:[#allocation7 + $0xa8] sm:$0xff]
    %v3462 = vld [vmem:[#allocation7 + $0xb0] sm:$0xff]
    %v3463 = vld [vmem:[#allocation7 + $0xb8] sm:$0xff]
    %v3464 = vld [vmem:[#allocation7 + $0xc0] sm:$0xff]
    %v3465 = vld [vmem:[#allocation7 + $0xc8] sm:$0xff]
    %v3466 = vld [vmem:[#allocation7 + $0xd0] sm:$0xff]
    %v3467 = vld [vmem:[#allocation7 + $0xd8] sm:$0xff]
    %v3468 = vld [vmem:[#allocation7 + $0xe0] sm:$0xff]
    %v3469 = vld [vmem:[#allocation7 + $0xe8] sm:$0xff]
    %v3470 = vld [vmem:[#allocation7 + $0xf0] sm:$0xff]
    %v3471 = vld [vmem:[#allocation7 + $0xf8] sm:$0xff]
    %v3472 = vld [vmem:[#allocation7 + $0x100] sm:$0xff]
    %v3473 = vld [vmem:[#allocation7 + $0x108] sm:$0xff]
    %v3474 = vld [vmem:[#allocation7 + $0x110] sm:$0xff]
    %v3475 = vld [vmem:[#allocation7 + $0x118] sm:$0xff]
    %v3476 = vld [vmem:[#allocation7 + $0x120] sm:$0xff]
    %v3477 = vld [vmem:[#allocation7 + $0x128] sm:$0xff]
    %v3478 = vld [vmem:[#allocation7 + $0x130] sm:$0xff]
    %v3479 = vld [vmem:[#allocation7 + $0x138] sm:$0xff]
    %v3480 = vld [vmem:[#allocation7 + $0x140] sm:$0xff]
    %v3481 = vld [vmem:[#allocation7 + $0x148] sm:$0xff]
    %v3482 = vld [vmem:[#allocation7 + $0x150] sm:$0xff]
    %v3483 = vld [vmem:[#allocation7 + $0x158] sm:$0xff]
    %v3484 = vld [vmem:[#allocation7 + $0x160] sm:$0xff]
    %v3485 = vld [vmem:[#allocation7 + $0x168] sm:$0xff]
    %v3486 = vld [vmem:[#allocation7 + $0x170] sm:$0xff]
    %v3487 = vld [vmem:[#allocation7 + $0x178] sm:$0xff]
    %v3488 = vld [vmem:[#allocation7 + $0x180] sm:$0xff]
    %v3489 = vld [vmem:[#allocation7 + $0x188] sm:$0xff]
    %v3490 = vld [vmem:[#allocation7 + $0x190] sm:$0xff]
    %v3491 = vld [vmem:[#allocation7 + $0x198] sm:$0xff]
    %v3492 = vld [vmem:[#allocation7 + $0x1a0] sm:$0xff]
    %v3493 = vld [vmem:[#allocation7 + $0x1a8] sm:$0xff]
    %v3494 = vld [vmem:[#allocation7 + $0x1b0] sm:$0xff]
    %v3495 = vld [vmem:[#allocation7 + $0x1b8] sm:$0xff]
    %v3496 = vld [vmem:[#allocation7 + $0x1c0] sm:$0xff]
    %v3497 = vld [vmem:[#allocation7 + $0x1c8] sm:$0xff]
    %v3498 = vld [vmem:[#allocation7 + $0x1d0] sm:$0xff]
    %v3499 = vld [vmem:[#allocation7 + $0x1d8] sm:$0xff]
    %v3500 = vld [vmem:[#allocation7 + $0x1e0] sm:$0xff]
    %v3501 = vld [vmem:[#allocation7 + $0x1e8] sm:$0xff]
    %v3502 = vld [vmem:[#allocation7 + $0x1f0] sm:$0xff]
    %v3503 = vld [vmem:[#allocation7 + $0x1f8] sm:$0xff]
    %v3504 = vld [vmem:[%s8] sm:$0xf]
    %v3506 = vperm.slane %v3504, 0
    %v3507 = vperm.slane %v3504, 1
    %v3508 = vperm.slane %v3504, 2
    %v3509 = vperm.slane %v3504, 3
    %v3578 = vunpack.c.l.b16 %v3440
    %v3579 = vunpack.c.h.b16 %v3440
    %v3580 = vunpack.c.l.b16 %v3441
    %v3581 = vunpack.c.h.b16 %v3441
    %v3582 = vunpack.c.l.b16 %v3442
    %v3583 = vunpack.c.h.b16 %v3442
    %v3584 = vunpack.c.l.b16 %v3443
    %v3585 = vunpack.c.h.b16 %v3443
    %v3586 = vunpack.c.l.b16 %v3444
    %v3587 = vunpack.c.h.b16 %v3444
    %v3588 = vunpack.c.l.b16 %v3445
    %v3589 = vunpack.c.h.b16 %v3445
    %v3590 = vunpack.c.l.b16 %v3446
    %v3591 = vunpack.c.h.b16 %v3446
    %v3592 = vunpack.c.l.b16 %v3447
    %v3593 = vunpack.c.h.b16 %v3447
    %v3594 = vunpack.c.l.b16 %v3448
    %v3595 = vunpack.c.h.b16 %v3448
    %v3596 = vunpack.c.l.b16 %v3449
    %v3597 = vunpack.c.h.b16 %v3449
    %v3598 = vunpack.c.l.b16 %v3450
    %v3599 = vunpack.c.h.b16 %v3450
    %v3600 = vunpack.c.l.b16 %v3451
    %v3601 = vunpack.c.h.b16 %v3451
    %v3602 = vunpack.c.l.b16 %v3452
    %v3603 = vunpack.c.h.b16 %v3452
    %v3604 = vunpack.c.l.b16 %v3453
    %v3605 = vunpack.c.h.b16 %v3453
    %v3606 = vunpack.c.l.b16 %v3454
    %v3607 = vunpack.c.h.b16 %v3454
    %v3608 = vunpack.c.l.b16 %v3455
    %v3609 = vunpack.c.h.b16 %v3455
    %v3610 = vunpack.c.l.b16 %v3456
    %v3611 = vunpack.c.h.b16 %v3456
    %v3612 = vunpack.c.l.b16 %v3457
    %v3613 = vunpack.c.h.b16 %v3457
    %v3614 = vunpack.c.l.b16 %v3458
    %v3615 = vunpack.c.h.b16 %v3458
    %v3616 = vunpack.c.l.b16 %v3459
    %v3617 = vunpack.c.h.b16 %v3459
    %v3618 = vunpack.c.l.b16 %v3460
    %v3619 = vunpack.c.h.b16 %v3460
    %v3620 = vunpack.c.l.b16 %v3461
    %v3621 = vunpack.c.h.b16 %v3461
    %v3622 = vunpack.c.l.b16 %v3462
    %v3623 = vunpack.c.h.b16 %v3462
    %v3624 = vunpack.c.l.b16 %v3463
    %v3625 = vunpack.c.h.b16 %v3463
    %v3626 = vunpack.c.l.b16 %v3464
    %v3627 = vunpack.c.h.b16 %v3464
    %v3628 = vunpack.c.l.b16 %v3465
    %v3629 = vunpack.c.h.b16 %v3465
    %v3630 = vunpack.c.l.b16 %v3466
    %v3631 = vunpack.c.h.b16 %v3466
    %v3632 = vunpack.c.l.b16 %v3467
    %v3633 = vunpack.c.h.b16 %v3467
    %v3634 = vunpack.c.l.b16 %v3468
    %v3635 = vunpack.c.h.b16 %v3468
    %v3636 = vunpack.c.l.b16 %v3469
    %v3637 = vunpack.c.h.b16 %v3469
    %v3638 = vunpack.c.l.b16 %v3470
    %v3639 = vunpack.c.h.b16 %v3470
    %v3640 = vunpack.c.l.b16 %v3471
    %v3641 = vunpack.c.h.b16 %v3471
    %v3642 = vunpack.c.l.b16 %v3472
    %v3643 = vunpack.c.h.b16 %v3472
    %v3644 = vunpack.c.l.b16 %v3473
    %v3645 = vunpack.c.h.b16 %v3473
    %v3646 = vunpack.c.l.b16 %v3474
    %v3647 = vunpack.c.h.b16 %v3474
    %v3648 = vunpack.c.l.b16 %v3475
    %v3649 = vunpack.c.h.b16 %v3475
    %v3650 = vunpack.c.l.b16 %v3476
    %v3651 = vunpack.c.h.b16 %v3476
    %v3652 = vunpack.c.l.b16 %v3477
    %v3653 = vunpack.c.h.b16 %v3477
    %v3654 = vunpack.c.l.b16 %v3478
    %v3655 = vunpack.c.h.b16 %v3478
    %v3656 = vunpack.c.l.b16 %v3479
    %v3657 = vunpack.c.h.b16 %v3479
    %v3658 = vunpack.c.l.b16 %v3480
    %v3659 = vunpack.c.h.b16 %v3480
    %v3660 = vunpack.c.l.b16 %v3481
    %v3661 = vunpack.c.h.b16 %v3481
    %v3662 = vunpack.c.l.b16 %v3482
    %v3663 = vunpack.c.h.b16 %v3482
    %v3664 = vunpack.c.l.b16 %v3483
    %v3665 = vunpack.c.h.b16 %v3483
    %v3666 = vunpack.c.l.b16 %v3484
    %v3667 = vunpack.c.h.b16 %v3484
    %v3668 = vunpack.c.l.b16 %v3485
    %v3669 = vunpack.c.h.b16 %v3485
    %v3670 = vunpack.c.l.b16 %v3486
    %v3671 = vunpack.c.h.b16 %v3486
    %v3672 = vunpack.c.l.b16 %v3487
    %v3673 = vunpack.c.h.b16 %v3487
    %v3674 = vunpack.c.l.b16 %v3488
    %v3675 = vunpack.c.h.b16 %v3488
    %v3676 = vunpack.c.l.b16 %v3489
    %v3677 = vunpack.c.h.b16 %v3489
    %v3678 = vunpack.c.l.b16 %v3490
    %v3679 = vunpack.c.h.b16 %v3490
    %v3680 = vunpack.c.l.b16 %v3491
    %v3681 = vunpack.c.h.b16 %v3491
    %v3682 = vunpack.c.l.b16 %v3492
    %v3683 = vunpack.c.h.b16 %v3492
    %v3684 = vunpack.c.l.b16 %v3493
    %v3685 = vunpack.c.h.b16 %v3493
    %v3686 = vunpack.c.l.b16 %v3494
    %v3687 = vunpack.c.h.b16 %v3494
    %v3688 = vunpack.c.l.b16 %v3495
    %v3689 = vunpack.c.h.b16 %v3495
    %v3690 = vunpack.c.l.b16 %v3496
    %v3691 = vunpack.c.h.b16 %v3496
    %v3692 = vunpack.c.l.b16 %v3497
    %v3693 = vunpack.c.h.b16 %v3497
    %v3694 = vunpack.c.l.b16 %v3498
    %v3695 = vunpack.c.h.b16 %v3498
    %v3696 = vunpack.c.l.b16 %v3499
    %v3697 = vunpack.c.h.b16 %v3499
    %v3698 = vunpack.c.l.b16 %v3500
    %v3699 = vunpack.c.h.b16 %v3500
    %v3700 = vunpack.c.l.b16 %v3501
    %v3701 = vunpack.c.h.b16 %v3501
    %v3702 = vunpack.c.l.b16 %v3502
    %v3703 = vunpack.c.h.b16 %v3502
    %v3704 = vunpack.c.l.b16 %v3503
    %v3705 = vunpack.c.h.b16 %v3503
    %v3706 = vpack.c.b16 %v3582, %v3578
    %v3707 = vpack.c.b16 %v3583, %v3579
    %v3708 = vpack.c.b16 %v3584, %v3580
    %v3709 = vpack.c.b16 %v3585, %v3581
    %v3710 = vpack.c.b16 %v3590, %v3586
    %v3711 = vpack.c.b16 %v3591, %v3587
    %v3712 = vpack.c.b16 %v3592, %v3588
    %v3713 = vpack.c.b16 %v3593, %v3589
    %v3714 = vpack.c.b16 %v3598, %v3594
    %v3715 = vpack.c.b16 %v3599, %v3595
    %v3716 = vpack.c.b16 %v3600, %v3596
    %v3717 = vpack.c.b16 %v3601, %v3597
    %v3718 = vpack.c.b16 %v3606, %v3602
    %v3719 = vpack.c.b16 %v3607, %v3603
    %v3720 = vpack.c.b16 %v3608, %v3604
    %v3721 = vpack.c.b16 %v3609, %v3605
    %v3722 = vpack.c.b16 %v3614, %v3610
    %v3723 = vpack.c.b16 %v3615, %v3611
    %v3724 = vpack.c.b16 %v3616, %v3612
    %v3725 = vpack.c.b16 %v3617, %v3613
    %v3726 = vpack.c.b16 %v3622, %v3618
    %v3727 = vpack.c.b16 %v3623, %v3619
    %v3728 = vpack.c.b16 %v3624, %v3620
    %v3729 = vpack.c.b16 %v3625, %v3621
    %v3730 = vpack.c.b16 %v3630, %v3626
    %v3731 = vpack.c.b16 %v3631, %v3627
    %v3732 = vpack.c.b16 %v3632, %v3628
    %v3733 = vpack.c.b16 %v3633, %v3629
    %v3734 = vpack.c.b16 %v3638, %v3634
    %v3735 = vpack.c.b16 %v3639, %v3635
    %v3736 = vpack.c.b16 %v3640, %v3636
    %v3737 = vpack.c.b16 %v3641, %v3637
    %v3738 = vpack.c.b16 %v3646, %v3642
    %v3739 = vpack.c.b16 %v3647, %v3643
    %v3740 = vpack.c.b16 %v3648, %v3644
    %v3741 = vpack.c.b16 %v3649, %v3645
    %v3742 = vpack.c.b16 %v3654, %v3650
    %v3743 = vpack.c.b16 %v3655, %v3651
    %v3744 = vpack.c.b16 %v3656, %v3652
    %v3745 = vpack.c.b16 %v3657, %v3653
    %v3746 = vpack.c.b16 %v3662, %v3658
    %v3747 = vpack.c.b16 %v3663, %v3659
    %v3748 = vpack.c.b16 %v3664, %v3660
    %v3749 = vpack.c.b16 %v3665, %v3661
    %v3750 = vpack.c.b16 %v3670, %v3666
    %v3751 = vpack.c.b16 %v3671, %v3667
    %v3752 = vpack.c.b16 %v3672, %v3668
    %v3753 = vpack.c.b16 %v3673, %v3669
    %v3754 = vpack.c.b16 %v3678, %v3674
    %v3755 = vpack.c.b16 %v3679, %v3675
    %v3756 = vpack.c.b16 %v3680, %v3676
    %v3757 = vpack.c.b16 %v3681, %v3677
    %v3758 = vpack.c.b16 %v3686, %v3682
    %v3759 = vpack.c.b16 %v3687, %v3683
    %v3760 = vpack.c.b16 %v3688, %v3684
    %v3761 = vpack.c.b16 %v3689, %v3685
    %v3762 = vpack.c.b16 %v3694, %v3690
    %v3763 = vpack.c.b16 %v3695, %v3691
    %v3764 = vpack.c.b16 %v3696, %v3692
    %v3765 = vpack.c.b16 %v3697, %v3693
    %v3766 = vpack.c.b16 %v3702, %v3698
    %v3767 = vpack.c.b16 %v3703, %v3699
    %v3768 = vpack.c.b16 %v3704, %v3700
    %v3769 = vpack.c.b16 %v3705, %v3701
    %3834 = vmatpush.bf16.msra.mxu0 %v3734
    %3835 = vmatpush.bf16.msra.mxu0 %v3730
    %3836 = vmatpush.bf16.msra.mxu0 %v3726
    %3837 = vmatpush.bf16.msra.mxu0 %v3722
    %3838 = vmatpush.bf16.msra.mxu0 %v3718
    %3839 = vmatpush.bf16.msra.mxu0 %v3714
    %3840 = vmatpush.bf16.msra.mxu0 %v3710
    %3841 = vmatpush.bf16.msra.mxu0 %v3706
    %3842 = vmatmul.bf16.gmra.mxu0 %v3438
    %v3843 = vpop.f32.mrf.mxu0
    %v3844 = vadd.f32 %v3506, %v3843
    %v3845 = vpop.f32.mrf.mxu0
    %v3846 = vadd.f32 %v3506, %v3845
    %3847 = vdwg.mxu0
    %3848 = vmatpush.bf16.msra.mxu0 %v3766
    %3849 = vmatpush.bf16.msra.mxu0 %v3762
    %3850 = vmatpush.bf16.msra.mxu0 %v3758
    %3851 = vmatpush.bf16.msra.mxu0 %v3754
    %3852 = vmatpush.bf16.msra.mxu0 %v3750
    %3853 = vmatpush.bf16.msra.mxu0 %v3746
    %3854 = vmatpush.bf16.msra.mxu0 %v3742
    %3855 = vmatpush.bf16.msra.mxu0 %v3738
    %3856 = vmatmul.bf16.gmra.mxu0 %v3439
    %v3857 = vpop.f32.mrf.mxu0
    %v3858 = vadd.f32 %v3844, %v3857
    %v3859 = vpop.f32.mrf.mxu0
    %v3860 = vadd.f32 %v3846, %v3859
    %3861 = vdwg.mxu0
    %3862 = vmatpush.bf16.msra.mxu0 %v3735
    %3863 = vmatpush.bf16.msra.mxu0 %v3731
    %3864 = vmatpush.bf16.msra.mxu0 %v3727
    %3865 = vmatpush.bf16.msra.mxu0 %v3723
    %3866 = vmatpush.bf16.msra.mxu0 %v3719
    %3867 = vmatpush.bf16.msra.mxu0 %v3715
    %3868 = vmatpush.bf16.msra.mxu0 %v3711
    %3869 = vmatpush.bf16.msra.mxu0 %v3707
    %3870 = vmatmul.bf16.gmra.mxu0 %v3438
    %v3871 = vpop.f32.mrf.mxu0
    %v3872 = vadd.f32 %v3507, %v3871
    %v3873 = vpop.f32.mrf.mxu0
    %v3874 = vadd.f32 %v3507, %v3873
    %3875 = vdwg.mxu0
    %3876 = vmatpush.bf16.msra.mxu0 %v3767
    %3877 = vmatpush.bf16.msra.mxu0 %v3763
    %3878 = vmatpush.bf16.msra.mxu0 %v3759
    %3879 = vmatpush.bf16.msra.mxu0 %v3755
    %3880 = vmatpush.bf16.msra.mxu0 %v3751
    %3881 = vmatpush.bf16.msra.mxu0 %v3747
    %3882 = vmatpush.bf16.msra.mxu0 %v3743
    %3883 = vmatpush.bf16.msra.mxu0 %v3739
    %3884 = vmatmul.bf16.gmra.mxu0 %v3439
    %v3885 = vpop.f32.mrf.mxu0
    %v3886 = vadd.f32 %v3872, %v3885
    %v3887 = vpop.f32.mrf.mxu0
    %v3888 = vadd.f32 %v3874, %v3887
    %3889 = vdwg.mxu0
    %3890 = vmatpush.bf16.msra.mxu0 %v3736
    %3891 = vmatpush.bf16.msra.mxu0 %v3732
    %3892 = vmatpush.bf16.msra.mxu0 %v3728
    %3893 = vmatpush.bf16.msra.mxu0 %v3724
    %3894 = vmatpush.bf16.msra.mxu0 %v3720
    %3895 = vmatpush.bf16.msra.mxu0 %v3716
    %3896 = vmatpush.bf16.msra.mxu0 %v3712
    %3897 = vmatpush.bf16.msra.mxu0 %v3708
    %3898 = vmatmul.bf16.gmra.mxu0 %v3438
    %v3899 = vpop.f32.mrf.mxu0
    %v3900 = vadd.f32 %v3508, %v3899
    %v3901 = vpop.f32.mrf.mxu0
    %v3902 = vadd.f32 %v3508, %v3901
    %3903 = vdwg.mxu0
    %3904 = vmatpush.bf16.msra.mxu0 %v3768
    %3905 = vmatpush.bf16.msra.mxu0 %v3764
    %3906 = vmatpush.bf16.msra.mxu0 %v3760
    %3907 = vmatpush.bf16.msra.mxu0 %v3756
    %3908 = vmatpush.bf16.msra.mxu0 %v3752
    %3909 = vmatpush.bf16.msra.mxu0 %v3748
    %3910 = vmatpush.bf16.msra.mxu0 %v3744
    %3911 = vmatpush.bf16.msra.mxu0 %v3740
    %3912 = vmatmul.bf16.gmra.mxu0 %v3439
    %v3913 = vpop.f32.mrf.mxu0
    %v3914 = vadd.f32 %v3900, %v3913
    %v3915 = vpop.f32.mrf.mxu0
    %v3916 = vadd.f32 %v3902, %v3915
    %3917 = vdwg.mxu0
    %3918 = vmatpush.bf16.msra.mxu0 %v3737
    %3919 = vmatpush.bf16.msra.mxu0 %v3733
    %3920 = vmatpush.bf16.msra.mxu0 %v3729
    %3921 = vmatpush.bf16.msra.mxu0 %v3725
    %3922 = vmatpush.bf16.msra.mxu0 %v3721
    %3923 = vmatpush.bf16.msra.mxu0 %v3717
    %3924 = vmatpush.bf16.msra.mxu0 %v3713
    %3925 = vmatpush.bf16.msra.mxu0 %v3709
    %3926 = vmatmul.bf16.gmra.mxu0 %v3438
    %v3927 = vpop.f32.mrf.mxu0
    %v3928 = vadd.f32 %v3509, %v3927
    %v3929 = vpop.f32.mrf.mxu0
    %v3930 = vadd.f32 %v3509, %v3929
    %3931 = vdwg.mxu0
    %3932 = vmatpush.bf16.msra.mxu0 %v3769
    %3933 = vmatpush.bf16.msra.mxu0 %v3765
    %3934 = vmatpush.bf16.msra.mxu0 %v3761
    %3935 = vmatpush.bf16.msra.mxu0 %v3757
    %3936 = vmatpush.bf16.msra.mxu0 %v3753
    %3937 = vmatpush.bf16.msra.mxu0 %v3749
    %3938 = vmatpush.bf16.msra.mxu0 %v3745
    %3939 = vmatpush.bf16.msra.mxu0 %v3741
    %3940 = vmatmul.bf16.gmra.mxu0 %v3439
    %v3941 = vpop.f32.mrf.mxu0
    %v3942 = vadd.f32 %v3928, %v3941
    %v3943 = vpop.f32.mrf.mxu0
    %v3944 = vadd.f32 %v3930, %v3943
    %3945 = vdwg.mxu0
    %v3946 = vmax.f32 %v3858, 0.0
    %v3947 = vmax.f32 %v3886, 0.0
    %v3948 = vmax.f32 %v3914, 0.0
    %v3949 = vmax.f32 %v3942, 0.0
    %v3950 = vmax.f32 %v3860, 0.0
    %v3951 = vmax.f32 %v3888, 0.0
    %v3952 = vmax.f32 %v3916, 0.0
    %v3953 = vmax.f32 %v3944, 0.0
    %v3954 = vpack.c.bf16 %v3950, %v3946
    %v3955 = vpack.c.bf16 %v3951, %v3947
    %v3956 = vpack.c.bf16 %v3952, %v3948
    %v3957 = vpack.c.bf16 %v3953, %v3949
    %v3958 = vld [vmem:[#allocation9] sm:$0xf]
    %v3959 = vld [vmem:[#allocation9 + $0x4] sm:$0xf]
    %v3960 = vld [vmem:[#allocation9 + $0x8] sm:$0xf]
    %v3961 = vld [vmem:[#allocation9 + $0xc] sm:$0xf]
    %v3962 = vld [vmem:[#allocation9 + $0x10] sm:$0xf]
    %v3963 = vld [vmem:[#allocation9 + $0x14] sm:$0xf]
    %v3964 = vld [vmem:[#allocation9 + $0x18] sm:$0xf]
    %v3965 = vld [vmem:[#allocation9 + $0x1c] sm:$0xf]
    %v3966 = vld [vmem:[#allocation9 + $0x20] sm:$0xf]
    %v3967 = vld [vmem:[#allocation9 + $0x24] sm:$0xf]
    %v3968 = vld [vmem:[#allocation9 + $0x28] sm:$0xf]
    %v3969 = vld [vmem:[#allocation9 + $0x2c] sm:$0xf]
    %v3970 = vld [vmem:[#allocation9 + $0x30] sm:$0xf]
    %v3971 = vld [vmem:[#allocation9 + $0x34] sm:$0xf]
    %v3972 = vld [vmem:[#allocation9 + $0x38] sm:$0xf]
    %v3973 = vld [vmem:[#allocation9 + $0x3c] sm:$0xf]
    %v3974 = vld [vmem:[#allocation9 + $0x40] sm:$0xf]
    %v3975 = vld [vmem:[#allocation9 + $0x44] sm:$0xf]
    %v3976 = vld [vmem:[#allocation9 + $0x48] sm:$0xf]
    %v3977 = vld [vmem:[#allocation9 + $0x4c] sm:$0xf]
    %v3978 = vld [vmem:[#allocation9 + $0x50] sm:$0xf]
    %v3979 = vld [vmem:[#allocation9 + $0x54] sm:$0xf]
    %v3980 = vld [vmem:[#allocation9 + $0x58] sm:$0xf]
    %v3981 = vld [vmem:[#allocation9 + $0x5c] sm:$0xf]
    %v3982 = vld [vmem:[#allocation9 + $0x60] sm:$0xf]
    %v3983 = vld [vmem:[#allocation9 + $0x64] sm:$0xf]
    %v3984 = vld [vmem:[#allocation9 + $0x68] sm:$0xf]
    %v3985 = vld [vmem:[#allocation9 + $0x6c] sm:$0xf]
    %v3986 = vld [vmem:[#allocation9 + $0x70] sm:$0xf]
    %v3987 = vld [vmem:[#allocation9 + $0x74] sm:$0xf]
    %v3988 = vld [vmem:[#allocation9 + $0x78] sm:$0xf]
    %v3989 = vld [vmem:[#allocation9 + $0x7c] sm:$0xf]
    %v3990 = vld [vmem:[#allocation9 + $0x80] sm:$0xf]
    %v3991 = vld [vmem:[#allocation9 + $0x84] sm:$0xf]
    %v3992 = vld [vmem:[#allocation9 + $0x88] sm:$0xf]
    %v3993 = vld [vmem:[#allocation9 + $0x8c] sm:$0xf]
    %v3994 = vld [vmem:[#allocation9 + $0x90] sm:$0xf]
    %v3995 = vld [vmem:[#allocation9 + $0x94] sm:$0xf]
    %v3996 = vld [vmem:[#allocation9 + $0x98] sm:$0xf]
    %v3997 = vld [vmem:[#allocation9 + $0x9c] sm:$0xf]
    %v3998 = vld [vmem:[#allocation9 + $0xa0] sm:$0xf]
    %v3999 = vld [vmem:[#allocation9 + $0xa4] sm:$0xf]
    %v4000 = vld [vmem:[#allocation9 + $0xa8] sm:$0xf]
    %v4001 = vld [vmem:[#allocation9 + $0xac] sm:$0xf]
    %v4002 = vld [vmem:[#allocation9 + $0xb0] sm:$0xf]
    %v4003 = vld [vmem:[#allocation9 + $0xb4] sm:$0xf]
    %v4004 = vld [vmem:[#allocation9 + $0xb8] sm:$0xf]
    %v4005 = vld [vmem:[#allocation9 + $0xbc] sm:$0xf]
    %v4006 = vld [vmem:[#allocation9 + $0xc0] sm:$0xf]
    %v4007 = vld [vmem:[#allocation9 + $0xc4] sm:$0xf]
    %v4008 = vld [vmem:[#allocation9 + $0xc8] sm:$0xf]
    %v4009 = vld [vmem:[#allocation9 + $0xcc] sm:$0xf]
    %v4010 = vld [vmem:[#allocation9 + $0xd0] sm:$0xf]
    %v4011 = vld [vmem:[#allocation9 + $0xd4] sm:$0xf]
    %v4012 = vld [vmem:[#allocation9 + $0xd8] sm:$0xf]
    %v4013 = vld [vmem:[#allocation9 + $0xdc] sm:$0xf]
    %v4014 = vld [vmem:[#allocation9 + $0xe0] sm:$0xf]
    %v4015 = vld [vmem:[#allocation9 + $0xe4] sm:$0xf]
    %v4016 = vld [vmem:[#allocation9 + $0xe8] sm:$0xf]
    %v4017 = vld [vmem:[#allocation9 + $0xec] sm:$0xf]
    %v4018 = vld [vmem:[#allocation9 + $0xf0] sm:$0xf]
    %v4019 = vld [vmem:[#allocation9 + $0xf4] sm:$0xf]
    %v4020 = vld [vmem:[#allocation9 + $0xf8] sm:$0xf]
    %v4021 = vld [vmem:[#allocation9 + $0xfc] sm:$0xf]
    %v4022 = vld [vmem:[%s10] sm:$0x1]
    %v4024 = vperm.slane %v4022, 0
    %v4090 = vunpack.c.l.b16 %v3958
    %v4091 = vunpack.c.l.b16 %v3959
    %v4092 = vunpack.c.l.b16 %v3960
    %v4093 = vunpack.c.l.b16 %v3961
    %v4094 = vunpack.c.l.b16 %v3962
    %v4095 = vunpack.c.l.b16 %v3963
    %v4096 = vunpack.c.l.b16 %v3964
    %v4097 = vunpack.c.l.b16 %v3965
    %v4098 = vunpack.c.l.b16 %v3966
    %v4099 = vunpack.c.l.b16 %v3967
    %v4100 = vunpack.c.l.b16 %v3968
    %v4101 = vunpack.c.l.b16 %v3969
    %v4102 = vunpack.c.l.b16 %v3970
    %v4103 = vunpack.c.l.b16 %v3971
    %v4104 = vunpack.c.l.b16 %v3972
    %v4105 = vunpack.c.l.b16 %v3973
    %v4106 = vunpack.c.l.b16 %v3974
    %v4107 = vunpack.c.l.b16 %v3975
    %v4108 = vunpack.c.l.b16 %v3976
    %v4109 = vunpack.c.l.b16 %v3977
    %v4110 = vunpack.c.l.b16 %v3978
    %v4111 = vunpack.c.l.b16 %v3979
    %v4112 = vunpack.c.l.b16 %v3980
    %v4113 = vunpack.c.l.b16 %v3981
    %v4114 = vunpack.c.l.b16 %v3982
    %v4115 = vunpack.c.l.b16 %v3983
    %v4116 = vunpack.c.l.b16 %v3984
    %v4117 = vunpack.c.l.b16 %v3985
    %v4118 = vunpack.c.l.b16 %v3986
    %v4119 = vunpack.c.l.b16 %v3987
    %v4120 = vunpack.c.l.b16 %v3988
    %v4121 = vunpack.c.l.b16 %v3989
    %v4122 = vunpack.c.l.b16 %v3990
    %v4123 = vunpack.c.l.b16 %v3991
    %v4124 = vunpack.c.l.b16 %v3992
    %v4125 = vunpack.c.l.b16 %v3993
    %v4126 = vunpack.c.l.b16 %v3994
    %v4127 = vunpack.c.l.b16 %v3995
    %v4128 = vunpack.c.l.b16 %v3996
    %v4129 = vunpack.c.l.b16 %v3997
    %v4130 = vunpack.c.l.b16 %v3998
    %v4131 = vunpack.c.l.b16 %v3999
    %v4132 = vunpack.c.l.b16 %v4000
    %v4133 = vunpack.c.l.b16 %v4001
    %v4134 = vunpack.c.l.b16 %v4002
    %v4135 = vunpack.c.l.b16 %v4003
    %v4136 = vunpack.c.l.b16 %v4004
    %v4137 = vunpack.c.l.b16 %v4005
    %v4138 = vunpack.c.l.b16 %v4006
    %v4139 = vunpack.c.l.b16 %v4007
    %v4140 = vunpack.c.l.b16 %v4008
    %v4141 = vunpack.c.l.b16 %v4009
    %v4142 = vunpack.c.l.b16 %v4010
    %v4143 = vunpack.c.l.b16 %v4011
    %v4144 = vunpack.c.l.b16 %v4012
    %v4145 = vunpack.c.l.b16 %v4013
    %v4146 = vunpack.c.l.b16 %v4014
    %v4147 = vunpack.c.l.b16 %v4015
    %v4148 = vunpack.c.l.b16 %v4016
    %v4149 = vunpack.c.l.b16 %v4017
    %v4150 = vunpack.c.l.b16 %v4018
    %v4151 = vunpack.c.l.b16 %v4019
    %v4152 = vunpack.c.l.b16 %v4020
    %v4153 = vunpack.c.l.b16 %v4021
    %v4154 = vpack.c.b16 %v4091, %v4090
    %v4155 = vpack.c.b16 %v4093, %v4092
    %v4156 = vpack.c.b16 %v4095, %v4094
    %v4157 = vpack.c.b16 %v4097, %v4096
    %v4158 = vpack.c.b16 %v4099, %v4098
    %v4159 = vpack.c.b16 %v4101, %v4100
    %v4160 = vpack.c.b16 %v4103, %v4102
    %v4161 = vpack.c.b16 %v4105, %v4104
    %v4162 = vpack.c.b16 %v4107, %v4106
    %v4163 = vpack.c.b16 %v4109, %v4108
    %v4164 = vpack.c.b16 %v4111, %v4110
    %v4165 = vpack.c.b16 %v4113, %v4112
    %v4166 = vpack.c.b16 %v4115, %v4114
    %v4167 = vpack.c.b16 %v4117, %v4116
    %v4168 = vpack.c.b16 %v4119, %v4118
    %v4169 = vpack.c.b16 %v4121, %v4120
    %v4170 = vpack.c.b16 %v4123, %v4122
    %v4171 = vpack.c.b16 %v4125, %v4124
    %v4172 = vpack.c.b16 %v4127, %v4126
    %v4173 = vpack.c.b16 %v4129, %v4128
    %v4174 = vpack.c.b16 %v4131, %v4130
    %v4175 = vpack.c.b16 %v4133, %v4132
    %v4176 = vpack.c.b16 %v4135, %v4134
    %v4177 = vpack.c.b16 %v4137, %v4136
    %v4178 = vpack.c.b16 %v4139, %v4138
    %v4179 = vpack.c.b16 %v4141, %v4140
    %v4180 = vpack.c.b16 %v4143, %v4142
    %v4181 = vpack.c.b16 %v4145, %v4144
    %v4182 = vpack.c.b16 %v4147, %v4146
    %v4183 = vpack.c.b16 %v4149, %v4148
    %v4184 = vpack.c.b16 %v4151, %v4150
    %v4185 = vpack.c.b16 %v4153, %v4152
    %4218 = vmatpush.bf16.msra.mxu0 %v4161
    %4219 = vmatpush.bf16.msra.mxu0 %v4160
    %4220 = vmatpush.bf16.msra.mxu0 %v4159
    %4221 = vmatpush.bf16.msra.mxu0 %v4158
    %4222 = vmatpush.bf16.msra.mxu0 %v4157
    %4223 = vmatpush.bf16.msra.mxu0 %v4156
    %4224 = vmatpush.bf16.msra.mxu0 %v4155
    %4225 = vmatpush.bf16.msra.mxu0 %v4154
    %4226 = vmatmul.bf16.gmra.mxu0 %v3954
    %v4227 = vpop.f32.mrf.mxu0
    %v4228 = vadd.f32 %v4024, %v4227
    %v4229 = vpop.f32.mrf.mxu0
    %v4230 = vadd.f32 %v4024, %v4229
    %4231 = vdwg.mxu0
    %4232 = vmatpush.bf16.msra.mxu0 %v4169
    %4233 = vmatpush.bf16.msra.mxu0 %v4168
    %4234 = vmatpush.bf16.msra.mxu0 %v4167
    %4235 = vmatpush.bf16.msra.mxu0 %v4166
    %4236 = vmatpush.bf16.msra.mxu0 %v4165
    %4237 = vmatpush.bf16.msra.mxu0 %v4164
    %4238 = vmatpush.bf16.msra.mxu0 %v4163
    %4239 = vmatpush.bf16.msra.mxu0 %v4162
    %4240 = vmatmul.bf16.gmra.mxu0 %v3955
    %v4241 = vpop.f32.mrf.mxu0
    %v4242 = vadd.f32 %v4228, %v4241
    %v4243 = vpop.f32.mrf.mxu0
    %v4244 = vadd.f32 %v4230, %v4243
    %4245 = vdwg.mxu0
    %4246 = vmatpush.bf16.msra.mxu0 %v4177
    %4247 = vmatpush.bf16.msra.mxu0 %v4176
    %4248 = vmatpush.bf16.msra.mxu0 %v4175
    %4249 = vmatpush.bf16.msra.mxu0 %v4174
    %4250 = vmatpush.bf16.msra.mxu0 %v4173
    %4251 = vmatpush.bf16.msra.mxu0 %v4172
    %4252 = vmatpush.bf16.msra.mxu0 %v4171
    %4253 = vmatpush.bf16.msra.mxu0 %v4170
    %4254 = vmatmul.bf16.gmra.mxu0 %v3956
    %v4255 = vpop.f32.mrf.mxu0
    %v4256 = vadd.f32 %v4242, %v4255
    %v4257 = vpop.f32.mrf.mxu0
    %v4258 = vadd.f32 %v4244, %v4257
    %4259 = vdwg.mxu0
    %4260 = vmatpush.bf16.msra.mxu0 %v4185
    %4261 = vmatpush.bf16.msra.mxu0 %v4184
    %4262 = vmatpush.bf16.msra.mxu0 %v4183
    %4263 = vmatpush.bf16.msra.mxu0 %v4182
    %4264 = vmatpush.bf16.msra.mxu0 %v4181
    %4265 = vmatpush.bf16.msra.mxu0 %v4180
    %4266 = vmatpush.bf16.msra.mxu0 %v4179
    %4267 = vmatpush.bf16.msra.mxu0 %v4178
    %4268 = vmatmul.bf16.gmra.mxu0 %v3957
    %v4269 = vpop.f32.mrf.mxu0
    %v4270 = vadd.f32 %v4256, %v4269
    %v4271 = vpop.f32.mrf.mxu0
    %v4272 = vadd.f32 %v4258, %v4271
    %4273 = vdwg.mxu0
    %4274 = vst [vmem:[%s11] sm:$0xff] %v4270
    %4275 = vst [vmem:[%s11 + $0x8] sm:$0xff] %v4272
    // Predicated region
    $region66: #{_forward_impl.1} parent=1 // pred_check
      _
    $region67: #{_forward_impl.1} parent=1 // pred_check_branch
      %4277 = sbr.rel (0) target = $region69
    $region68: #{_forward_impl.1} parent=1 // pred_region
      _
    $region69: #{_forward_impl.1} parent=1 // pred_fallthru
      _
    // Predicated region
    $region70: #{_forward_impl.1} parent=1 // pred_check
      _
    $region71: #{_forward_impl.1} parent=1 // pred_check_branch
      %4279 = sbr.rel (0) target = $region73
    $region72: #{_forward_impl.1} parent=1 // pred_region
      _
    $region73: #{_forward_impl.1} parent=1 // pred_fallthru
      _
    %4280 = vsyncpa [#allocation3], 1
    %4281 = vsyncpa [#allocation5], 1
    %4282 = vsyncpa [#allocation8], 1

</llo_original>
